<compile_context>
chip_gen: v7x
topology: tpu7x:2x2x1
jax: 0.10.0
libtpu: 0.0.40
codegen_flags: <defaults>
</compile_context>

<pallas_src>
import functools
import math

import jax
import jax.numpy as jnp
from jax import lax
from jax.experimental import pallas as pl
from jax.experimental.pallas import tpu as pltpu

MATMUL_DTYPE = jnp.bfloat16      # MXU operand / activation-slab dtype
LN_EPS = 1e-5                    # PyTorch LayerNorm default
VMEM_LIMIT_BYTES = 64 * 1024 * 1024


# ----------------------------------------------------------------------------
# In-kernel helpers (traced inside the Pallas kernel)
# ----------------------------------------------------------------------------
def _layernorm_f32(y, g, b, eps):
    mu = jnp.mean(y, axis=-1, keepdims=True)
    var = jnp.mean(jnp.square(y - mu), axis=-1, keepdims=True)
    return (y - mu) * lax.rsqrt(var + eps) * g + b


def _mha(xq, xk, xv, wq, bq, wk, bk, wv, bv, wo, bo, *, num_heads, scale, cdt):
    """Multi-head attention + output projection for one batch element.

    xq/xk/xv are already bf16 (cdt); weight matrices are bf16; biases f32.
    Per-head attention outputs are concatenated into one (Tq, D) context slab,
    then a single full-depth (D, D) output projection is applied.
    Returns (Tq, D) f32 (pre-residual).
    """
    D = wq.shape[0]
    Dh = D // num_heads
    # Full-width projections (K = D contraction depth); cast to bf16 once.
    q = (jnp.dot(xq, wq, preferred_element_type=jnp.float32) + bq).astype(cdt)
    k = (jnp.dot(xk, wk, preferred_element_type=jnp.float32) + bk).astype(cdt)
    v = (jnp.dot(xv, wv, preferred_element_type=jnp.float32) + bv).astype(cdt)

    ctx_heads = []
    for h in range(num_heads):
        sl = slice(h * Dh, (h + 1) * Dh)
        qh, kh, vh = q[:, sl], k[:, sl], v[:, sl]     # one slice per operand/head
        # scores: contract the Dh axes directly (no in-kernel transpose)
        s = lax.dot_general(qh, kh, (((1,), (1,)), ((), ())),
                            preferred_element_type=jnp.float32) * scale
        s = s - jnp.max(s, axis=-1, keepdims=True)
        e = jnp.exp(s)
        p = (e * pl.reciprocal(jnp.sum(e, axis=-1, keepdims=True),
                               approx=True)).astype(cdt)
        ctx_heads.append(jnp.dot(p, vh, preferred_element_type=jnp.float32))
    ctx = jnp.concatenate(ctx_heads, axis=-1).astype(cdt)          # (Tq, D)
    # Single full-depth output projection (K = D, not Dh).
    return jnp.dot(ctx, wo, preferred_element_type=jnp.float32) + bo


# ----------------------------------------------------------------------------
# Fused per-layer kernel: self-attn + LN1 -> cross-attn + LN2 -> FFN + LN3
# plus the shared final LayerNorm as the second (intermediate) output.
# ----------------------------------------------------------------------------
def _fused_decoder_layer_kernel(
        tgt_ref, qpos_ref, memk_ref, memv_ref,
        s_wq, s_bq, s_wk, s_bk, s_wv, s_bv, s_wo, s_bo, ln1_g, ln1_b,
        c_wq, c_bq, c_wk, c_bk, c_wv, c_bv, c_wo, c_bo, ln2_g, ln2_b,
        w1, b1, w2, b2, ln3_g, ln3_b,
        fn_g, fn_b,
        out_ref, inter_ref,
        *, num_heads, scale, eps, cdt):
    tgt_bf = tgt_ref[...]                                   # bf16
    qpos_f32 = qpos_ref[...].astype(jnp.float32)
    tgt_f32 = tgt_bf.astype(jnp.float32)

    # ---- self-attention + residual + LN1 (q = k = tgt + query_pos, v = tgt)
    xqk = (tgt_f32 + qpos_f32).astype(cdt)
    sa = _mha(xqk, xqk, tgt_bf,
              s_wq[...], s_bq[...], s_wk[...], s_bk[...],
              s_wv[...], s_bv[...], s_wo[...], s_bo[...],
              num_heads=num_heads, scale=scale, cdt=cdt)
    x1 = _layernorm_f32(tgt_f32 + sa, ln1_g[...], ln1_b[...], eps)

    # ---- cross-attention + residual + LN2 (k = memory + pos, v = memory)
    xq = (x1 + qpos_f32).astype(cdt)
    ca = _mha(xq, memk_ref[...], memv_ref[...],
              c_wq[...], c_bq[...], c_wk[...], c_bk[...],
              c_wv[...], c_bv[...], c_wo[...], c_bo[...],
              num_heads=num_heads, scale=scale, cdt=cdt)
    x2 = _layernorm_f32(x1 + ca, ln2_g[...], ln2_b[...], eps)

    # ---- FFN + residual + LN3
    h = jnp.maximum(jnp.dot(x2.astype(cdt), w1[...],
                            preferred_element_type=jnp.float32) + b1[...], 0.0)
    y = x2 + jnp.dot(h.astype(cdt), w2[...],
                     preferred_element_type=jnp.float32) + b2[...]
    x3 = _layernorm_f32(y, ln3_g[...], ln3_b[...], eps)

    out_ref[...] = x3.astype(out_ref.dtype)                         # layer output (bf16)
    inter_ref[...] = _layernorm_f32(x3, fn_g[...], fn_b[...],
                                    eps).astype(inter_ref.dtype)    # norm'd intermediate (f32)


# ----------------------------------------------------------------------------
# pallas_call wrapper
# ----------------------------------------------------------------------------
def _attn_args(p):
    return (p["wq"], p["bq"], p["wk"], p["bk"], p["wv"], p["bv"], p["wo"], p["bo"])


def fused_decoder_layer(tgt_bm, qpos_bm, memk_bm, memv_bm, lp, norm_g, norm_b,
                        *, num_heads, T, S):
    M, D = tgt_bm.shape
    B = M // T
    Dff = lp["w1"].shape[1]
    scale = 1.0 / math.sqrt(D // num_heads)

    qrow = pl.BlockSpec((T, D), lambda b: (b, 0))
    krow = pl.BlockSpec((S, D), lambda b: (b, 0))
    wDD = pl.BlockSpec((D, D), lambda b: (0, 0))
    bD = pl.BlockSpec((1, D), lambda b: (0, 0))
    w1s = pl.BlockSpec((D, Dff), lambda b: (0, 0))
    bff = pl.BlockSpec((1, Dff), lambda b: (0, 0))
    w2s = pl.BlockSpec((Dff, D), lambda b: (0, 0))
    attn_specs = [wDD, bD, wDD, bD, wDD, bD, wDD, bD, bD, bD]

    kernel = functools.partial(_fused_decoder_layer_kernel, num_heads=num_heads,
                               scale=scale, eps=LN_EPS, cdt=MATMUL_DTYPE)

    return pl.pallas_call(
        kernel,
        out_shape=(jax.ShapeDtypeStruct((M, D), tgt_bm.dtype),     # next-layer input (bf16)
                   jax.ShapeDtypeStruct((M, D), jnp.float32)),     # norm'd intermediate
        grid=(B,),
        in_specs=[qrow, qrow, krow, krow]
                 + attn_specs + attn_specs
                 + [w1s, bff, w2s, bD, bD, bD, bD, bD],
        out_specs=(qrow, qrow),
        compiler_params=pltpu.CompilerParams(
            dimension_semantics=("parallel",),
            vmem_limit_bytes=VMEM_LIMIT_BYTES),
    )(tgt_bm, qpos_bm, memk_bm, memv_bm,
      *_attn_args(lp["self_attn"]), lp["ln1_g"], lp["ln1_b"],
      *_attn_args(lp["cross_attn"]), lp["ln2_g"], lp["ln2_b"],
      lp["w1"], lp["b1"], lp["w2"], lp["b2"], lp["ln3_g"], lp["ln3_b"],
      norm_g, norm_b)


# ----------------------------------------------------------------------------
# Decoder stack (DETR post-norm, eval mode)
# ----------------------------------------------------------------------------
def _cast_layer_params(lp, wdt):
    def cast_attn(p):
        return {"wq": p["wq"].astype(wdt), "bq": p["bq"],
                "wk": p["wk"].astype(wdt), "bk": p["bk"],
                "wv": p["wv"].astype(wdt), "bv": p["bv"],
                "wo": p["wo"].astype(wdt), "bo": p["bo"]}
    out = dict(lp)
    out["self_attn"] = cast_attn(lp["self_attn"])
    out["cross_attn"] = cast_attn(lp["cross_attn"])
    out["w1"] = lp["w1"].astype(wdt)
    out["w2"] = lp["w2"].astype(wdt)
    return out


def transformer_decoder_forward(tgt, memory, pos, query_pos, params, num_heads,
                                return_intermediate=True):
    T, B, D = tgt.shape
    S = memory.shape[0]
    L = len(params["layers"])
    assert T % 8 == 0 and S % 8 == 0, "T and S must be multiples of 8 (sublane)"
    # TODO(synk): padding + key-padding-mask path for T/S not multiples of 8 (e.g. DETR T=100).

    act_dt = MATMUL_DTYPE
    # One-time layout change: batch-major, lane-dense (rows, D) bf16 slabs.
    tgt_bm = tgt.transpose(1, 0, 2).reshape(B * T, D).astype(act_dt)
    qpos_bm = query_pos.transpose(1, 0, 2).reshape(B * T, D).astype(act_dt)
    memv_bm = memory.transpose(1, 0, 2).reshape(B * S, D).astype(act_dt)
    memk_bm = (memory + pos).transpose(1, 0, 2).reshape(B * S, D).astype(act_dt)

    # Weight matrices pre-cast to bf16 once (biases / LN params stay f32).
    layers = [_cast_layer_params(lp, act_dt) for lp in params["layers"]]
    norm_g, norm_b = params["norm_g"], params["norm_b"]

    output = tgt_bm
    inters = []
    for lp in layers:
        output, inter = fused_decoder_layer(output, qpos_bm, memk_bm, memv_bm,
                                            lp, norm_g, norm_b,
                                            num_heads=num_heads, T=T, S=S)
        inters.append(inter)

    # Reference semantics: intermediate[-1] == norm(last output) (shared).
    if return_intermediate:
        stacked = jnp.stack(inters)                                # (L, B*T, D) f32
        return stacked.reshape(L, B, T, D).transpose(0, 2, 1, 3)   # (L, T, B, D)
    return inters[-1].reshape(B, T, D).transpose(1, 0, 2)          # (T, B, D)
    # TODO(synk): return_cross_attn=True path (per-layer attn-weight stacking) not wired.


# ----------------------------------------------------------------------------
# Deterministic parameter construction
# ----------------------------------------------------------------------------
def init_mha_params(key, D):
    ks = jax.random.split(key, 4)
    s = 0.02
    return {
        "wq": s * jax.random.normal(ks[0], (D, D), jnp.float32),
        "wk": s * jax.random.normal(ks[1], (D, D), jnp.float32),
        "wv": s * jax.random.normal(ks[2], (D, D), jnp.float32),
        "wo": s * jax.random.normal(ks[3], (D, D), jnp.float32),
        "bq": jnp.zeros((1, D), jnp.float32),
        "bk": jnp.zeros((1, D), jnp.float32),
        "bv": jnp.zeros((1, D), jnp.float32),
        "bo": jnp.zeros((1, D), jnp.float32),
    }


def init_layer_params(key, D, Dff):
    ks = jax.random.split(key, 4)
    s = 0.02
    return {
        "self_attn": init_mha_params(ks[0], D),
        "cross_attn": init_mha_params(ks[1], D),
        "w1": s * jax.random.normal(ks[2], (D, Dff), jnp.float32),
        "b1": jnp.zeros((1, Dff), jnp.float32),
        "w2": s * jax.random.normal(ks[3], (Dff, D), jnp.float32),
        "b2": jnp.zeros((1, D), jnp.float32),
        "ln1_g": jnp.ones((1, D), jnp.float32), "ln1_b": jnp.zeros((1, D), jnp.float32),
        "ln2_g": jnp.ones((1, D), jnp.float32), "ln2_b": jnp.zeros((1, D), jnp.float32),
        "ln3_g": jnp.ones((1, D), jnp.float32), "ln3_b": jnp.zeros((1, D), jnp.float32),
    }


def init_decoder_params(key, num_layers, D, Dff):
    ks = jax.random.split(key, num_layers)
    return {
        "layers": [init_layer_params(ks[i], D, Dff) for i in range(num_layers)],
        "norm_g": jnp.ones((1, D), jnp.float32),
        "norm_b": jnp.zeros((1, D), jnp.float32),
    }


# ----------------------------------------------------------------------------
if __name__ == "__main__":
    # small, lane-dense shapes: T=16 queries, S=32 memory tokens, B=2,
    # D=128 (8 heads of 16), Dff=256, 2 layers
    T, S, B, D, H, Dff, L = 16, 32, 2, 128, 8, 256, 2

    root = jax.random.PRNGKey(0)
    k_tgt, k_mem, k_pos, k_qpos, k_par = jax.random.split(root, 5)

    tgt = jax.random.normal(k_tgt, (T, B, D), jnp.float32)
    memory = jax.random.normal(k_mem, (S, B, D), jnp.float32)
    pos = jax.random.normal(k_pos, (S, B, D), jnp.float32)
    query_pos = jax.random.normal(k_qpos, (T, B, D), jnp.float32)

    params = init_decoder_params(k_par, L, D, Dff)

    @jax.jit
    def run(tgt, memory, pos, query_pos, params):
        return transformer_decoder_forward(tgt, memory, pos, query_pos, params,
                                           num_heads=H, return_intermediate=True)

    out = jax.block_until_ready(run(tgt, memory, pos, query_pos, params))
    assert out.shape == (L, T, B, D), out.shape
    assert bool(jnp.all(jnp.isfinite(out)))
    print("KERNEL_OK")
</pallas_src>

<mosaic_0001>
module attributes {stable_mosaic.version = 11 : i64} {
  func.func @_fused_decoder_layer_kernel(%arg0: i32, %arg1: memref<16x128xbf16, #tpu.memory_space<vmem>>, %arg2: memref<16x128xbf16, #tpu.memory_space<vmem>>, %arg3: memref<32x128xbf16, #tpu.memory_space<vmem>>, %arg4: memref<32x128xbf16, #tpu.memory_space<vmem>>, %arg5: memref<128x128xbf16, #tpu.memory_space<vmem>>, %arg6: memref<1x128xf32, #tpu.memory_space<vmem>>, %arg7: memref<128x128xbf16, #tpu.memory_space<vmem>>, %arg8: memref<1x128xf32, #tpu.memory_space<vmem>>, %arg9: memref<128x128xbf16, #tpu.memory_space<vmem>>, %arg10: memref<1x128xf32, #tpu.memory_space<vmem>>, %arg11: memref<128x128xbf16, #tpu.memory_space<vmem>>, %arg12: memref<1x128xf32, #tpu.memory_space<vmem>>, %arg13: memref<1x128xf32, #tpu.memory_space<vmem>>, %arg14: memref<1x128xf32, #tpu.memory_space<vmem>>, %arg15: memref<128x128xbf16, #tpu.memory_space<vmem>>, %arg16: memref<1x128xf32, #tpu.memory_space<vmem>>, %arg17: memref<128x128xbf16, #tpu.memory_space<vmem>>, %arg18: memref<1x128xf32, #tpu.memory_space<vmem>>, %arg19: memref<128x128xbf16, #tpu.memory_space<vmem>>, %arg20: memref<1x128xf32, #tpu.memory_space<vmem>>, %arg21: memref<128x128xbf16, #tpu.memory_space<vmem>>, %arg22: memref<1x128xf32, #tpu.memory_space<vmem>>, %arg23: memref<1x128xf32, #tpu.memory_space<vmem>>, %arg24: memref<1x128xf32, #tpu.memory_space<vmem>>, %arg25: memref<128x256xbf16, #tpu.memory_space<vmem>>, %arg26: memref<1x256xf32, #tpu.memory_space<vmem>>, %arg27: memref<256x128xbf16, #tpu.memory_space<vmem>>, %arg28: memref<1x128xf32, #tpu.memory_space<vmem>>, %arg29: memref<1x128xf32, #tpu.memory_space<vmem>>, %arg30: memref<1x128xf32, #tpu.memory_space<vmem>>, %arg31: memref<1x128xf32, #tpu.memory_space<vmem>>, %arg32: memref<1x128xf32, #tpu.memory_space<vmem>>, %arg33: memref<16x128xbf16, #tpu.memory_space<vmem>>, %arg34: memref<16x128xf32, #tpu.memory_space<vmem>>) attributes {dimension_semantics = [#tpu.dimension_semantics<parallel>], iteration_bounds = array<i64: 2>, scalar_prefetch = 0 : i64, scratch_operands = 0 : i64, tpu.core_type = #tpu.core_type<tc>, window_params = [{transform_indices = @transform_0, window_bounds = array<i64: 16, 128>}, {transform_indices = @transform_1, window_bounds = array<i64: 16, 128>}, {transform_indices = @transform_2, window_bounds = array<i64: 32, 128>}, {transform_indices = @transform_3, window_bounds = array<i64: 32, 128>}, {pipeline_mode = #tpu.pipeline_mode<synchronous>, transform_indices = @transform_4, window_bounds = array<i64: 128, 128>}, {pipeline_mode = #tpu.pipeline_mode<synchronous>, transform_indices = @transform_5, window_bounds = array<i64: 1, 128>}, {pipeline_mode = #tpu.pipeline_mode<synchronous>, transform_indices = @transform_6, window_bounds = array<i64: 128, 128>}, {pipeline_mode = #tpu.pipeline_mode<synchronous>, transform_indices = @transform_7, window_bounds = array<i64: 1, 128>}, {pipeline_mode = #tpu.pipeline_mode<synchronous>, transform_indices = @transform_8, window_bounds = array<i64: 128, 128>}, {pipeline_mode = #tpu.pipeline_mode<synchronous>, transform_indices = @transform_9, window_bounds = array<i64: 1, 128>}, {pipeline_mode = #tpu.pipeline_mode<synchronous>, transform_indices = @transform_10, window_bounds = array<i64: 128, 128>}, {pipeline_mode = #tpu.pipeline_mode<synchronous>, transform_indices = @transform_11, window_bounds = array<i64: 1, 128>}, {pipeline_mode = #tpu.pipeline_mode<synchronous>, transform_indices = @transform_12, window_bounds = array<i64: 1, 128>}, {pipeline_mode = #tpu.pipeline_mode<synchronous>, transform_indices = @transform_13, window_bounds = array<i64: 1, 128>}, {pipeline_mode = #tpu.pipeline_mode<synchronous>, transform_indices = @transform_14, window_bounds = array<i64: 128, 128>}, {pipeline_mode = #tpu.pipeline_mode<synchronous>, transform_indices = @transform_15, window_bounds = array<i64: 1, 128>}, {pipeline_mode = #tpu.pipeline_mode<synchronous>, transform_indices = @transform_16, window_bounds = array<i64: 128, 128>}, {pipeline_mode = #tpu.pipeline_mode<synchronous>, transform_indices = @transform_17, window_bounds = array<i64: 1, 128>}, {pipeline_mode = #tpu.pipeline_mode<synchronous>, transform_indices = @transform_18, window_bounds = array<i64: 128, 128>}, {pipeline_mode = #tpu.pipeline_mode<synchronous>, transform_indices = @transform_19, window_bounds = array<i64: 1, 128>}, {pipeline_mode = #tpu.pipeline_mode<synchronous>, transform_indices = @transform_20, window_bounds = array<i64: 128, 128>}, {pipeline_mode = #tpu.pipeline_mode<synchronous>, transform_indices = @transform_21, window_bounds = array<i64: 1, 128>}, {pipeline_mode = #tpu.pipeline_mode<synchronous>, transform_indices = @transform_22, window_bounds = array<i64: 1, 128>}, {pipeline_mode = #tpu.pipeline_mode<synchronous>, transform_indices = @transform_23, window_bounds = array<i64: 1, 128>}, {pipeline_mode = #tpu.pipeline_mode<synchronous>, transform_indices = @transform_24, window_bounds = array<i64: 128, 256>}, {pipeline_mode = #tpu.pipeline_mode<synchronous>, transform_indices = @transform_25, window_bounds = array<i64: 1, 256>}, {pipeline_mode = #tpu.pipeline_mode<synchronous>, transform_indices = @transform_26, window_bounds = array<i64: 256, 128>}, {pipeline_mode = #tpu.pipeline_mode<synchronous>, transform_indices = @transform_27, window_bounds = array<i64: 1, 128>}, {pipeline_mode = #tpu.pipeline_mode<synchronous>, transform_indices = @transform_28, window_bounds = array<i64: 1, 128>}, {pipeline_mode = #tpu.pipeline_mode<synchronous>, transform_indices = @transform_29, window_bounds = array<i64: 1, 128>}, {pipeline_mode = #tpu.pipeline_mode<synchronous>, transform_indices = @transform_30, window_bounds = array<i64: 1, 128>}, {pipeline_mode = #tpu.pipeline_mode<synchronous>, transform_indices = @transform_31, window_bounds = array<i64: 1, 128>}, {transform_indices = @transform_32, window_bounds = array<i64: 16, 128>}, {transform_indices = @transform_33, window_bounds = array<i64: 16, 128>}]} {
    %c0 = arith.constant 0 : index
    %c0_0 = arith.constant 0 : index
    %0 = vector.load %arg1[%c0, %c0_0] : memref<16x128xbf16, #tpu.memory_space<vmem>>, vector<16x128xbf16>
    %c0_1 = arith.constant 0 : index
    %c0_2 = arith.constant 0 : index
    %1 = vector.load %arg2[%c0_1, %c0_2] : memref<16x128xbf16, #tpu.memory_space<vmem>>, vector<16x128xbf16>
    %2 = arith.extf %1 : vector<16x128xbf16> to vector<16x128xf32>
    %3 = arith.extf %0 : vector<16x128xbf16> to vector<16x128xf32>
    %4 = arith.addf %3, %2 : vector<16x128xf32>
    %5 = arith.truncf %4 : vector<16x128xf32> to vector<16x128xbf16>
    %c0_3 = arith.constant 0 : index
    %c0_4 = arith.constant 0 : index
    %6 = vector.load %arg5[%c0_3, %c0_4] : memref<128x128xbf16, #tpu.memory_space<vmem>>, vector<128x128xbf16>
    %c0_5 = arith.constant 0 : index
    %c0_6 = arith.constant 0 : index
    %7 = vector.load %arg6[%c0_5, %c0_6] : memref<1x128xf32, #tpu.memory_space<vmem>>, vector<1x128xf32>
    %c0_7 = arith.constant 0 : index
    %c0_8 = arith.constant 0 : index
    %8 = vector.load %arg7[%c0_7, %c0_8] : memref<128x128xbf16, #tpu.memory_space<vmem>>, vector<128x128xbf16>
    %c0_9 = arith.constant 0 : index
    %c0_10 = arith.constant 0 : index
    %9 = vector.load %arg8[%c0_9, %c0_10] : memref<1x128xf32, #tpu.memory_space<vmem>>, vector<1x128xf32>
    %c0_11 = arith.constant 0 : index
    %c0_12 = arith.constant 0 : index
    %10 = vector.load %arg9[%c0_11, %c0_12] : memref<128x128xbf16, #tpu.memory_space<vmem>>, vector<128x128xbf16>
    %c0_13 = arith.constant 0 : index
    %c0_14 = arith.constant 0 : index
    %11 = vector.load %arg10[%c0_13, %c0_14] : memref<1x128xf32, #tpu.memory_space<vmem>>, vector<1x128xf32>
    %c0_15 = arith.constant 0 : index
    %c0_16 = arith.constant 0 : index
    %12 = vector.load %arg11[%c0_15, %c0_16] : memref<128x128xbf16, #tpu.memory_space<vmem>>, vector<128x128xbf16>
    %c0_17 = arith.constant 0 : index
    %c0_18 = arith.constant 0 : index
    %13 = vector.load %arg12[%c0_17, %c0_18] : memref<1x128xf32, #tpu.memory_space<vmem>>, vector<1x128xf32>
    %cst = arith.constant dense<0.000000e+00> : vector<16x128xf32>
    %14 = tpu.matmul %5, %6, %cst {dimension_numbers = #tpu.dot_dimension_numbers<[1], [0], [0], [1], [0, 0, 1, 1], [], []>} : vector<16x128xbf16>, vector<128x128xbf16>, vector<16x128xf32> -> vector<16x128xf32>
    %15 = vector.broadcast %7 : vector<1x128xf32> to vector<16x128xf32>
    %16 = arith.addf %14, %15 : vector<16x128xf32>
    %17 = arith.truncf %16 : vector<16x128xf32> to vector<16x128xbf16>
    %cst_19 = arith.constant dense<0.000000e+00> : vector<16x128xf32>
    %18 = tpu.matmul %5, %8, %cst_19 {dimension_numbers = #tpu.dot_dimension_numbers<[1], [0], [0], [1], [0, 0, 1, 1], [], []>} : vector<16x128xbf16>, vector<128x128xbf16>, vector<16x128xf32> -> vector<16x128xf32>
    %19 = vector.broadcast %9 : vector<1x128xf32> to vector<16x128xf32>
    %20 = arith.addf %18, %19 : vector<16x128xf32>
    %21 = arith.truncf %20 : vector<16x128xf32> to vector<16x128xbf16>
    %cst_20 = arith.constant dense<0.000000e+00> : vector<16x128xf32>
    %22 = tpu.matmul %0, %10, %cst_20 {dimension_numbers = #tpu.dot_dimension_numbers<[1], [0], [0], [1], [0, 0, 1, 1], [], []>} : vector<16x128xbf16>, vector<128x128xbf16>, vector<16x128xf32> -> vector<16x128xf32>
    %23 = vector.broadcast %11 : vector<1x128xf32> to vector<16x128xf32>
    %24 = arith.addf %22, %23 : vector<16x128xf32>
    %25 = arith.truncf %24 : vector<16x128xf32> to vector<16x128xbf16>
    %26 = vector.extract_strided_slice %17 {offsets = [0, 0], sizes = [16, 16], strides = [1, 1]} : vector<16x128xbf16> to vector<16x16xbf16>
    %27 = vector.extract_strided_slice %21 {offsets = [0, 0], sizes = [16, 16], strides = [1, 1]} : vector<16x128xbf16> to vector<16x16xbf16>
    %28 = vector.extract_strided_slice %25 {offsets = [0, 0], sizes = [16, 16], strides = [1, 1]} : vector<16x128xbf16> to vector<16x16xbf16>
    %cst_21 = arith.constant dense<0.000000e+00> : vector<16x16xf32>
    %29 = tpu.matmul %26, %27, %cst_21 {dimension_numbers = #tpu.dot_dimension_numbers<[1], [1], [0], [0], [0, 0, 1, 0], [], []>} : vector<16x16xbf16>, vector<16x16xbf16>, vector<16x16xf32> -> vector<16x16xf32>
    %cst_22 = arith.constant 2.500000e-01 : f32
    %30 = vector.broadcast %cst_22 : f32 to vector<16x16xf32>
    %31 = arith.mulf %29, %30 : vector<16x16xf32>
    %cst_23 = arith.constant dense<0xFF800000> : vector<16xf32>
    %32 = vector.multi_reduction <maximumf>, %31, %cst_23 [1] : vector<16x16xf32> to vector<16xf32>
    %33 = vector.shape_cast %32 : vector<16xf32> to vector<16x1xf32>
    %34 = vector.broadcast %33 : vector<16x1xf32> to vector<16x16xf32>
    %35 = arith.subf %31, %34 : vector<16x16xf32>
    %36 = math.exp %35 : vector<16x16xf32>
    %cst_24 = arith.constant dense<0.000000e+00> : vector<16xf32>
    %37 = vector.multi_reduction <add>, %36, %cst_24 [1] : vector<16x16xf32> to vector<16xf32>
    %38 = vector.shape_cast %37 : vector<16xf32> to vector<16x1xf32>
    %39 = tpu.reciprocal %38 {approx = true} : vector<16x1xf32> -> vector<16x1xf32>
    %40 = vector.broadcast %39 : vector<16x1xf32> to vector<16x16xf32>
    %41 = arith.mulf %36, %40 : vector<16x16xf32>
    %42 = arith.truncf %41 : vector<16x16xf32> to vector<16x16xbf16>
    %cst_25 = arith.constant dense<0.000000e+00> : vector<16x16xf32>
    %43 = tpu.matmul %42, %28, %cst_25 {dimension_numbers = #tpu.dot_dimension_numbers<[1], [0], [0], [1], [0, 0, 1, 1], [], []>} : vector<16x16xbf16>, vector<16x16xbf16>, vector<16x16xf32> -> vector<16x16xf32>
    %44 = vector.extract_strided_slice %17 {offsets = [0, 16], sizes = [16, 16], strides = [1, 1]} : vector<16x128xbf16> to vector<16x16xbf16>
    %45 = vector.extract_strided_slice %21 {offsets = [0, 16], sizes = [16, 16], strides = [1, 1]} : vector<16x128xbf16> to vector<16x16xbf16>
    %46 = vector.extract_strided_slice %25 {offsets = [0, 16], sizes = [16, 16], strides = [1, 1]} : vector<16x128xbf16> to vector<16x16xbf16>
    %cst_26 = arith.constant dense<0.000000e+00> : vector<16x16xf32>
    %47 = tpu.matmul %44, %45, %cst_26 {dimension_numbers = #tpu.dot_dimension_numbers<[1], [1], [0], [0], [0, 0, 1, 0], [], []>} : vector<16x16xbf16>, vector<16x16xbf16>, vector<16x16xf32> -> vector<16x16xf32>
    %cst_27 = arith.constant 2.500000e-01 : f32
    %48 = vector.broadcast %cst_27 : f32 to vector<16x16xf32>
    %49 = arith.mulf %47, %48 : vector<16x16xf32>
    %cst_28 = arith.constant dense<0xFF800000> : vector<16xf32>
    %50 = vector.multi_reduction <maximumf>, %49, %cst_28 [1] : vector<16x16xf32> to vector<16xf32>
    %51 = vector.shape_cast %50 : vector<16xf32> to vector<16x1xf32>
    %52 = vector.broadcast %51 : vector<16x1xf32> to vector<16x16xf32>
    %53 = arith.subf %49, %52 : vector<16x16xf32>
    %54 = math.exp %53 : vector<16x16xf32>
    %cst_29 = arith.constant dense<0.000000e+00> : vector<16xf32>
    %55 = vector.multi_reduction <add>, %54, %cst_29 [1] : vector<16x16xf32> to vector<16xf32>
    %56 = vector.shape_cast %55 : vector<16xf32> to vector<16x1xf32>
    %57 = tpu.reciprocal %56 {approx = true} : vector<16x1xf32> -> vector<16x1xf32>
    %58 = vector.broadcast %57 : vector<16x1xf32> to vector<16x16xf32>
    %59 = arith.mulf %54, %58 : vector<16x16xf32>
    %60 = arith.truncf %59 : vector<16x16xf32> to vector<16x16xbf16>
    %cst_30 = arith.constant dense<0.000000e+00> : vector<16x16xf32>
    %61 = tpu.matmul %60, %46, %cst_30 {dimension_numbers = #tpu.dot_dimension_numbers<[1], [0], [0], [1], [0, 0, 1, 1], [], []>} : vector<16x16xbf16>, vector<16x16xbf16>, vector<16x16xf32> -> vector<16x16xf32>
    %62 = vector.extract_strided_slice %17 {offsets = [0, 32], sizes = [16, 16], strides = [1, 1]} : vector<16x128xbf16> to vector<16x16xbf16>
    %63 = vector.extract_strided_slice %21 {offsets = [0, 32], sizes = [16, 16], strides = [1, 1]} : vector<16x128xbf16> to vector<16x16xbf16>
    %64 = vector.extract_strided_slice %25 {offsets = [0, 32], sizes = [16, 16], strides = [1, 1]} : vector<16x128xbf16> to vector<16x16xbf16>
    %cst_31 = arith.constant dense<0.000000e+00> : vector<16x16xf32>
    %65 = tpu.matmul %62, %63, %cst_31 {dimension_numbers = #tpu.dot_dimension_numbers<[1], [1], [0], [0], [0, 0, 1, 0], [], []>} : vector<16x16xbf16>, vector<16x16xbf16>, vector<16x16xf32> -> vector<16x16xf32>
    %cst_32 = arith.constant 2.500000e-01 : f32
    %66 = vector.broadcast %cst_32 : f32 to vector<16x16xf32>
    %67 = arith.mulf %65, %66 : vector<16x16xf32>
    %cst_33 = arith.constant dense<0xFF800000> : vector<16xf32>
    %68 = vector.multi_reduction <maximumf>, %67, %cst_33 [1] : vector<16x16xf32> to vector<16xf32>
    %69 = vector.shape_cast %68 : vector<16xf32> to vector<16x1xf32>
    %70 = vector.broadcast %69 : vector<16x1xf32> to vector<16x16xf32>
    %71 = arith.subf %67, %70 : vector<16x16xf32>
    %72 = math.exp %71 : vector<16x16xf32>
    %cst_34 = arith.constant dense<0.000000e+00> : vector<16xf32>
    %73 = vector.multi_reduction <add>, %72, %cst_34 [1] : vector<16x16xf32> to vector<16xf32>
    %74 = vector.shape_cast %73 : vector<16xf32> to vector<16x1xf32>
    %75 = tpu.reciprocal %74 {approx = true} : vector<16x1xf32> -> vector<16x1xf32>
    %76 = vector.broadcast %75 : vector<16x1xf32> to vector<16x16xf32>
    %77 = arith.mulf %72, %76 : vector<16x16xf32>
    %78 = arith.truncf %77 : vector<16x16xf32> to vector<16x16xbf16>
    %cst_35 = arith.constant dense<0.000000e+00> : vector<16x16xf32>
    %79 = tpu.matmul %78, %64, %cst_35 {dimension_numbers = #tpu.dot_dimension_numbers<[1], [0], [0], [1], [0, 0, 1, 1], [], []>} : vector<16x16xbf16>, vector<16x16xbf16>, vector<16x16xf32> -> vector<16x16xf32>
    %80 = vector.extract_strided_slice %17 {offsets = [0, 48], sizes = [16, 16], strides = [1, 1]} : vector<16x128xbf16> to vector<16x16xbf16>
    %81 = vector.extract_strided_slice %21 {offsets = [0, 48], sizes = [16, 16], strides = [1, 1]} : vector<16x128xbf16> to vector<16x16xbf16>
    %82 = vector.extract_strided_slice %25 {offsets = [0, 48], sizes = [16, 16], strides = [1, 1]} : vector<16x128xbf16> to vector<16x16xbf16>
    %cst_36 = arith.constant dense<0.000000e+00> : vector<16x16xf32>
    %83 = tpu.matmul %80, %81, %cst_36 {dimension_numbers = #tpu.dot_dimension_numbers<[1], [1], [0], [0], [0, 0, 1, 0], [], []>} : vector<16x16xbf16>, vector<16x16xbf16>, vector<16x16xf32> -> vector<16x16xf32>
    %cst_37 = arith.constant 2.500000e-01 : f32
    %84 = vector.broadcast %cst_37 : f32 to vector<16x16xf32>
    %85 = arith.mulf %83, %84 : vector<16x16xf32>
    %cst_38 = arith.constant dense<0xFF800000> : vector<16xf32>
    %86 = vector.multi_reduction <maximumf>, %85, %cst_38 [1] : vector<16x16xf32> to vector<16xf32>
    %87 = vector.shape_cast %86 : vector<16xf32> to vector<16x1xf32>
    %88 = vector.broadcast %87 : vector<16x1xf32> to vector<16x16xf32>
    %89 = arith.subf %85, %88 : vector<16x16xf32>
    %90 = math.exp %89 : vector<16x16xf32>
    %cst_39 = arith.constant dense<0.000000e+00> : vector<16xf32>
    %91 = vector.multi_reduction <add>, %90, %cst_39 [1] : vector<16x16xf32> to vector<16xf32>
    %92 = vector.shape_cast %91 : vector<16xf32> to vector<16x1xf32>
    %93 = tpu.reciprocal %92 {approx = true} : vector<16x1xf32> -> vector<16x1xf32>
    %94 = vector.broadcast %93 : vector<16x1xf32> to vector<16x16xf32>
    %95 = arith.mulf %90, %94 : vector<16x16xf32>
    %96 = arith.truncf %95 : vector<16x16xf32> to vector<16x16xbf16>
    %cst_40 = arith.constant dense<0.000000e+00> : vector<16x16xf32>
    %97 = tpu.matmul %96, %82, %cst_40 {dimension_numbers = #tpu.dot_dimension_numbers<[1], [0], [0], [1], [0, 0, 1, 1], [], []>} : vector<16x16xbf16>, vector<16x16xbf16>, vector<16x16xf32> -> vector<16x16xf32>
    %98 = vector.extract_strided_slice %17 {offsets = [0, 64], sizes = [16, 16], strides = [1, 1]} : vector<16x128xbf16> to vector<16x16xbf16>
    %99 = vector.extract_strided_slice %21 {offsets = [0, 64], sizes = [16, 16], strides = [1, 1]} : vector<16x128xbf16> to vector<16x16xbf16>
    %100 = vector.extract_strided_slice %25 {offsets = [0, 64], sizes = [16, 16], strides = [1, 1]} : vector<16x128xbf16> to vector<16x16xbf16>
    %cst_41 = arith.constant dense<0.000000e+00> : vector<16x16xf32>
    %101 = tpu.matmul %98, %99, %cst_41 {dimension_numbers = #tpu.dot_dimension_numbers<[1], [1], [0], [0], [0, 0, 1, 0], [], []>} : vector<16x16xbf16>, vector<16x16xbf16>, vector<16x16xf32> -> vector<16x16xf32>
    %cst_42 = arith.constant 2.500000e-01 : f32
    %102 = vector.broadcast %cst_42 : f32 to vector<16x16xf32>
    %103 = arith.mulf %101, %102 : vector<16x16xf32>
    %cst_43 = arith.constant dense<0xFF800000> : vector<16xf32>
    %104 = vector.multi_reduction <maximumf>, %103, %cst_43 [1] : vector<16x16xf32> to vector<16xf32>
    %105 = vector.shape_cast %104 : vector<16xf32> to vector<16x1xf32>
    %106 = vector.broadcast %105 : vector<16x1xf32> to vector<16x16xf32>
    %107 = arith.subf %103, %106 : vector<16x16xf32>
    %108 = math.exp %107 : vector<16x16xf32>
    %cst_44 = arith.constant dense<0.000000e+00> : vector<16xf32>
    %109 = vector.multi_reduction <add>, %108, %cst_44 [1] : vector<16x16xf32> to vector<16xf32>
    %110 = vector.shape_cast %109 : vector<16xf32> to vector<16x1xf32>
    %111 = tpu.reciprocal %110 {approx = true} : vector<16x1xf32> -> vector<16x1xf32>
    %112 = vector.broadcast %111 : vector<16x1xf32> to vector<16x16xf32>
    %113 = arith.mulf %108, %112 : vector<16x16xf32>
    %114 = arith.truncf %113 : vector<16x16xf32> to vector<16x16xbf16>
    %cst_45 = arith.constant dense<0.000000e+00> : vector<16x16xf32>
    %115 = tpu.matmul %114, %100, %cst_45 {dimension_numbers = #tpu.dot_dimension_numbers<[1], [0], [0], [1], [0, 0, 1, 1], [], []>} : vector<16x16xbf16>, vector<16x16xbf16>, vector<16x16xf32> -> vector<16x16xf32>
    %116 = vector.extract_strided_slice %17 {offsets = [0, 80], sizes = [16, 16], strides = [1, 1]} : vector<16x128xbf16> to vector<16x16xbf16>
    %117 = vector.extract_strided_slice %21 {offsets = [0, 80], sizes = [16, 16], strides = [1, 1]} : vector<16x128xbf16> to vector<16x16xbf16>
    %118 = vector.extract_strided_slice %25 {offsets = [0, 80], sizes = [16, 16], strides = [1, 1]} : vector<16x128xbf16> to vector<16x16xbf16>
    %cst_46 = arith.constant dense<0.000000e+00> : vector<16x16xf32>
    %119 = tpu.matmul %116, %117, %cst_46 {dimension_numbers = #tpu.dot_dimension_numbers<[1], [1], [0], [0], [0, 0, 1, 0], [], []>} : vector<16x16xbf16>, vector<16x16xbf16>, vector<16x16xf32> -> vector<16x16xf32>
    %cst_47 = arith.constant 2.500000e-01 : f32
    %120 = vector.broadcast %cst_47 : f32 to vector<16x16xf32>
    %121 = arith.mulf %119, %120 : vector<16x16xf32>
    %cst_48 = arith.constant dense<0xFF800000> : vector<16xf32>
    %122 = vector.multi_reduction <maximumf>, %121, %cst_48 [1] : vector<16x16xf32> to vector<16xf32>
    %123 = vector.shape_cast %122 : vector<16xf32> to vector<16x1xf32>
    %124 = vector.broadcast %123 : vector<16x1xf32> to vector<16x16xf32>
    %125 = arith.subf %121, %124 : vector<16x16xf32>
    %126 = math.exp %125 : vector<16x16xf32>
    %cst_49 = arith.constant dense<0.000000e+00> : vector<16xf32>
    %127 = vector.multi_reduction <add>, %126, %cst_49 [1] : vector<16x16xf32> to vector<16xf32>
    %128 = vector.shape_cast %127 : vector<16xf32> to vector<16x1xf32>
    %129 = tpu.reciprocal %128 {approx = true} : vector<16x1xf32> -> vector<16x1xf32>
    %130 = vector.broadcast %129 : vector<16x1xf32> to vector<16x16xf32>
    %131 = arith.mulf %126, %130 : vector<16x16xf32>
    %132 = arith.truncf %131 : vector<16x16xf32> to vector<16x16xbf16>
    %cst_50 = arith.constant dense<0.000000e+00> : vector<16x16xf32>
    %133 = tpu.matmul %132, %118, %cst_50 {dimension_numbers = #tpu.dot_dimension_numbers<[1], [0], [0], [1], [0, 0, 1, 1], [], []>} : vector<16x16xbf16>, vector<16x16xbf16>, vector<16x16xf32> -> vector<16x16xf32>
    %134 = vector.extract_strided_slice %17 {offsets = [0, 96], sizes = [16, 16], strides = [1, 1]} : vector<16x128xbf16> to vector<16x16xbf16>
    %135 = vector.extract_strided_slice %21 {offsets = [0, 96], sizes = [16, 16], strides = [1, 1]} : vector<16x128xbf16> to vector<16x16xbf16>
    %136 = vector.extract_strided_slice %25 {offsets = [0, 96], sizes = [16, 16], strides = [1, 1]} : vector<16x128xbf16> to vector<16x16xbf16>
    %cst_51 = arith.constant dense<0.000000e+00> : vector<16x16xf32>
    %137 = tpu.matmul %134, %135, %cst_51 {dimension_numbers = #tpu.dot_dimension_numbers<[1], [1], [0], [0], [0, 0, 1, 0], [], []>} : vector<16x16xbf16>, vector<16x16xbf16>, vector<16x16xf32> -> vector<16x16xf32>
    %cst_52 = arith.constant 2.500000e-01 : f32
    %138 = vector.broadcast %cst_52 : f32 to vector<16x16xf32>
    %139 = arith.mulf %137, %138 : vector<16x16xf32>
    %cst_53 = arith.constant dense<0xFF800000> : vector<16xf32>
    %140 = vector.multi_reduction <maximumf>, %139, %cst_53 [1] : vector<16x16xf32> to vector<16xf32>
    %141 = vector.shape_cast %140 : vector<16xf32> to vector<16x1xf32>
    %142 = vector.broadcast %141 : vector<16x1xf32> to vector<16x16xf32>
    %143 = arith.subf %139, %142 : vector<16x16xf32>
    %144 = math.exp %143 : vector<16x16xf32>
    %cst_54 = arith.constant dense<0.000000e+00> : vector<16xf32>
    %145 = vector.multi_reduction <add>, %144, %cst_54 [1] : vector<16x16xf32> to vector<16xf32>
    %146 = vector.shape_cast %145 : vector<16xf32> to vector<16x1xf32>
    %147 = tpu.reciprocal %146 {approx = true} : vector<16x1xf32> -> vector<16x1xf32>
    %148 = vector.broadcast %147 : vector<16x1xf32> to vector<16x16xf32>
    %149 = arith.mulf %144, %148 : vector<16x16xf32>
    %150 = arith.truncf %149 : vector<16x16xf32> to vector<16x16xbf16>
    %cst_55 = arith.constant dense<0.000000e+00> : vector<16x16xf32>
    %151 = tpu.matmul %150, %136, %cst_55 {dimension_numbers = #tpu.dot_dimension_numbers<[1], [0], [0], [1], [0, 0, 1, 1], [], []>} : vector<16x16xbf16>, vector<16x16xbf16>, vector<16x16xf32> -> vector<16x16xf32>
    %152 = vector.extract_strided_slice %17 {offsets = [0, 112], sizes = [16, 16], strides = [1, 1]} : vector<16x128xbf16> to vector<16x16xbf16>
    %153 = vector.extract_strided_slice %21 {offsets = [0, 112], sizes = [16, 16], strides = [1, 1]} : vector<16x128xbf16> to vector<16x16xbf16>
    %154 = vector.extract_strided_slice %25 {offsets = [0, 112], sizes = [16, 16], strides = [1, 1]} : vector<16x128xbf16> to vector<16x16xbf16>
    %cst_56 = arith.constant dense<0.000000e+00> : vector<16x16xf32>
    %155 = tpu.matmul %152, %153, %cst_56 {dimension_numbers = #tpu.dot_dimension_numbers<[1], [1], [0], [0], [0, 0, 1, 0], [], []>} : vector<16x16xbf16>, vector<16x16xbf16>, vector<16x16xf32> -> vector<16x16xf32>
    %cst_57 = arith.constant 2.500000e-01 : f32
    %156 = vector.broadcast %cst_57 : f32 to vector<16x16xf32>
    %157 = arith.mulf %155, %156 : vector<16x16xf32>
    %cst_58 = arith.constant dense<0xFF800000> : vector<16xf32>
    %158 = vector.multi_reduction <maximumf>, %157, %cst_58 [1] : vector<16x16xf32> to vector<16xf32>
    %159 = vector.shape_cast %158 : vector<16xf32> to vector<16x1xf32>
    %160 = vector.broadcast %159 : vector<16x1xf32> to vector<16x16xf32>
    %161 = arith.subf %157, %160 : vector<16x16xf32>
    %162 = math.exp %161 : vector<16x16xf32>
    %cst_59 = arith.constant dense<0.000000e+00> : vector<16xf32>
    %163 = vector.multi_reduction <add>, %162, %cst_59 [1] : vector<16x16xf32> to vector<16xf32>
    %164 = vector.shape_cast %163 : vector<16xf32> to vector<16x1xf32>
    %165 = tpu.reciprocal %164 {approx = true} : vector<16x1xf32> -> vector<16x1xf32>
    %166 = vector.broadcast %165 : vector<16x1xf32> to vector<16x16xf32>
    %167 = arith.mulf %162, %166 : vector<16x16xf32>
    %168 = arith.truncf %167 : vector<16x16xf32> to vector<16x16xbf16>
    %cst_60 = arith.constant dense<0.000000e+00> : vector<16x16xf32>
    %169 = tpu.matmul %168, %154, %cst_60 {dimension_numbers = #tpu.dot_dimension_numbers<[1], [0], [0], [1], [0, 0, 1, 1], [], []>} : vector<16x16xbf16>, vector<16x16xbf16>, vector<16x16xf32> -> vector<16x16xf32>
    %170 = tpu.concatenate %43, %61, %79, %97, %115, %133, %151, %169 in 1 : vector<16x16xf32>, vector<16x16xf32>, vector<16x16xf32>, vector<16x16xf32>, vector<16x16xf32>, vector<16x16xf32>, vector<16x16xf32>, vector<16x16xf32> -> vector<16x128xf32>
    %171 = arith.truncf %170 : vector<16x128xf32> to vector<16x128xbf16>
    %cst_61 = arith.constant dense<0.000000e+00> : vector<16x128xf32>
    %172 = tpu.matmul %171, %12, %cst_61 {dimension_numbers = #tpu.dot_dimension_numbers<[1], [0], [0], [1], [0, 0, 1, 1], [], []>} : vector<16x128xbf16>, vector<128x128xbf16>, vector<16x128xf32> -> vector<16x128xf32>
    %173 = vector.broadcast %13 : vector<1x128xf32> to vector<16x128xf32>
    %174 = arith.addf %172, %173 : vector<16x128xf32>
    %175 = arith.addf %3, %174 : vector<16x128xf32>
    %c0_62 = arith.constant 0 : index
    %c0_63 = arith.constant 0 : index
    %176 = vector.load %arg13[%c0_62, %c0_63] : memref<1x128xf32, #tpu.memory_space<vmem>>, vector<1x128xf32>
    %c0_64 = arith.constant 0 : index
    %c0_65 = arith.constant 0 : index
    %177 = vector.load %arg14[%c0_64, %c0_65] : memref<1x128xf32, #tpu.memory_space<vmem>>, vector<1x128xf32>
    %cst_66 = arith.constant dense<0.000000e+00> : vector<16xf32>
    %178 = vector.multi_reduction <add>, %175, %cst_66 [1] : vector<16x128xf32> to vector<16xf32>
    %179 = vector.shape_cast %178 : vector<16xf32> to vector<16x1xf32>
    %cst_67 = arith.constant 1.280000e+02 : f32
    %180 = vector.broadcast %cst_67 : f32 to vector<16x1xf32>
    %181 = arith.divf %179, %180 : vector<16x1xf32>
    %182 = vector.broadcast %181 : vector<16x1xf32> to vector<16x128xf32>
    %183 = arith.subf %175, %182 : vector<16x128xf32>
    %184 = arith.mulf %183, %183 : vector<16x128xf32>
    %cst_68 = arith.constant dense<0.000000e+00> : vector<16xf32>
    %185 = vector.multi_reduction <add>, %184, %cst_68 [1] : vector<16x128xf32> to vector<16xf32>
    %186 = vector.shape_cast %185 : vector<16xf32> to vector<16x1xf32>
    %cst_69 = arith.constant 1.280000e+02 : f32
    %187 = vector.broadcast %cst_69 : f32 to vector<16x1xf32>
    %188 = arith.divf %186, %187 : vector<16x1xf32>
    %189 = vector.broadcast %181 : vector<16x1xf32> to vector<16x128xf32>
    %190 = arith.subf %175, %189 : vector<16x128xf32>
    %cst_70 = arith.constant 9.99999974E-6 : f32
    %191 = vector.broadcast %cst_70 : f32 to vector<16x1xf32>
    %192 = arith.addf %188, %191 : vector<16x1xf32>
    %193 = math.rsqrt %192 : vector<16x1xf32>
    %194 = vector.broadcast %193 : vector<16x1xf32> to vector<16x128xf32>
    %195 = arith.mulf %190, %194 : vector<16x128xf32>
    %196 = vector.broadcast %176 : vector<1x128xf32> to vector<16x128xf32>
    %197 = arith.mulf %195, %196 : vector<16x128xf32>
    %198 = vector.broadcast %177 : vector<1x128xf32> to vector<16x128xf32>
    %199 = arith.addf %197, %198 : vector<16x128xf32>
    %200 = arith.addf %199, %2 : vector<16x128xf32>
    %201 = arith.truncf %200 : vector<16x128xf32> to vector<16x128xbf16>
    %c0_71 = arith.constant 0 : index
    %c0_72 = arith.constant 0 : index
    %202 = vector.load %arg3[%c0_71, %c0_72] : memref<32x128xbf16, #tpu.memory_space<vmem>>, vector<32x128xbf16>
    %c0_73 = arith.constant 0 : index
    %c0_74 = arith.constant 0 : index
    %203 = vector.load %arg4[%c0_73, %c0_74] : memref<32x128xbf16, #tpu.memory_space<vmem>>, vector<32x128xbf16>
    %c0_75 = arith.constant 0 : index
    %c0_76 = arith.constant 0 : index
    %204 = vector.load %arg15[%c0_75, %c0_76] : memref<128x128xbf16, #tpu.memory_space<vmem>>, vector<128x128xbf16>
    %c0_77 = arith.constant 0 : index
    %c0_78 = arith.constant 0 : index
    %205 = vector.load %arg16[%c0_77, %c0_78] : memref<1x128xf32, #tpu.memory_space<vmem>>, vector<1x128xf32>
    %c0_79 = arith.constant 0 : index
    %c0_80 = arith.constant 0 : index
    %206 = vector.load %arg17[%c0_79, %c0_80] : memref<128x128xbf16, #tpu.memory_space<vmem>>, vector<128x128xbf16>
    %c0_81 = arith.constant 0 : index
    %c0_82 = arith.constant 0 : index
    %207 = vector.load %arg18[%c0_81, %c0_82] : memref<1x128xf32, #tpu.memory_space<vmem>>, vector<1x128xf32>
    %c0_83 = arith.constant 0 : index
    %c0_84 = arith.constant 0 : index
    %208 = vector.load %arg19[%c0_83, %c0_84] : memref<128x128xbf16, #tpu.memory_space<vmem>>, vector<128x128xbf16>
    %c0_85 = arith.constant 0 : index
    %c0_86 = arith.constant 0 : index
    %209 = vector.load %arg20[%c0_85, %c0_86] : memref<1x128xf32, #tpu.memory_space<vmem>>, vector<1x128xf32>
    %c0_87 = arith.constant 0 : index
    %c0_88 = arith.constant 0 : index
    %210 = vector.load %arg21[%c0_87, %c0_88] : memref<128x128xbf16, #tpu.memory_space<vmem>>, vector<128x128xbf16>
    %c0_89 = arith.constant 0 : index
    %c0_90 = arith.constant 0 : index
    %211 = vector.load %arg22[%c0_89, %c0_90] : memref<1x128xf32, #tpu.memory_space<vmem>>, vector<1x128xf32>
    %cst_91 = arith.constant dense<0.000000e+00> : vector<16x128xf32>
    %212 = tpu.matmul %201, %204, %cst_91 {dimension_numbers = #tpu.dot_dimension_numbers<[1], [0], [0], [1], [0, 0, 1, 1], [], []>} : vector<16x128xbf16>, vector<128x128xbf16>, vector<16x128xf32> -> vector<16x128xf32>
    %213 = vector.broadcast %205 : vector<1x128xf32> to vector<16x128xf32>
    %214 = arith.addf %212, %213 : vector<16x128xf32>
    %215 = arith.truncf %214 : vector<16x128xf32> to vector<16x128xbf16>
    %cst_92 = arith.constant dense<0.000000e+00> : vector<32x128xf32>
    %216 = tpu.matmul %202, %206, %cst_92 {dimension_numbers = #tpu.dot_dimension_numbers<[1], [0], [0], [1], [0, 0, 1, 1], [], []>} : vector<32x128xbf16>, vector<128x128xbf16>, vector<32x128xf32> -> vector<32x128xf32>
    %217 = vector.broadcast %207 : vector<1x128xf32> to vector<32x128xf32>
    %218 = arith.addf %216, %217 : vector<32x128xf32>
    %219 = arith.truncf %218 : vector<32x128xf32> to vector<32x128xbf16>
    %cst_93 = arith.constant dense<0.000000e+00> : vector<32x128xf32>
    %220 = tpu.matmul %203, %208, %cst_93 {dimension_numbers = #tpu.dot_dimension_numbers<[1], [0], [0], [1], [0, 0, 1, 1], [], []>} : vector<32x128xbf16>, vector<128x128xbf16>, vector<32x128xf32> -> vector<32x128xf32>
    %221 = vector.broadcast %209 : vector<1x128xf32> to vector<32x128xf32>
    %222 = arith.addf %220, %221 : vector<32x128xf32>
    %223 = arith.truncf %222 : vector<32x128xf32> to vector<32x128xbf16>
    %224 = vector.extract_strided_slice %215 {offsets = [0, 0], sizes = [16, 16], strides = [1, 1]} : vector<16x128xbf16> to vector<16x16xbf16>
    %225 = vector.extract_strided_slice %219 {offsets = [0, 0], sizes = [32, 16], strides = [1, 1]} : vector<32x128xbf16> to vector<32x16xbf16>
    %226 = vector.extract_strided_slice %223 {offsets = [0, 0], sizes = [32, 16], strides = [1, 1]} : vector<32x128xbf16> to vector<32x16xbf16>
    %cst_94 = arith.constant dense<0.000000e+00> : vector<16x32xf32>
    %227 = tpu.matmul %224, %225, %cst_94 {dimension_numbers = #tpu.dot_dimension_numbers<[1], [1], [0], [0], [0, 0, 1, 0], [], []>} : vector<16x16xbf16>, vector<32x16xbf16>, vector<16x32xf32> -> vector<16x32xf32>
    %cst_95 = arith.constant 2.500000e-01 : f32
    %228 = vector.broadcast %cst_95 : f32 to vector<16x32xf32>
    %229 = arith.mulf %227, %228 : vector<16x32xf32>
    %cst_96 = arith.constant dense<0xFF800000> : vector<16xf32>
    %230 = vector.multi_reduction <maximumf>, %229, %cst_96 [1] : vector<16x32xf32> to vector<16xf32>
    %231 = vector.shape_cast %230 : vector<16xf32> to vector<16x1xf32>
    %232 = vector.broadcast %231 : vector<16x1xf32> to vector<16x32xf32>
    %233 = arith.subf %229, %232 : vector<16x32xf32>
    %234 = math.exp %233 : vector<16x32xf32>
    %cst_97 = arith.constant dense<0.000000e+00> : vector<16xf32>
    %235 = vector.multi_reduction <add>, %234, %cst_97 [1] : vector<16x32xf32> to vector<16xf32>
    %236 = vector.shape_cast %235 : vector<16xf32> to vector<16x1xf32>
    %237 = tpu.reciprocal %236 {approx = true} : vector<16x1xf32> -> vector<16x1xf32>
    %238 = vector.broadcast %237 : vector<16x1xf32> to vector<16x32xf32>
    %239 = arith.mulf %234, %238 : vector<16x32xf32>
    %240 = arith.truncf %239 : vector<16x32xf32> to vector<16x32xbf16>
    %cst_98 = arith.constant dense<0.000000e+00> : vector<16x16xf32>
    %241 = tpu.matmul %240, %226, %cst_98 {dimension_numbers = #tpu.dot_dimension_numbers<[1], [0], [0], [1], [0, 0, 1, 1], [], []>} : vector<16x32xbf16>, vector<32x16xbf16>, vector<16x16xf32> -> vector<16x16xf32>
    %242 = vector.extract_strided_slice %215 {offsets = [0, 16], sizes = [16, 16], strides = [1, 1]} : vector<16x128xbf16> to vector<16x16xbf16>
    %243 = vector.extract_strided_slice %219 {offsets = [0, 16], sizes = [32, 16], strides = [1, 1]} : vector<32x128xbf16> to vector<32x16xbf16>
    %244 = vector.extract_strided_slice %223 {offsets = [0, 16], sizes = [32, 16], strides = [1, 1]} : vector<32x128xbf16> to vector<32x16xbf16>
    %cst_99 = arith.constant dense<0.000000e+00> : vector<16x32xf32>
    %245 = tpu.matmul %242, %243, %cst_99 {dimension_numbers = #tpu.dot_dimension_numbers<[1], [1], [0], [0], [0, 0, 1, 0], [], []>} : vector<16x16xbf16>, vector<32x16xbf16>, vector<16x32xf32> -> vector<16x32xf32>
    %cst_100 = arith.constant 2.500000e-01 : f32
    %246 = vector.broadcast %cst_100 : f32 to vector<16x32xf32>
    %247 = arith.mulf %245, %246 : vector<16x32xf32>
    %cst_101 = arith.constant dense<0xFF800000> : vector<16xf32>
    %248 = vector.multi_reduction <maximumf>, %247, %cst_101 [1] : vector<16x32xf32> to vector<16xf32>
    %249 = vector.shape_cast %248 : vector<16xf32> to vector<16x1xf32>
    %250 = vector.broadcast %249 : vector<16x1xf32> to vector<16x32xf32>
    %251 = arith.subf %247, %250 : vector<16x32xf32>
    %252 = math.exp %251 : vector<16x32xf32>
    %cst_102 = arith.constant dense<0.000000e+00> : vector<16xf32>
    %253 = vector.multi_reduction <add>, %252, %cst_102 [1] : vector<16x32xf32> to vector<16xf32>
    %254 = vector.shape_cast %253 : vector<16xf32> to vector<16x1xf32>
    %255 = tpu.reciprocal %254 {approx = true} : vector<16x1xf32> -> vector<16x1xf32>
    %256 = vector.broadcast %255 : vector<16x1xf32> to vector<16x32xf32>
    %257 = arith.mulf %252, %256 : vector<16x32xf32>
    %258 = arith.truncf %257 : vector<16x32xf32> to vector<16x32xbf16>
    %cst_103 = arith.constant dense<0.000000e+00> : vector<16x16xf32>
    %259 = tpu.matmul %258, %244, %cst_103 {dimension_numbers = #tpu.dot_dimension_numbers<[1], [0], [0], [1], [0, 0, 1, 1], [], []>} : vector<16x32xbf16>, vector<32x16xbf16>, vector<16x16xf32> -> vector<16x16xf32>
    %260 = vector.extract_strided_slice %215 {offsets = [0, 32], sizes = [16, 16], strides = [1, 1]} : vector<16x128xbf16> to vector<16x16xbf16>
    %261 = vector.extract_strided_slice %219 {offsets = [0, 32], sizes = [32, 16], strides = [1, 1]} : vector<32x128xbf16> to vector<32x16xbf16>
    %262 = vector.extract_strided_slice %223 {offsets = [0, 32], sizes = [32, 16], strides = [1, 1]} : vector<32x128xbf16> to vector<32x16xbf16>
    %cst_104 = arith.constant dense<0.000000e+00> : vector<16x32xf32>
    %263 = tpu.matmul %260, %261, %cst_104 {dimension_numbers = #tpu.dot_dimension_numbers<[1], [1], [0], [0], [0, 0, 1, 0], [], []>} : vector<16x16xbf16>, vector<32x16xbf16>, vector<16x32xf32> -> vector<16x32xf32>
    %cst_105 = arith.constant 2.500000e-01 : f32
    %264 = vector.broadcast %cst_105 : f32 to vector<16x32xf32>
    %265 = arith.mulf %263, %264 : vector<16x32xf32>
    %cst_106 = arith.constant dense<0xFF800000> : vector<16xf32>
    %266 = vector.multi_reduction <maximumf>, %265, %cst_106 [1] : vector<16x32xf32> to vector<16xf32>
    %267 = vector.shape_cast %266 : vector<16xf32> to vector<16x1xf32>
    %268 = vector.broadcast %267 : vector<16x1xf32> to vector<16x32xf32>
    %269 = arith.subf %265, %268 : vector<16x32xf32>
    %270 = math.exp %269 : vector<16x32xf32>
    %cst_107 = arith.constant dense<0.000000e+00> : vector<16xf32>
    %271 = vector.multi_reduction <add>, %270, %cst_107 [1] : vector<16x32xf32> to vector<16xf32>
    %272 = vector.shape_cast %271 : vector<16xf32> to vector<16x1xf32>
    %273 = tpu.reciprocal %272 {approx = true} : vector<16x1xf32> -> vector<16x1xf32>
    %274 = vector.broadcast %273 : vector<16x1xf32> to vector<16x32xf32>
    %275 = arith.mulf %270, %274 : vector<16x32xf32>
    %276 = arith.truncf %275 : vector<16x32xf32> to vector<16x32xbf16>
    %cst_108 = arith.constant dense<0.000000e+00> : vector<16x16xf32>
    %277 = tpu.matmul %276, %262, %cst_108 {dimension_numbers = #tpu.dot_dimension_numbers<[1], [0], [0], [1], [0, 0, 1, 1], [], []>} : vector<16x32xbf16>, vector<32x16xbf16>, vector<16x16xf32> -> vector<16x16xf32>
    %278 = vector.extract_strided_slice %215 {offsets = [0, 48], sizes = [16, 16], strides = [1, 1]} : vector<16x128xbf16> to vector<16x16xbf16>
    %279 = vector.extract_strided_slice %219 {offsets = [0, 48], sizes = [32, 16], strides = [1, 1]} : vector<32x128xbf16> to vector<32x16xbf16>
    %280 = vector.extract_strided_slice %223 {offsets = [0, 48], sizes = [32, 16], strides = [1, 1]} : vector<32x128xbf16> to vector<32x16xbf16>
    %cst_109 = arith.constant dense<0.000000e+00> : vector<16x32xf32>
    %281 = tpu.matmul %278, %279, %cst_109 {dimension_numbers = #tpu.dot_dimension_numbers<[1], [1], [0], [0], [0, 0, 1, 0], [], []>} : vector<16x16xbf16>, vector<32x16xbf16>, vector<16x32xf32> -> vector<16x32xf32>
    %cst_110 = arith.constant 2.500000e-01 : f32
    %282 = vector.broadcast %cst_110 : f32 to vector<16x32xf32>
    %283 = arith.mulf %281, %282 : vector<16x32xf32>
    %cst_111 = arith.constant dense<0xFF800000> : vector<16xf32>
    %284 = vector.multi_reduction <maximumf>, %283, %cst_111 [1] : vector<16x32xf32> to vector<16xf32>
    %285 = vector.shape_cast %284 : vector<16xf32> to vector<16x1xf32>
    %286 = vector.broadcast %285 : vector<16x1xf32> to vector<16x32xf32>
    %287 = arith.subf %283, %286 : vector<16x32xf32>
    %288 = math.exp %287 : vector<16x32xf32>
    %cst_112 = arith.constant dense<0.000000e+00> : vector<16xf32>
    %289 = vector.multi_reduction <add>, %288, %cst_112 [1] : vector<16x32xf32> to vector<16xf32>
    %290 = vector.shape_cast %289 : vector<16xf32> to vector<16x1xf32>
    %291 = tpu.reciprocal %290 {approx = true} : vector<16x1xf32> -> vector<16x1xf32>
    %292 = vector.broadcast %291 : vector<16x1xf32> to vector<16x32xf32>
    %293 = arith.mulf %288, %292 : vector<16x32xf32>
    %294 = arith.truncf %293 : vector<16x32xf32> to vector<16x32xbf16>
    %cst_113 = arith.constant dense<0.000000e+00> : vector<16x16xf32>
    %295 = tpu.matmul %294, %280, %cst_113 {dimension_numbers = #tpu.dot_dimension_numbers<[1], [0], [0], [1], [0, 0, 1, 1], [], []>} : vector<16x32xbf16>, vector<32x16xbf16>, vector<16x16xf32> -> vector<16x16xf32>
    %296 = vector.extract_strided_slice %215 {offsets = [0, 64], sizes = [16, 16], strides = [1, 1]} : vector<16x128xbf16> to vector<16x16xbf16>
    %297 = vector.extract_strided_slice %219 {offsets = [0, 64], sizes = [32, 16], strides = [1, 1]} : vector<32x128xbf16> to vector<32x16xbf16>
    %298 = vector.extract_strided_slice %223 {offsets = [0, 64], sizes = [32, 16], strides = [1, 1]} : vector<32x128xbf16> to vector<32x16xbf16>
    %cst_114 = arith.constant dense<0.000000e+00> : vector<16x32xf32>
    %299 = tpu.matmul %296, %297, %cst_114 {dimension_numbers = #tpu.dot_dimension_numbers<[1], [1], [0], [0], [0, 0, 1, 0], [], []>} : vector<16x16xbf16>, vector<32x16xbf16>, vector<16x32xf32> -> vector<16x32xf32>
    %cst_115 = arith.constant 2.500000e-01 : f32
    %300 = vector.broadcast %cst_115 : f32 to vector<16x32xf32>
    %301 = arith.mulf %299, %300 : vector<16x32xf32>
    %cst_116 = arith.constant dense<0xFF800000> : vector<16xf32>
    %302 = vector.multi_reduction <maximumf>, %301, %cst_116 [1] : vector<16x32xf32> to vector<16xf32>
    %303 = vector.shape_cast %302 : vector<16xf32> to vector<16x1xf32>
    %304 = vector.broadcast %303 : vector<16x1xf32> to vector<16x32xf32>
    %305 = arith.subf %301, %304 : vector<16x32xf32>
    %306 = math.exp %305 : vector<16x32xf32>
    %cst_117 = arith.constant dense<0.000000e+00> : vector<16xf32>
    %307 = vector.multi_reduction <add>, %306, %cst_117 [1] : vector<16x32xf32> to vector<16xf32>
    %308 = vector.shape_cast %307 : vector<16xf32> to vector<16x1xf32>
    %309 = tpu.reciprocal %308 {approx = true} : vector<16x1xf32> -> vector<16x1xf32>
    %310 = vector.broadcast %309 : vector<16x1xf32> to vector<16x32xf32>
    %311 = arith.mulf %306, %310 : vector<16x32xf32>
    %312 = arith.truncf %311 : vector<16x32xf32> to vector<16x32xbf16>
    %cst_118 = arith.constant dense<0.000000e+00> : vector<16x16xf32>
    %313 = tpu.matmul %312, %298, %cst_118 {dimension_numbers = #tpu.dot_dimension_numbers<[1], [0], [0], [1], [0, 0, 1, 1], [], []>} : vector<16x32xbf16>, vector<32x16xbf16>, vector<16x16xf32> -> vector<16x16xf32>
    %314 = vector.extract_strided_slice %215 {offsets = [0, 80], sizes = [16, 16], strides = [1, 1]} : vector<16x128xbf16> to vector<16x16xbf16>
    %315 = vector.extract_strided_slice %219 {offsets = [0, 80], sizes = [32, 16], strides = [1, 1]} : vector<32x128xbf16> to vector<32x16xbf16>
    %316 = vector.extract_strided_slice %223 {offsets = [0, 80], sizes = [32, 16], strides = [1, 1]} : vector<32x128xbf16> to vector<32x16xbf16>
    %cst_119 = arith.constant dense<0.000000e+00> : vector<16x32xf32>
    %317 = tpu.matmul %314, %315, %cst_119 {dimension_numbers = #tpu.dot_dimension_numbers<[1], [1], [0], [0], [0, 0, 1, 0], [], []>} : vector<16x16xbf16>, vector<32x16xbf16>, vector<16x32xf32> -> vector<16x32xf32>
    %cst_120 = arith.constant 2.500000e-01 : f32
    %318 = vector.broadcast %cst_120 : f32 to vector<16x32xf32>
    %319 = arith.mulf %317, %318 : vector<16x32xf32>
    %cst_121 = arith.constant dense<0xFF800000> : vector<16xf32>
    %320 = vector.multi_reduction <maximumf>, %319, %cst_121 [1] : vector<16x32xf32> to vector<16xf32>
    %321 = vector.shape_cast %320 : vector<16xf32> to vector<16x1xf32>
    %322 = vector.broadcast %321 : vector<16x1xf32> to vector<16x32xf32>
    %323 = arith.subf %319, %322 : vector<16x32xf32>
    %324 = math.exp %323 : vector<16x32xf32>
    %cst_122 = arith.constant dense<0.000000e+00> : vector<16xf32>
    %325 = vector.multi_reduction <add>, %324, %cst_122 [1] : vector<16x32xf32> to vector<16xf32>
    %326 = vector.shape_cast %325 : vector<16xf32> to vector<16x1xf32>
    %327 = tpu.reciprocal %326 {approx = true} : vector<16x1xf32> -> vector<16x1xf32>
    %328 = vector.broadcast %327 : vector<16x1xf32> to vector<16x32xf32>
    %329 = arith.mulf %324, %328 : vector<16x32xf32>
    %330 = arith.truncf %329 : vector<16x32xf32> to vector<16x32xbf16>
    %cst_123 = arith.constant dense<0.000000e+00> : vector<16x16xf32>
    %331 = tpu.matmul %330, %316, %cst_123 {dimension_numbers = #tpu.dot_dimension_numbers<[1], [0], [0], [1], [0, 0, 1, 1], [], []>} : vector<16x32xbf16>, vector<32x16xbf16>, vector<16x16xf32> -> vector<16x16xf32>
    %332 = vector.extract_strided_slice %215 {offsets = [0, 96], sizes = [16, 16], strides = [1, 1]} : vector<16x128xbf16> to vector<16x16xbf16>
    %333 = vector.extract_strided_slice %219 {offsets = [0, 96], sizes = [32, 16], strides = [1, 1]} : vector<32x128xbf16> to vector<32x16xbf16>
    %334 = vector.extract_strided_slice %223 {offsets = [0, 96], sizes = [32, 16], strides = [1, 1]} : vector<32x128xbf16> to vector<32x16xbf16>
    %cst_124 = arith.constant dense<0.000000e+00> : vector<16x32xf32>
    %335 = tpu.matmul %332, %333, %cst_124 {dimension_numbers = #tpu.dot_dimension_numbers<[1], [1], [0], [0], [0, 0, 1, 0], [], []>} : vector<16x16xbf16>, vector<32x16xbf16>, vector<16x32xf32> -> vector<16x32xf32>
    %cst_125 = arith.constant 2.500000e-01 : f32
    %336 = vector.broadcast %cst_125 : f32 to vector<16x32xf32>
    %337 = arith.mulf %335, %336 : vector<16x32xf32>
    %cst_126 = arith.constant dense<0xFF800000> : vector<16xf32>
    %338 = vector.multi_reduction <maximumf>, %337, %cst_126 [1] : vector<16x32xf32> to vector<16xf32>
    %339 = vector.shape_cast %338 : vector<16xf32> to vector<16x1xf32>
    %340 = vector.broadcast %339 : vector<16x1xf32> to vector<16x32xf32>
    %341 = arith.subf %337, %340 : vector<16x32xf32>
    %342 = math.exp %341 : vector<16x32xf32>
    %cst_127 = arith.constant dense<0.000000e+00> : vector<16xf32>
    %343 = vector.multi_reduction <add>, %342, %cst_127 [1] : vector<16x32xf32> to vector<16xf32>
    %344 = vector.shape_cast %343 : vector<16xf32> to vector<16x1xf32>
    %345 = tpu.reciprocal %344 {approx = true} : vector<16x1xf32> -> vector<16x1xf32>
    %346 = vector.broadcast %345 : vector<16x1xf32> to vector<16x32xf32>
    %347 = arith.mulf %342, %346 : vector<16x32xf32>
    %348 = arith.truncf %347 : vector<16x32xf32> to vector<16x32xbf16>
    %cst_128 = arith.constant dense<0.000000e+00> : vector<16x16xf32>
    %349 = tpu.matmul %348, %334, %cst_128 {dimension_numbers = #tpu.dot_dimension_numbers<[1], [0], [0], [1], [0, 0, 1, 1], [], []>} : vector<16x32xbf16>, vector<32x16xbf16>, vector<16x16xf32> -> vector<16x16xf32>
    %350 = vector.extract_strided_slice %215 {offsets = [0, 112], sizes = [16, 16], strides = [1, 1]} : vector<16x128xbf16> to vector<16x16xbf16>
    %351 = vector.extract_strided_slice %219 {offsets = [0, 112], sizes = [32, 16], strides = [1, 1]} : vector<32x128xbf16> to vector<32x16xbf16>
    %352 = vector.extract_strided_slice %223 {offsets = [0, 112], sizes = [32, 16], strides = [1, 1]} : vector<32x128xbf16> to vector<32x16xbf16>
    %cst_129 = arith.constant dense<0.000000e+00> : vector<16x32xf32>
    %353 = tpu.matmul %350, %351, %cst_129 {dimension_numbers = #tpu.dot_dimension_numbers<[1], [1], [0], [0], [0, 0, 1, 0], [], []>} : vector<16x16xbf16>, vector<32x16xbf16>, vector<16x32xf32> -> vector<16x32xf32>
    %cst_130 = arith.constant 2.500000e-01 : f32
    %354 = vector.broadcast %cst_130 : f32 to vector<16x32xf32>
    %355 = arith.mulf %353, %354 : vector<16x32xf32>
    %cst_131 = arith.constant dense<0xFF800000> : vector<16xf32>
    %356 = vector.multi_reduction <maximumf>, %355, %cst_131 [1] : vector<16x32xf32> to vector<16xf32>
    %357 = vector.shape_cast %356 : vector<16xf32> to vector<16x1xf32>
    %358 = vector.broadcast %357 : vector<16x1xf32> to vector<16x32xf32>
    %359 = arith.subf %355, %358 : vector<16x32xf32>
    %360 = math.exp %359 : vector<16x32xf32>
    %cst_132 = arith.constant dense<0.000000e+00> : vector<16xf32>
    %361 = vector.multi_reduction <add>, %360, %cst_132 [1] : vector<16x32xf32> to vector<16xf32>
    %362 = vector.shape_cast %361 : vector<16xf32> to vector<16x1xf32>
    %363 = tpu.reciprocal %362 {approx = true} : vector<16x1xf32> -> vector<16x1xf32>
    %364 = vector.broadcast %363 : vector<16x1xf32> to vector<16x32xf32>
    %365 = arith.mulf %360, %364 : vector<16x32xf32>
    %366 = arith.truncf %365 : vector<16x32xf32> to vector<16x32xbf16>
    %cst_133 = arith.constant dense<0.000000e+00> : vector<16x16xf32>
    %367 = tpu.matmul %366, %352, %cst_133 {dimension_numbers = #tpu.dot_dimension_numbers<[1], [0], [0], [1], [0, 0, 1, 1], [], []>} : vector<16x32xbf16>, vector<32x16xbf16>, vector<16x16xf32> -> vector<16x16xf32>
    %368 = tpu.concatenate %241, %259, %277, %295, %313, %331, %349, %367 in 1 : vector<16x16xf32>, vector<16x16xf32>, vector<16x16xf32>, vector<16x16xf32>, vector<16x16xf32>, vector<16x16xf32>, vector<16x16xf32>, vector<16x16xf32> -> vector<16x128xf32>
    %369 = arith.truncf %368 : vector<16x128xf32> to vector<16x128xbf16>
    %cst_134 = arith.constant dense<0.000000e+00> : vector<16x128xf32>
    %370 = tpu.matmul %369, %210, %cst_134 {dimension_numbers = #tpu.dot_dimension_numbers<[1], [0], [0], [1], [0, 0, 1, 1], [], []>} : vector<16x128xbf16>, vector<128x128xbf16>, vector<16x128xf32> -> vector<16x128xf32>
    %371 = vector.broadcast %211 : vector<1x128xf32> to vector<16x128xf32>
    %372 = arith.addf %370, %371 : vector<16x128xf32>
    %373 = arith.addf %199, %372 : vector<16x128xf32>
    %c0_135 = arith.constant 0 : index
    %c0_136 = arith.constant 0 : index
    %374 = vector.load %arg23[%c0_135, %c0_136] : memref<1x128xf32, #tpu.memory_space<vmem>>, vector<1x128xf32>
    %c0_137 = arith.constant 0 : index
    %c0_138 = arith.constant 0 : index
    %375 = vector.load %arg24[%c0_137, %c0_138] : memref<1x128xf32, #tpu.memory_space<vmem>>, vector<1x128xf32>
    %cst_139 = arith.constant dense<0.000000e+00> : vector<16xf32>
    %376 = vector.multi_reduction <add>, %373, %cst_139 [1] : vector<16x128xf32> to vector<16xf32>
    %377 = vector.shape_cast %376 : vector<16xf32> to vector<16x1xf32>
    %cst_140 = arith.constant 1.280000e+02 : f32
    %378 = vector.broadcast %cst_140 : f32 to vector<16x1xf32>
    %379 = arith.divf %377, %378 : vector<16x1xf32>
    %380 = vector.broadcast %379 : vector<16x1xf32> to vector<16x128xf32>
    %381 = arith.subf %373, %380 : vector<16x128xf32>
    %382 = arith.mulf %381, %381 : vector<16x128xf32>
    %cst_141 = arith.constant dense<0.000000e+00> : vector<16xf32>
    %383 = vector.multi_reduction <add>, %382, %cst_141 [1] : vector<16x128xf32> to vector<16xf32>
    %384 = vector.shape_cast %383 : vector<16xf32> to vector<16x1xf32>
    %cst_142 = arith.constant 1.280000e+02 : f32
    %385 = vector.broadcast %cst_142 : f32 to vector<16x1xf32>
    %386 = arith.divf %384, %385 : vector<16x1xf32>
    %387 = vector.broadcast %379 : vector<16x1xf32> to vector<16x128xf32>
    %388 = arith.subf %373, %387 : vector<16x128xf32>
    %cst_143 = arith.constant 9.99999974E-6 : f32
    %389 = vector.broadcast %cst_143 : f32 to vector<16x1xf32>
    %390 = arith.addf %386, %389 : vector<16x1xf32>
    %391 = math.rsqrt %390 : vector<16x1xf32>
    %392 = vector.broadcast %391 : vector<16x1xf32> to vector<16x128xf32>
    %393 = arith.mulf %388, %392 : vector<16x128xf32>
    %394 = vector.broadcast %374 : vector<1x128xf32> to vector<16x128xf32>
    %395 = arith.mulf %393, %394 : vector<16x128xf32>
    %396 = vector.broadcast %375 : vector<1x128xf32> to vector<16x128xf32>
    %397 = arith.addf %395, %396 : vector<16x128xf32>
    %398 = arith.truncf %397 : vector<16x128xf32> to vector<16x128xbf16>
    %c0_144 = arith.constant 0 : index
    %c0_145 = arith.constant 0 : index
    %399 = vector.load %arg25[%c0_144, %c0_145] : memref<128x256xbf16, #tpu.memory_space<vmem>>, vector<128x256xbf16>
    %cst_146 = arith.constant dense<0.000000e+00> : vector<16x256xf32>
    %400 = tpu.matmul %398, %399, %cst_146 {dimension_numbers = #tpu.dot_dimension_numbers<[1], [0], [0], [1], [0, 0, 1, 1], [], []>} : vector<16x128xbf16>, vector<128x256xbf16>, vector<16x256xf32> -> vector<16x256xf32>
    %c0_147 = arith.constant 0 : index
    %c0_148 = arith.constant 0 : index
    %401 = vector.load %arg26[%c0_147, %c0_148] : memref<1x256xf32, #tpu.memory_space<vmem>>, vector<1x256xf32>
    %402 = vector.broadcast %401 : vector<1x256xf32> to vector<16x256xf32>
    %403 = arith.addf %400, %402 : vector<16x256xf32>
    %cst_149 = arith.constant 0.000000e+00 : f32
    %404 = vector.broadcast %cst_149 : f32 to vector<16x256xf32>
    %405 = arith.maximumf %403, %404 : vector<16x256xf32>
    %406 = arith.truncf %405 : vector<16x256xf32> to vector<16x256xbf16>
    %c0_150 = arith.constant 0 : index
    %c0_151 = arith.constant 0 : index
    %407 = vector.load %arg27[%c0_150, %c0_151] : memref<256x128xbf16, #tpu.memory_space<vmem>>, vector<256x128xbf16>
    %cst_152 = arith.constant dense<0.000000e+00> : vector<16x128xf32>
    %408 = tpu.matmul %406, %407, %cst_152 {dimension_numbers = #tpu.dot_dimension_numbers<[1], [0], [0], [1], [0, 0, 1, 1], [], []>} : vector<16x256xbf16>, vector<256x128xbf16>, vector<16x128xf32> -> vector<16x128xf32>
    %409 = arith.addf %397, %408 : vector<16x128xf32>
    %c0_153 = arith.constant 0 : index
    %c0_154 = arith.constant 0 : index
    %410 = vector.load %arg28[%c0_153, %c0_154] : memref<1x128xf32, #tpu.memory_space<vmem>>, vector<1x128xf32>
    %411 = vector.broadcast %410 : vector<1x128xf32> to vector<16x128xf32>
    %412 = arith.addf %409, %411 : vector<16x128xf32>
    %c0_155 = arith.constant 0 : index
    %c0_156 = arith.constant 0 : index
    %413 = vector.load %arg29[%c0_155, %c0_156] : memref<1x128xf32, #tpu.memory_space<vmem>>, vector<1x128xf32>
    %c0_157 = arith.constant 0 : index
    %c0_158 = arith.constant 0 : index
    %414 = vector.load %arg30[%c0_157, %c0_158] : memref<1x128xf32, #tpu.memory_space<vmem>>, vector<1x128xf32>
    %cst_159 = arith.constant dense<0.000000e+00> : vector<16xf32>
    %415 = vector.multi_reduction <add>, %412, %cst_159 [1] : vector<16x128xf32> to vector<16xf32>
    %416 = vector.shape_cast %415 : vector<16xf32> to vector<16x1xf32>
    %cst_160 = arith.constant 1.280000e+02 : f32
    %417 = vector.broadcast %cst_160 : f32 to vector<16x1xf32>
    %418 = arith.divf %416, %417 : vector<16x1xf32>
    %419 = vector.broadcast %418 : vector<16x1xf32> to vector<16x128xf32>
    %420 = arith.subf %412, %419 : vector<16x128xf32>
    %421 = arith.mulf %420, %420 : vector<16x128xf32>
    %cst_161 = arith.constant dense<0.000000e+00> : vector<16xf32>
    %422 = vector.multi_reduction <add>, %421, %cst_161 [1] : vector<16x128xf32> to vector<16xf32>
    %423 = vector.shape_cast %422 : vector<16xf32> to vector<16x1xf32>
    %cst_162 = arith.constant 1.280000e+02 : f32
    %424 = vector.broadcast %cst_162 : f32 to vector<16x1xf32>
    %425 = arith.divf %423, %424 : vector<16x1xf32>
    %426 = vector.broadcast %418 : vector<16x1xf32> to vector<16x128xf32>
    %427 = arith.subf %412, %426 : vector<16x128xf32>
    %cst_163 = arith.constant 9.99999974E-6 : f32
    %428 = vector.broadcast %cst_163 : f32 to vector<16x1xf32>
    %429 = arith.addf %425, %428 : vector<16x1xf32>
    %430 = math.rsqrt %429 : vector<16x1xf32>
    %431 = vector.broadcast %430 : vector<16x1xf32> to vector<16x128xf32>
    %432 = arith.mulf %427, %431 : vector<16x128xf32>
    %433 = vector.broadcast %413 : vector<1x128xf32> to vector<16x128xf32>
    %434 = arith.mulf %432, %433 : vector<16x128xf32>
    %435 = vector.broadcast %414 : vector<1x128xf32> to vector<16x128xf32>
    %436 = arith.addf %434, %435 : vector<16x128xf32>
    %437 = arith.truncf %436 : vector<16x128xf32> to vector<16x128xbf16>
    %c0_164 = arith.constant 0 : index
    %c0_165 = arith.constant 0 : index
    %438 = vector.load %arg33[%c0_164, %c0_165] : memref<16x128xbf16, #tpu.memory_space<vmem>>, vector<16x128xbf16>
    tpu.vector_store %arg33[%c0_164, %c0_165], %437 {strides = array<i32>} : memref<16x128xbf16, #tpu.memory_space<vmem>>, vector<16x128xbf16>,
    %c0_166 = arith.constant 0 : index
    %c0_167 = arith.constant 0 : index
    %439 = vector.load %arg31[%c0_166, %c0_167] : memref<1x128xf32, #tpu.memory_space<vmem>>, vector<1x128xf32>
    %c0_168 = arith.constant 0 : index
    %c0_169 = arith.constant 0 : index
    %440 = vector.load %arg32[%c0_168, %c0_169] : memref<1x128xf32, #tpu.memory_space<vmem>>, vector<1x128xf32>
    %cst_170 = arith.constant dense<0.000000e+00> : vector<16xf32>
    %441 = vector.multi_reduction <add>, %436, %cst_170 [1] : vector<16x128xf32> to vector<16xf32>
    %442 = vector.shape_cast %441 : vector<16xf32> to vector<16x1xf32>
    %cst_171 = arith.constant 1.280000e+02 : f32
    %443 = vector.broadcast %cst_171 : f32 to vector<16x1xf32>
    %444 = arith.divf %442, %443 : vector<16x1xf32>
    %445 = vector.broadcast %444 : vector<16x1xf32> to vector<16x128xf32>
    %446 = arith.subf %436, %445 : vector<16x128xf32>
    %447 = arith.mulf %446, %446 : vector<16x128xf32>
    %cst_172 = arith.constant dense<0.000000e+00> : vector<16xf32>
    %448 = vector.multi_reduction <add>, %447, %cst_172 [1] : vector<16x128xf32> to vector<16xf32>
    %449 = vector.shape_cast %448 : vector<16xf32> to vector<16x1xf32>
    %cst_173 = arith.constant 1.280000e+02 : f32
    %450 = vector.broadcast %cst_173 : f32 to vector<16x1xf32>
    %451 = arith.divf %449, %450 : vector<16x1xf32>
    %452 = vector.broadcast %444 : vector<16x1xf32> to vector<16x128xf32>
    %453 = arith.subf %436, %452 : vector<16x128xf32>
    %cst_174 = arith.constant 9.99999974E-6 : f32
    %454 = vector.broadcast %cst_174 : f32 to vector<16x1xf32>
    %455 = arith.addf %451, %454 : vector<16x1xf32>
    %456 = math.rsqrt %455 : vector<16x1xf32>
    %457 = vector.broadcast %456 : vector<16x1xf32> to vector<16x128xf32>
    %458 = arith.mulf %453, %457 : vector<16x128xf32>
    %459 = vector.broadcast %439 : vector<1x128xf32> to vector<16x128xf32>
    %460 = arith.mulf %458, %459 : vector<16x128xf32>
    %461 = vector.broadcast %440 : vector<1x128xf32> to vector<16x128xf32>
    %462 = arith.addf %460, %461 : vector<16x128xf32>
    %c0_175 = arith.constant 0 : index
    %c0_176 = arith.constant 0 : index
    %463 = vector.load %arg34[%c0_175, %c0_176] : memref<16x128xf32, #tpu.memory_space<vmem>>, vector<16x128xf32>
    tpu.vector_store %arg34[%c0_175, %c0_176], %462 {strides = array<i32>} : memref<16x128xf32, #tpu.memory_space<vmem>>, vector<16x128xf32>,
    return
  }
  func.func @transform_0(%arg0: i32) -> (i32, i32) {
    %c0_i32 = arith.constant 0 : i32
    %c0_i32_0 = arith.constant 0 : i32
    return %arg0, %c0_i32 : i32, i32
  }
  func.func @transform_1(%arg0: i32) -> (i32, i32) {
    %c0_i32 = arith.constant 0 : i32
    %c0_i32_0 = arith.constant 0 : i32
    return %arg0, %c0_i32 : i32, i32
  }
  func.func @transform_2(%arg0: i32) -> (i32, i32) {
    %c0_i32 = arith.constant 0 : i32
    %c0_i32_0 = arith.constant 0 : i32
    return %arg0, %c0_i32 : i32, i32
  }
  func.func @transform_3(%arg0: i32) -> (i32, i32) {
    %c0_i32 = arith.constant 0 : i32
    %c0_i32_0 = arith.constant 0 : i32
    return %arg0, %c0_i32 : i32, i32
  }
  func.func @transform_4(%arg0: i32) -> (i32, i32) {
    %c0_i32 = arith.constant 0 : i32
    %c0_i32_0 = arith.constant 0 : i32
    %c0_i32_1 = arith.constant 0 : i32
    return %c0_i32, %c0_i32_0 : i32, i32
  }
  func.func @transform_5(%arg0: i32) -> (i32, i32) {
    %c0_i32 = arith.constant 0 : i32
    %c0_i32_0 = arith.constant 0 : i32
    %c0_i32_1 = arith.constant 0 : i32
    return %c0_i32, %c0_i32_0 : i32, i32
  }
  func.func @transform_6(%arg0: i32) -> (i32, i32) {
    %c0_i32 = arith.constant 0 : i32
    %c0_i32_0 = arith.constant 0 : i32
    %c0_i32_1 = arith.constant 0 : i32
    return %c0_i32, %c0_i32_0 : i32, i32
  }
  func.func @transform_7(%arg0: i32) -> (i32, i32) {
    %c0_i32 = arith.constant 0 : i32
    %c0_i32_0 = arith.constant 0 : i32
    %c0_i32_1 = arith.constant 0 : i32
    return %c0_i32, %c0_i32_0 : i32, i32
  }
  func.func @transform_8(%arg0: i32) -> (i32, i32) {
    %c0_i32 = arith.constant 0 : i32
    %c0_i32_0 = arith.constant 0 : i32
    %c0_i32_1 = arith.constant 0 : i32
    return %c0_i32, %c0_i32_0 : i32, i32
  }
  func.func @transform_9(%arg0: i32) -> (i32, i32) {
    %c0_i32 = arith.constant 0 : i32
    %c0_i32_0 = arith.constant 0 : i32
    %c0_i32_1 = arith.constant 0 : i32
    return %c0_i32, %c0_i32_0 : i32, i32
  }
  func.func @transform_10(%arg0: i32) -> (i32, i32) {
    %c0_i32 = arith.constant 0 : i32
    %c0_i32_0 = arith.constant 0 : i32
    %c0_i32_1 = arith.constant 0 : i32
    return %c0_i32, %c0_i32_0 : i32, i32
  }
  func.func @transform_11(%arg0: i32) -> (i32, i32) {
    %c0_i32 = arith.constant 0 : i32
    %c0_i32_0 = arith.constant 0 : i32
    %c0_i32_1 = arith.constant 0 : i32
    return %c0_i32, %c0_i32_0 : i32, i32
  }
  func.func @transform_12(%arg0: i32) -> (i32, i32) {
    %c0_i32 = arith.constant 0 : i32
    %c0_i32_0 = arith.constant 0 : i32
    %c0_i32_1 = arith.constant 0 : i32
    return %c0_i32, %c0_i32_0 : i32, i32
  }
  func.func @transform_13(%arg0: i32) -> (i32, i32) {
    %c0_i32 = arith.constant 0 : i32
    %c0_i32_0 = arith.constant 0 : i32
    %c0_i32_1 = arith.constant 0 : i32
    return %c0_i32, %c0_i32_0 : i32, i32
  }
  func.func @transform_14(%arg0: i32) -> (i32, i32) {
    %c0_i32 = arith.constant 0 : i32
    %c0_i32_0 = arith.constant 0 : i32
    %c0_i32_1 = arith.constant 0 : i32
    return %c0_i32, %c0_i32_0 : i32, i32
  }
  func.func @transform_15(%arg0: i32) -> (i32, i32) {
    %c0_i32 = arith.constant 0 : i32
    %c0_i32_0 = arith.constant 0 : i32
    %c0_i32_1 = arith.constant 0 : i32
    return %c0_i32, %c0_i32_0 : i32, i32
  }
  func.func @transform_16(%arg0: i32) -> (i32, i32) {
    %c0_i32 = arith.constant 0 : i32
    %c0_i32_0 = arith.constant 0 : i32
    %c0_i32_1 = arith.constant 0 : i32
    return %c0_i32, %c0_i32_0 : i32, i32
  }
  func.func @transform_17(%arg0: i32) -> (i32, i32) {
    %c0_i32 = arith.constant 0 : i32
    %c0_i32_0 = arith.constant 0 : i32
    %c0_i32_1 = arith.constant 0 : i32
    return %c0_i32, %c0_i32_0 : i32, i32
  }
  func.func @transform_18(%arg0: i32) -> (i32, i32) {
    %c0_i32 = arith.constant 0 : i32
    %c0_i32_0 = arith.constant 0 : i32
    %c0_i32_1 = arith.constant 0 : i32
    return %c0_i32, %c0_i32_0 : i32, i32
  }
  func.func @transform_19(%arg0: i32) -> (i32, i32) {
    %c0_i32 = arith.constant 0 : i32
    %c0_i32_0 = arith.constant 0 : i32
    %c0_i32_1 = arith.constant 0 : i32
    return %c0_i32, %c0_i32_0 : i32, i32
  }
  func.func @transform_20(%arg0: i32) -> (i32, i32) {
    %c0_i32 = arith.constant 0 : i32
    %c0_i32_0 = arith.constant 0 : i32
    %c0_i32_1 = arith.constant 0 : i32
    return %c0_i32, %c0_i32_0 : i32, i32
  }
  func.func @transform_21(%arg0: i32) -> (i32, i32) {
    %c0_i32 = arith.constant 0 : i32
    %c0_i32_0 = arith.constant 0 : i32
    %c0_i32_1 = arith.constant 0 : i32
    return %c0_i32, %c0_i32_0 : i32, i32
  }
  func.func @transform_22(%arg0: i32) -> (i32, i32) {
    %c0_i32 = arith.constant 0 : i32
    %c0_i32_0 = arith.constant 0 : i32
    %c0_i32_1 = arith.constant 0 : i32
    return %c0_i32, %c0_i32_0 : i32, i32
  }
  func.func @transform_23(%arg0: i32) -> (i32, i32) {
    %c0_i32 = arith.constant 0 : i32
    %c0_i32_0 = arith.constant 0 : i32
    %c0_i32_1 = arith.constant 0 : i32
    return %c0_i32, %c0_i32_0 : i32, i32
  }
  func.func @transform_24(%arg0: i32) -> (i32, i32) {
    %c0_i32 = arith.constant 0 : i32
    %c0_i32_0 = arith.constant 0 : i32
    %c0_i32_1 = arith.constant 0 : i32
    return %c0_i32, %c0_i32_0 : i32, i32
  }
  func.func @transform_25(%arg0: i32) -> (i32, i32) {
    %c0_i32 = arith.constant 0 : i32
    %c0_i32_0 = arith.constant 0 : i32
    %c0_i32_1 = arith.constant 0 : i32
    return %c0_i32, %c0_i32_0 : i32, i32
  }
  func.func @transform_26(%arg0: i32) -> (i32, i32) {
    %c0_i32 = arith.constant 0 : i32
    %c0_i32_0 = arith.constant 0 : i32
    %c0_i32_1 = arith.constant 0 : i32
    return %c0_i32, %c0_i32_0 : i32, i32
  }
  func.func @transform_27(%arg0: i32) -> (i32, i32) {
    %c0_i32 = arith.constant 0 : i32
    %c0_i32_0 = arith.constant 0 : i32
    %c0_i32_1 = arith.constant 0 : i32
    return %c0_i32, %c0_i32_0 : i32, i32
  }
  func.func @transform_28(%arg0: i32) -> (i32, i32) {
    %c0_i32 = arith.constant 0 : i32
    %c0_i32_0 = arith.constant 0 : i32
    %c0_i32_1 = arith.constant 0 : i32
    return %c0_i32, %c0_i32_0 : i32, i32
  }
  func.func @transform_29(%arg0: i32) -> (i32, i32) {
    %c0_i32 = arith.constant 0 : i32
    %c0_i32_0 = arith.constant 0 : i32
    %c0_i32_1 = arith.constant 0 : i32
    return %c0_i32, %c0_i32_0 : i32, i32
  }
  func.func @transform_30(%arg0: i32) -> (i32, i32) {
    %c0_i32 = arith.constant 0 : i32
    %c0_i32_0 = arith.constant 0 : i32
    %c0_i32_1 = arith.constant 0 : i32
    return %c0_i32, %c0_i32_0 : i32, i32
  }
  func.func @transform_31(%arg0: i32) -> (i32, i32) {
    %c0_i32 = arith.constant 0 : i32
    %c0_i32_0 = arith.constant 0 : i32
    %c0_i32_1 = arith.constant 0 : i32
    return %c0_i32, %c0_i32_0 : i32, i32
  }
  func.func @transform_32(%arg0: i32) -> (i32, i32) {
    %c0_i32 = arith.constant 0 : i32
    %c0_i32_0 = arith.constant 0 : i32
    return %arg0, %c0_i32 : i32, i32
  }
  func.func @transform_33(%arg0: i32) -> (i32, i32) {
    %c0_i32 = arith.constant 0 : i32
    %c0_i32_0 = arith.constant 0 : i32
    return %arg0, %c0_i32 : i32, i32
  }
}

</mosaic_0001>

<llo_original>
// kernel: run.2
$region0: #{run.2}
  #allocation0 [shape = 'u32[]', space=smem, size = 0x4, offset = 0x4, fixed_abs, tag = 'smem constant byte address 0x4 - core index']
  #allocation1 [shape = 'u32[144,128]{1,0:T(1,128)}', space=vmem, size = 0x12000, scoped, tag = 'internal scratch']
  %s0 = inlined_call_operand.smem [shape: u32[34], index: -1, kind: input, shape index: {}]
  %s1 = sld [smem:[%s0]]
  %s2 = scalar_lea.smem %s0, 1
  %s3 = sld [smem:[%s2]]
  %s4 = scalar_lea.smem %s0, 2
  %s5 = sld [smem:[%s4]]
  %s6 = scalar_lea.smem %s0, 3
  %s7 = sld [smem:[%s6]]
  %s8 = scalar_lea.smem %s0, 4
  %s9 = sld [smem:[%s8]]
  %s10 = scalar_lea.smem %s0, 5
  %s11 = sld [smem:[%s10]]
  %s12 = scalar_lea.smem %s0, 6
  %s13 = sld [smem:[%s12]]
  %s14 = scalar_lea.smem %s0, 7
  %s15 = sld [smem:[%s14]]
  %s16 = scalar_lea.smem %s0, 8
  %s17 = sld [smem:[%s16]]
  %s18 = scalar_lea.smem %s0, 9
  %s19 = sld [smem:[%s18]]
  %s20 = scalar_lea.smem %s0, 10
  %s21 = sld [smem:[%s20]]
  %s22 = scalar_lea.smem %s0, 11
  %s23 = sld [smem:[%s22]]
  %s24 = scalar_lea.smem %s0, 12
  %s25 = sld [smem:[%s24]]
  %s26 = scalar_lea.smem %s0, 13
  %s27 = sld [smem:[%s26]]
  %s28 = scalar_lea.smem %s0, 14
  %s29 = sld [smem:[%s28]]
  %s30 = scalar_lea.smem %s0, 15
  %s31 = sld [smem:[%s30]]
  %s32 = scalar_lea.smem %s0, 16
  %s33 = sld [smem:[%s32]]
  %s34 = scalar_lea.smem %s0, 17
  %s35 = sld [smem:[%s34]]
  %s36 = scalar_lea.smem %s0, 18
  %s37 = sld [smem:[%s36]]
  %s38 = scalar_lea.smem %s0, 19
  %s39 = sld [smem:[%s38]]
  %s40 = scalar_lea.smem %s0, 20
  %s41 = sld [smem:[%s40]]
  %s42 = scalar_lea.smem %s0, 21
  %s43 = sld [smem:[%s42]]
  %s44 = scalar_lea.smem %s0, 22
  %s45 = sld [smem:[%s44]]
  %s46 = scalar_lea.smem %s0, 23
  %s47 = sld [smem:[%s46]]
  %s48 = scalar_lea.smem %s0, 24
  %s49 = sld [smem:[%s48]]
  %s50 = scalar_lea.smem %s0, 25
  %s51 = sld [smem:[%s50]]
  %s52 = scalar_lea.smem %s0, 26
  %s53 = sld [smem:[%s52]]
  %s54 = scalar_lea.smem %s0, 27
  %s55 = sld [smem:[%s54]]
  %s56 = scalar_lea.smem %s0, 28
  %s57 = sld [smem:[%s56]]
  %s58 = scalar_lea.smem %s0, 29
  %s59 = sld [smem:[%s58]]
  %s60 = scalar_lea.smem %s0, 30
  %s61 = sld [smem:[%s60]]
  %s62 = scalar_lea.smem %s0, 31
  %s63 = sld [smem:[%s62]]
  %s64 = scalar_lea.smem %s0, 32
  %s65 = sld [smem:[%s64]]
  %s66 = scalar_lea.smem %s0, 33
  %s67 = sld [smem:[%s66]]
  %68 = xla_tuple %s65, %s67
  %s69 = sld [smem:[#allocation0]]
  $region297: #{run.2} parent=0
    _
  %s71 = ssub.s32 1, %s69
  %s72 = scalar_select 0, %s71, %s69
  $region1: #{run.2} parent=0
    #allocation2 [shape = 'u8[8192]{0}', space=vmem, size = 0x2000, scoped, tag = 'input window, operand 0']
    #allocation3 [shape = 's32[2]{0}', space=sflag, size = 0x8, scoped, tag = 'scoped memory for run.2']
    #allocation4 [shape = 's32[2]{0}', space=sflag, size = 0x8, scoped, tag = 'scoped memory for run.2']
    #allocation5 [shape = 'u8[8192]{0}', space=vmem, size = 0x2000, scoped, tag = 'input window, operand 1']
    #allocation6 [shape = 's32[2]{0}', space=sflag, size = 0x8, scoped, tag = 'scoped memory for run.2']
    #allocation7 [shape = 'u8[16384]{0}', space=vmem, size = 0x4000, scoped, tag = 'input window, operand 2']
    #allocation8 [shape = 'u8[16384]{0}', space=vmem, size = 0x4000, scoped, tag = 'input window, operand 3']
    #allocation9 [shape = 's32[2]{0}', space=sflag, size = 0x8, scoped, tag = 'scoped memory for run.2']
    #allocation10 [shape = 'u8[32768]{0}', space=vmem, size = 0x8000, scoped, tag = 'input window, operand 4, single buffered']
    #allocation11 [shape = 'u8[512]{0}', space=vmem, size = 0x400, scoped, tag = 'input window, operand 5, single buffered']
    #allocation12 [shape = 's32[1]{0}', space=sflag, size = 0x4, scoped, tag = 'scoped memory for run.2']
    #allocation13 [shape = 'u8[32768]{0}', space=vmem, size = 0x8000, scoped, tag = 'input window, operand 6, single buffered']
    #allocation14 [shape = 'u8[512]{0}', space=vmem, size = 0x400, scoped, tag = 'input window, operand 7, single buffered']
    #allocation15 [shape = 's32[1]{0}', space=sflag, size = 0x4, scoped, tag = 'scoped memory for run.2']
    #allocation16 [shape = 'u8[32768]{0}', space=vmem, size = 0x8000, scoped, tag = 'input window, operand 8, single buffered']
    #allocation17 [shape = 'u8[512]{0}', space=vmem, size = 0x400, scoped, tag = 'input window, operand 9, single buffered']
    #allocation18 [shape = 's32[1]{0}', space=sflag, size = 0x4, scoped, tag = 'scoped memory for run.2']
    #allocation19 [shape = 'u8[32768]{0}', space=vmem, size = 0x8000, scoped, tag = 'input window, operand 10, single buffered']
    #allocation20 [shape = 'u8[512]{0}', space=vmem, size = 0x400, scoped, tag = 'input window, operand 11, single buffered']
    #allocation21 [shape = 's32[1]{0}', space=sflag, size = 0x4, scoped, tag = 'scoped memory for run.2']
    #allocation22 [shape = 'u8[512]{0}', space=vmem, size = 0x400, scoped, tag = 'input window, operand 12, single buffered']
    #allocation23 [shape = 'u8[512]{0}', space=vmem, size = 0x400, scoped, tag = 'input window, operand 13, single buffered']
    #allocation24 [shape = 's32[1]{0}', space=sflag, size = 0x4, scoped, tag = 'scoped memory for run.2']
    #allocation25 [shape = 'u8[32768]{0}', space=vmem, size = 0x8000, scoped, tag = 'input window, operand 14, single buffered']
    #allocation26 [shape = 'u8[512]{0}', space=vmem, size = 0x400, scoped, tag = 'input window, operand 15, single buffered']
    #allocation27 [shape = 's32[1]{0}', space=sflag, size = 0x4, scoped, tag = 'scoped memory for run.2']
    #allocation28 [shape = 'u8[32768]{0}', space=vmem, size = 0x8000, scoped, tag = 'input window, operand 16, single buffered']
    #allocation29 [shape = 'u8[512]{0}', space=vmem, size = 0x400, scoped, tag = 'input window, operand 17, single buffered']
    #allocation30 [shape = 's32[1]{0}', space=sflag, size = 0x4, scoped, tag = 'scoped memory for run.2']
    #allocation31 [shape = 'u8[32768]{0}', space=vmem, size = 0x8000, scoped, tag = 'input window, operand 18, single buffered']
    #allocation32 [shape = 'u8[512]{0}', space=vmem, size = 0x400, scoped, tag = 'input window, operand 19, single buffered']
    #allocation33 [shape = 's32[1]{0}', space=sflag, size = 0x4, scoped, tag = 'scoped memory for run.2']
    #allocation34 [shape = 'u8[32768]{0}', space=vmem, size = 0x8000, scoped, tag = 'input window, operand 20, single buffered']
    #allocation35 [shape = 'u8[512]{0}', space=vmem, size = 0x400, scoped, tag = 'input window, operand 21, single buffered']
    #allocation36 [shape = 's32[1]{0}', space=sflag, size = 0x4, scoped, tag = 'scoped memory for run.2']
    #allocation37 [shape = 'u8[512]{0}', space=vmem, size = 0x400, scoped, tag = 'input window, operand 22, single buffered']
    #allocation38 [shape = 'u8[512]{0}', space=vmem, size = 0x400, scoped, tag = 'input window, operand 23, single buffered']
    #allocation39 [shape = 's32[1]{0}', space=sflag, size = 0x4, scoped, tag = 'scoped memory for run.2']
    #allocation40 [shape = 'u8[65536]{0}', space=vmem, size = 0x10000, scoped, tag = 'input window, operand 24, single buffered']
    #allocation41 [shape = 'u8[1024]{0}', space=vmem, size = 0x400, scoped, tag = 'input window, operand 25, single buffered']
    #allocation42 [shape = 's32[1]{0}', space=sflag, size = 0x4, scoped, tag = 'scoped memory for run.2']
    #allocation43 [shape = 'u8[65536]{0}', space=vmem, size = 0x10000, scoped, tag = 'input window, operand 26, single buffered']
    #allocation44 [shape = 'u8[512]{0}', space=vmem, size = 0x400, scoped, tag = 'input window, operand 27, single buffered']
    #allocation45 [shape = 's32[1]{0}', space=sflag, size = 0x4, scoped, tag = 'scoped memory for run.2']
    #allocation46 [shape = 'u8[512]{0}', space=vmem, size = 0x400, scoped, tag = 'input window, operand 28, single buffered']
    #allocation47 [shape = 'u8[512]{0}', space=vmem, size = 0x400, scoped, tag = 'input window, operand 29, single buffered']
    #allocation48 [shape = 's32[1]{0}', space=sflag, size = 0x4, scoped, tag = 'scoped memory for run.2']
    #allocation49 [shape = 'u8[512]{0}', space=vmem, size = 0x400, scoped, tag = 'input window, operand 30, single buffered']
    #allocation50 [shape = 'u8[512]{0}', space=vmem, size = 0x400, scoped, tag = 'input window, operand 31, single buffered']
    #allocation51 [shape = 's32[1]{0}', space=sflag, size = 0x4, scoped, tag = 'scoped memory for run.2']
    #allocation52 [shape = 'u8[8192]{0}', space=vmem, size = 0x2000, scoped, tag = 'output window, operand 0']
    #allocation53 [shape = 'u8[16384]{0}', space=vmem, size = 0x4000, scoped, tag = 'output window, operand 1']
    #allocation54 [shape = 's32[2]{0}', space=sflag, size = 0x8, scoped, tag = 'scoped memory for run.2']
    %73 = vsyncpa [#allocation3], 0
    %s74 = scalar_lea.sflag [#allocation3], 1
    %75 = vsyncpa %s74, 0
    %76 = vsyncpa [#allocation6], 0
    %s77 = scalar_lea.sflag [#allocation6], 1
    %78 = vsyncpa %s77, 0
    %79 = vsyncpa [#allocation9], 0
    %s80 = scalar_lea.sflag [#allocation9], 1
    %81 = vsyncpa %s80, 0
    %82 = vsyncpa [#allocation12], 0
    %83 = vsyncpa [#allocation15], 0
    %84 = vsyncpa [#allocation18], 0
    %85 = vsyncpa [#allocation21], 0
    %86 = vsyncpa [#allocation24], 0
    %87 = vsyncpa [#allocation27], 0
    %88 = vsyncpa [#allocation30], 0
    %89 = vsyncpa [#allocation33], 0
    %90 = vsyncpa [#allocation36], 0
    %91 = vsyncpa [#allocation39], 0
    %92 = vsyncpa [#allocation42], 0
    %93 = vsyncpa [#allocation45], 0
    %94 = vsyncpa [#allocation48], 0
    %95 = vsyncpa [#allocation51], 0
    %96 = vsyncpa [#allocation4], 0
    %s97 = scalar_lea.sflag [#allocation4], 1
    %98 = vsyncpa %s97, 0
    %99 = vsyncpa [#allocation54], 0
    %s100 = scalar_lea.sflag [#allocation54], 1
    %101 = vsyncpa %s100, 0
    loop: start=0, step=1, limit=4
    $region2: #{run.2} parent=1 // loop_pre_header
      _
    $region3: #{run.2} parent=1 // loop_header
      %s103 = sphi 0, %s107
      %p104 = scmp.ge.s32.totalorder %s103, 4
      %s113 = sphi 0, %s115
      %s116 = sphi 0, %s113
      %s117 = sphi 0, %s116
      %s133 = sphi 0, %s117
      %s139 = sphi 0, %s141
      %s142 = sphi 0, %s139
      %s143 = sphi 0, %s142
      %s159 = sphi 0, %s143
      %s165 = sphi 0, %s167
      %s168 = sphi 0, %s165
      %s169 = sphi 0, %s168
      %s185 = sphi 0, %s169
      %s191 = sphi 0, %s193
      %s194 = sphi 0, %s191
      %s195 = sphi 0, %s194
      %s211 = sphi 0, %s195
      %s215 = sphi 0, %s215
      %s217 = sphi 0, %s215
      %s218 = sphi 0, %s217
      %s232 = sphi 0, %s218
      %s236 = sphi 0, %s236
      %s238 = sphi 0, %s236
      %s239 = sphi 0, %s238
      %s253 = sphi 0, %s239
      %s257 = sphi 0, %s257
      %s259 = sphi 0, %s257
      %s260 = sphi 0, %s259
      %s274 = sphi 0, %s260
      %s278 = sphi 0, %s278
      %s280 = sphi 0, %s278
      %s281 = sphi 0, %s280
      %s295 = sphi 0, %s281
      %s299 = sphi 0, %s299
      %s301 = sphi 0, %s299
      %s302 = sphi 0, %s301
      %s316 = sphi 0, %s302
      %s320 = sphi 0, %s320
      %s322 = sphi 0, %s320
      %s323 = sphi 0, %s322
      %s337 = sphi 0, %s323
      %s341 = sphi 0, %s341
      %s343 = sphi 0, %s341
      %s344 = sphi 0, %s343
      %s358 = sphi 0, %s344
      %s362 = sphi 0, %s362
      %s364 = sphi 0, %s362
      %s365 = sphi 0, %s364
      %s379 = sphi 0, %s365
      %s383 = sphi 0, %s383
      %s385 = sphi 0, %s383
      %s386 = sphi 0, %s385
      %s400 = sphi 0, %s386
      %s404 = sphi 0, %s404
      %s406 = sphi 0, %s404
      %s407 = sphi 0, %s406
      %s421 = sphi 0, %s407
      %s425 = sphi 0, %s425
      %s427 = sphi 0, %s425
      %s428 = sphi 0, %s427
      %s442 = sphi 0, %s428
      %s446 = sphi 0, %s446
      %s448 = sphi 0, %s446
      %s449 = sphi 0, %s448
      %s463 = sphi 0, %s449
      %s467 = sphi 0, %s467
      %s469 = sphi 0, %s467
      %s470 = sphi 0, %s469
      %s484 = sphi 0, %s470
      %s488 = sphi 0, %s488
      %s490 = sphi 0, %s488
      %s491 = sphi 0, %s490
      %s505 = sphi 0, %s491
      %s509 = sphi 0, %s509
      %s511 = sphi 0, %s509
      %s512 = sphi 0, %s511
      %s526 = sphi 0, %s512
      %s530 = sphi 0, %s530
      %s532 = sphi 0, %s530
      %s533 = sphi 0, %s532
      %s547 = sphi 0, %s533
      %s551 = sphi 0, %s551
      %s553 = sphi 0, %s551
      %s554 = sphi 0, %s553
      %s568 = sphi 0, %s554
      %s572 = sphi 0, %s572
      %s574 = sphi 0, %s572
      %s575 = sphi 0, %s574
      %s589 = sphi 0, %s575
      %s593 = sphi 0, %s593
      %s595 = sphi 0, %s593
      %s596 = sphi 0, %s595
      %s610 = sphi 0, %s596
      %s614 = sphi 0, %s614
      %s616 = sphi 0, %s614
      %s617 = sphi 0, %s616
      %s631 = sphi 0, %s617
      %s635 = sphi 0, %s635
      %s637 = sphi 0, %s635
      %s638 = sphi 0, %s637
      %s652 = sphi 0, %s638
      %s656 = sphi 0, %s656
      %s658 = sphi 0, %s656
      %s659 = sphi 0, %s658
      %s673 = sphi 0, %s659
      %s677 = sphi 0, %s677
      %s679 = sphi 0, %s677
      %s680 = sphi 0, %s679
      %s694 = sphi 0, %s680
      %s698 = sphi 0, %s698
      %s700 = sphi 0, %s698
      %s701 = sphi 0, %s700
      %s715 = sphi 0, %s701
      %s719 = sphi 0, %s719
      %s721 = sphi 0, %s719
      %s722 = sphi 0, %s721
      %s736 = sphi 0, %s722
      %s740 = sphi 0, %s740
      %s742 = sphi 0, %s740
      %s743 = sphi 0, %s742
      %s757 = sphi 0, %s743
      %s761 = sphi 0, %s761
      %s763 = sphi 0, %s761
      %s764 = sphi 0, %s763
      %s778 = sphi 0, %s764
      %s782 = sphi 0, %s782
      %s784 = sphi 0, %s782
      %s785 = sphi 0, %s784
      %s799 = sphi 0, %s785
      %s805 = sphi 0, %s807
      %s808 = sphi 0, %s805
      %s809 = sphi 0, %s808
      %s825 = sphi 0, %s809
      %s831 = sphi 0, %s833
      %s834 = sphi 0, %s831
      %s835 = sphi 0, %s834
      %s851 = sphi 0, %s835
    $region4: #{run.2} parent=1 // loop_header_branch
      %106 = sbr.rel (%p104) target = $region8
    $region5: #{run.2} parent=1 // loop_body
      %s108 = ssub.s32 %s103, 1
      %s109 = ssub.s32 %s103, 2
      %s110 = sadd.s32 %s103, 1
      %s111 = ssub.s32 %s103, %s110
      %p112 = scmp.eq.s32.totalorder %s111, 0
      %s114 = sadd.s32 %s113, 1
      %s115 = scalar_select %p112, %s113, %s114
      %p118 = pneg %p112
      %p119 = scmp.eq.s32.totalorder %s103, 1
      %p120 = por %p118, %p119
      %p121 = scmp.ne.s32.totalorder %s113, %s116
      %p122 = scmp.eq.s32.totalorder %s103, 0
      %p123 = por %p121, %p122
      %p124 = scmp.ne.s32.totalorder %s113, %s116
      %p125 = scmp.eq.s32.totalorder %s108, 1
      %p126 = por %p124, %p125
      %p127 = scmp.ne.s32.totalorder %s116, %s117
      %p128 = scmp.eq.s32.totalorder %s108, 0
      %p129 = por %p127, %p128
      %p130 = scmp.ne.s32.totalorder %s116, %s117
      %p131 = scmp.eq.s32.totalorder %s109, 1
      %p132 = por %p130, %p131
      %p134 = scmp.ne.s32.totalorder %s117, %s133
      %p135 = scmp.eq.s32.totalorder %s109, 0
      %p136 = por %p134, %p135
      %s137 = ssub.s32 %s103, %s110
      %p138 = scmp.eq.s32.totalorder %s137, 0
      %s140 = sadd.s32 %s139, 1
      %s141 = scalar_select %p138, %s139, %s140
      %p144 = pneg %p138
      %p145 = scmp.eq.s32.totalorder %s103, 1
      %p146 = por %p144, %p145
      %p147 = scmp.ne.s32.totalorder %s139, %s142
      %p148 = scmp.eq.s32.totalorder %s103, 0
      %p149 = por %p147, %p148
      %p150 = scmp.ne.s32.totalorder %s139, %s142
      %p151 = scmp.eq.s32.totalorder %s108, 1
      %p152 = por %p150, %p151
      %p153 = scmp.ne.s32.totalorder %s142, %s143
      %p154 = scmp.eq.s32.totalorder %s108, 0
      %p155 = por %p153, %p154
      %p156 = scmp.ne.s32.totalorder %s142, %s143
      %p157 = scmp.eq.s32.totalorder %s109, 1
      %p158 = por %p156, %p157
      %p160 = scmp.ne.s32.totalorder %s143, %s159
      %p161 = scmp.eq.s32.totalorder %s109, 0
      %p162 = por %p160, %p161
      %s163 = ssub.s32 %s103, %s110
      %p164 = scmp.eq.s32.totalorder %s163, 0
      %s166 = sadd.s32 %s165, 1
      %s167 = scalar_select %p164, %s165, %s166
      %p170 = pneg %p164
      %p171 = scmp.eq.s32.totalorder %s103, 1
      %p172 = por %p170, %p171
      %p173 = scmp.ne.s32.totalorder %s165, %s168
      %p174 = scmp.eq.s32.totalorder %s103, 0
      %p175 = por %p173, %p174
      %p176 = scmp.ne.s32.totalorder %s165, %s168
      %p177 = scmp.eq.s32.totalorder %s108, 1
      %p178 = por %p176, %p177
      %p179 = scmp.ne.s32.totalorder %s168, %s169
      %p180 = scmp.eq.s32.totalorder %s108, 0
      %p181 = por %p179, %p180
      %p182 = scmp.ne.s32.totalorder %s168, %s169
      %p183 = scmp.eq.s32.totalorder %s109, 1
      %p184 = por %p182, %p183
      %p186 = scmp.ne.s32.totalorder %s169, %s185
      %p187 = scmp.eq.s32.totalorder %s109, 0
      %p188 = por %p186, %p187
      %s189 = ssub.s32 %s103, %s110
      %p190 = scmp.eq.s32.totalorder %s189, 0
      %s192 = sadd.s32 %s191, 1
      %s193 = scalar_select %p190, %s191, %s192
      %p196 = pneg %p190
      %p197 = scmp.eq.s32.totalorder %s103, 1
      %p198 = por %p196, %p197
      %p199 = scmp.ne.s32.totalorder %s191, %s194
      %p200 = scmp.eq.s32.totalorder %s103, 0
      %p201 = por %p199, %p200
      %p202 = scmp.ne.s32.totalorder %s191, %s194
      %p203 = scmp.eq.s32.totalorder %s108, 1
      %p204 = por %p202, %p203
      %p205 = scmp.ne.s32.totalorder %s194, %s195
      %p206 = scmp.eq.s32.totalorder %s108, 0
      %p207 = por %p205, %p206
      %p208 = scmp.ne.s32.totalorder %s194, %s195
      %p209 = scmp.eq.s32.totalorder %s109, 1
      %p210 = por %p208, %p209
      %p212 = scmp.ne.s32.totalorder %s195, %s211
      %p213 = scmp.eq.s32.totalorder %s109, 0
      %p214 = por %p212, %p213
      %s216 = sadd.s32 %s215, 1
      %p219 = scmp.eq.s32.totalorder %s103, 1
      %p220 = scmp.ne.s32.totalorder %s215, %s217
      %p221 = scmp.eq.s32.totalorder %s103, 0
      %p222 = por %p220, %p221
      %p223 = scmp.ne.s32.totalorder %s215, %s217
      %p224 = scmp.eq.s32.totalorder %s108, 1
      %p225 = por %p223, %p224
      %p226 = scmp.ne.s32.totalorder %s217, %s218
      %p227 = scmp.eq.s32.totalorder %s108, 0
      %p228 = por %p226, %p227
      %p229 = scmp.ne.s32.totalorder %s217, %s218
      %p230 = scmp.eq.s32.totalorder %s109, 1
      %p231 = por %p229, %p230
      %p233 = scmp.ne.s32.totalorder %s218, %s232
      %p234 = scmp.eq.s32.totalorder %s109, 0
      %p235 = por %p233, %p234
      %s237 = sadd.s32 %s236, 1
      %p240 = scmp.eq.s32.totalorder %s103, 1
      %p241 = scmp.ne.s32.totalorder %s236, %s238
      %p242 = scmp.eq.s32.totalorder %s103, 0
      %p243 = por %p241, %p242
      %p244 = scmp.ne.s32.totalorder %s236, %s238
      %p245 = scmp.eq.s32.totalorder %s108, 1
      %p246 = por %p244, %p245
      %p247 = scmp.ne.s32.totalorder %s238, %s239
      %p248 = scmp.eq.s32.totalorder %s108, 0
      %p249 = por %p247, %p248
      %p250 = scmp.ne.s32.totalorder %s238, %s239
      %p251 = scmp.eq.s32.totalorder %s109, 1
      %p252 = por %p250, %p251
      %p254 = scmp.ne.s32.totalorder %s239, %s253
      %p255 = scmp.eq.s32.totalorder %s109, 0
      %p256 = por %p254, %p255
      %s258 = sadd.s32 %s257, 1
      %p261 = scmp.eq.s32.totalorder %s103, 1
      %p262 = scmp.ne.s32.totalorder %s257, %s259
      %p263 = scmp.eq.s32.totalorder %s103, 0
      %p264 = por %p262, %p263
      %p265 = scmp.ne.s32.totalorder %s257, %s259
      %p266 = scmp.eq.s32.totalorder %s108, 1
      %p267 = por %p265, %p266
      %p268 = scmp.ne.s32.totalorder %s259, %s260
      %p269 = scmp.eq.s32.totalorder %s108, 0
      %p270 = por %p268, %p269
      %p271 = scmp.ne.s32.totalorder %s259, %s260
      %p272 = scmp.eq.s32.totalorder %s109, 1
      %p273 = por %p271, %p272
      %p275 = scmp.ne.s32.totalorder %s260, %s274
      %p276 = scmp.eq.s32.totalorder %s109, 0
      %p277 = por %p275, %p276
      %s279 = sadd.s32 %s278, 1
      %p282 = scmp.eq.s32.totalorder %s103, 1
      %p283 = scmp.ne.s32.totalorder %s278, %s280
      %p284 = scmp.eq.s32.totalorder %s103, 0
      %p285 = por %p283, %p284
      %p286 = scmp.ne.s32.totalorder %s278, %s280
      %p287 = scmp.eq.s32.totalorder %s108, 1
      %p288 = por %p286, %p287
      %p289 = scmp.ne.s32.totalorder %s280, %s281
      %p290 = scmp.eq.s32.totalorder %s108, 0
      %p291 = por %p289, %p290
      %p292 = scmp.ne.s32.totalorder %s280, %s281
      %p293 = scmp.eq.s32.totalorder %s109, 1
      %p294 = por %p292, %p293
      %p296 = scmp.ne.s32.totalorder %s281, %s295
      %p297 = scmp.eq.s32.totalorder %s109, 0
      %p298 = por %p296, %p297
      %s300 = sadd.s32 %s299, 1
      %p303 = scmp.eq.s32.totalorder %s103, 1
      %p304 = scmp.ne.s32.totalorder %s299, %s301
      %p305 = scmp.eq.s32.totalorder %s103, 0
      %p306 = por %p304, %p305
      %p307 = scmp.ne.s32.totalorder %s299, %s301
      %p308 = scmp.eq.s32.totalorder %s108, 1
      %p309 = por %p307, %p308
      %p310 = scmp.ne.s32.totalorder %s301, %s302
      %p311 = scmp.eq.s32.totalorder %s108, 0
      %p312 = por %p310, %p311
      %p313 = scmp.ne.s32.totalorder %s301, %s302
      %p314 = scmp.eq.s32.totalorder %s109, 1
      %p315 = por %p313, %p314
      %p317 = scmp.ne.s32.totalorder %s302, %s316
      %p318 = scmp.eq.s32.totalorder %s109, 0
      %p319 = por %p317, %p318
      %s321 = sadd.s32 %s320, 1
      %p324 = scmp.eq.s32.totalorder %s103, 1
      %p325 = scmp.ne.s32.totalorder %s320, %s322
      %p326 = scmp.eq.s32.totalorder %s103, 0
      %p327 = por %p325, %p326
      %p328 = scmp.ne.s32.totalorder %s320, %s322
      %p329 = scmp.eq.s32.totalorder %s108, 1
      %p330 = por %p328, %p329
      %p331 = scmp.ne.s32.totalorder %s322, %s323
      %p332 = scmp.eq.s32.totalorder %s108, 0
      %p333 = por %p331, %p332
      %p334 = scmp.ne.s32.totalorder %s322, %s323
      %p335 = scmp.eq.s32.totalorder %s109, 1
      %p336 = por %p334, %p335
      %p338 = scmp.ne.s32.totalorder %s323, %s337
      %p339 = scmp.eq.s32.totalorder %s109, 0
      %p340 = por %p338, %p339
      %s342 = sadd.s32 %s341, 1
      %p345 = scmp.eq.s32.totalorder %s103, 1
      %p346 = scmp.ne.s32.totalorder %s341, %s343
      %p347 = scmp.eq.s32.totalorder %s103, 0
      %p348 = por %p346, %p347
      %p349 = scmp.ne.s32.totalorder %s341, %s343
      %p350 = scmp.eq.s32.totalorder %s108, 1
      %p351 = por %p349, %p350
      %p352 = scmp.ne.s32.totalorder %s343, %s344
      %p353 = scmp.eq.s32.totalorder %s108, 0
      %p354 = por %p352, %p353
      %p355 = scmp.ne.s32.totalorder %s343, %s344
      %p356 = scmp.eq.s32.totalorder %s109, 1
      %p357 = por %p355, %p356
      %p359 = scmp.ne.s32.totalorder %s344, %s358
      %p360 = scmp.eq.s32.totalorder %s109, 0
      %p361 = por %p359, %p360
      %s363 = sadd.s32 %s362, 1
      %p366 = scmp.eq.s32.totalorder %s103, 1
      %p367 = scmp.ne.s32.totalorder %s362, %s364
      %p368 = scmp.eq.s32.totalorder %s103, 0
      %p369 = por %p367, %p368
      %p370 = scmp.ne.s32.totalorder %s362, %s364
      %p371 = scmp.eq.s32.totalorder %s108, 1
      %p372 = por %p370, %p371
      %p373 = scmp.ne.s32.totalorder %s364, %s365
      %p374 = scmp.eq.s32.totalorder %s108, 0
      %p375 = por %p373, %p374
      %p376 = scmp.ne.s32.totalorder %s364, %s365
      %p377 = scmp.eq.s32.totalorder %s109, 1
      %p378 = por %p376, %p377
      %p380 = scmp.ne.s32.totalorder %s365, %s379
      %p381 = scmp.eq.s32.totalorder %s109, 0
      %p382 = por %p380, %p381
      %s384 = sadd.s32 %s383, 1
      %p387 = scmp.eq.s32.totalorder %s103, 1
      %p388 = scmp.ne.s32.totalorder %s383, %s385
      %p389 = scmp.eq.s32.totalorder %s103, 0
      %p390 = por %p388, %p389
      %p391 = scmp.ne.s32.totalorder %s383, %s385
      %p392 = scmp.eq.s32.totalorder %s108, 1
      %p393 = por %p391, %p392
      %p394 = scmp.ne.s32.totalorder %s385, %s386
      %p395 = scmp.eq.s32.totalorder %s108, 0
      %p396 = por %p394, %p395
      %p397 = scmp.ne.s32.totalorder %s385, %s386
      %p398 = scmp.eq.s32.totalorder %s109, 1
      %p399 = por %p397, %p398
      %p401 = scmp.ne.s32.totalorder %s386, %s400
      %p402 = scmp.eq.s32.totalorder %s109, 0
      %p403 = por %p401, %p402
      %s405 = sadd.s32 %s404, 1
      %p408 = scmp.eq.s32.totalorder %s103, 1
      %p409 = scmp.ne.s32.totalorder %s404, %s406
      %p410 = scmp.eq.s32.totalorder %s103, 0
      %p411 = por %p409, %p410
      %p412 = scmp.ne.s32.totalorder %s404, %s406
      %p413 = scmp.eq.s32.totalorder %s108, 1
      %p414 = por %p412, %p413
      %p415 = scmp.ne.s32.totalorder %s406, %s407
      %p416 = scmp.eq.s32.totalorder %s108, 0
      %p417 = por %p415, %p416
      %p418 = scmp.ne.s32.totalorder %s406, %s407
      %p419 = scmp.eq.s32.totalorder %s109, 1
      %p420 = por %p418, %p419
      %p422 = scmp.ne.s32.totalorder %s407, %s421
      %p423 = scmp.eq.s32.totalorder %s109, 0
      %p424 = por %p422, %p423
      %s426 = sadd.s32 %s425, 1
      %p429 = scmp.eq.s32.totalorder %s103, 1
      %p430 = scmp.ne.s32.totalorder %s425, %s427
      %p431 = scmp.eq.s32.totalorder %s103, 0
      %p432 = por %p430, %p431
      %p433 = scmp.ne.s32.totalorder %s425, %s427
      %p434 = scmp.eq.s32.totalorder %s108, 1
      %p435 = por %p433, %p434
      %p436 = scmp.ne.s32.totalorder %s427, %s428
      %p437 = scmp.eq.s32.totalorder %s108, 0
      %p438 = por %p436, %p437
      %p439 = scmp.ne.s32.totalorder %s427, %s428
      %p440 = scmp.eq.s32.totalorder %s109, 1
      %p441 = por %p439, %p440
      %p443 = scmp.ne.s32.totalorder %s428, %s442
      %p444 = scmp.eq.s32.totalorder %s109, 0
      %p445 = por %p443, %p444
      %s447 = sadd.s32 %s446, 1
      %p450 = scmp.eq.s32.totalorder %s103, 1
      %p451 = scmp.ne.s32.totalorder %s446, %s448
      %p452 = scmp.eq.s32.totalorder %s103, 0
      %p453 = por %p451, %p452
      %p454 = scmp.ne.s32.totalorder %s446, %s448
      %p455 = scmp.eq.s32.totalorder %s108, 1
      %p456 = por %p454, %p455
      %p457 = scmp.ne.s32.totalorder %s448, %s449
      %p458 = scmp.eq.s32.totalorder %s108, 0
      %p459 = por %p457, %p458
      %p460 = scmp.ne.s32.totalorder %s448, %s449
      %p461 = scmp.eq.s32.totalorder %s109, 1
      %p462 = por %p460, %p461
      %p464 = scmp.ne.s32.totalorder %s449, %s463
      %p465 = scmp.eq.s32.totalorder %s109, 0
      %p466 = por %p464, %p465
      %s468 = sadd.s32 %s467, 1
      %p471 = scmp.eq.s32.totalorder %s103, 1
      %p472 = scmp.ne.s32.totalorder %s467, %s469
      %p473 = scmp.eq.s32.totalorder %s103, 0
      %p474 = por %p472, %p473
      %p475 = scmp.ne.s32.totalorder %s467, %s469
      %p476 = scmp.eq.s32.totalorder %s108, 1
      %p477 = por %p475, %p476
      %p478 = scmp.ne.s32.totalorder %s469, %s470
      %p479 = scmp.eq.s32.totalorder %s108, 0
      %p480 = por %p478, %p479
      %p481 = scmp.ne.s32.totalorder %s469, %s470
      %p482 = scmp.eq.s32.totalorder %s109, 1
      %p483 = por %p481, %p482
      %p485 = scmp.ne.s32.totalorder %s470, %s484
      %p486 = scmp.eq.s32.totalorder %s109, 0
      %p487 = por %p485, %p486
      %s489 = sadd.s32 %s488, 1
      %p492 = scmp.eq.s32.totalorder %s103, 1
      %p493 = scmp.ne.s32.totalorder %s488, %s490
      %p494 = scmp.eq.s32.totalorder %s103, 0
      %p495 = por %p493, %p494
      %p496 = scmp.ne.s32.totalorder %s488, %s490
      %p497 = scmp.eq.s32.totalorder %s108, 1
      %p498 = por %p496, %p497
      %p499 = scmp.ne.s32.totalorder %s490, %s491
      %p500 = scmp.eq.s32.totalorder %s108, 0
      %p501 = por %p499, %p500
      %p502 = scmp.ne.s32.totalorder %s490, %s491
      %p503 = scmp.eq.s32.totalorder %s109, 1
      %p504 = por %p502, %p503
      %p506 = scmp.ne.s32.totalorder %s491, %s505
      %p507 = scmp.eq.s32.totalorder %s109, 0
      %p508 = por %p506, %p507
      %s510 = sadd.s32 %s509, 1
      %p513 = scmp.eq.s32.totalorder %s103, 1
      %p514 = scmp.ne.s32.totalorder %s509, %s511
      %p515 = scmp.eq.s32.totalorder %s103, 0
      %p516 = por %p514, %p515
      %p517 = scmp.ne.s32.totalorder %s509, %s511
      %p518 = scmp.eq.s32.totalorder %s108, 1
      %p519 = por %p517, %p518
      %p520 = scmp.ne.s32.totalorder %s511, %s512
      %p521 = scmp.eq.s32.totalorder %s108, 0
      %p522 = por %p520, %p521
      %p523 = scmp.ne.s32.totalorder %s511, %s512
      %p524 = scmp.eq.s32.totalorder %s109, 1
      %p525 = por %p523, %p524
      %p527 = scmp.ne.s32.totalorder %s512, %s526
      %p528 = scmp.eq.s32.totalorder %s109, 0
      %p529 = por %p527, %p528
      %s531 = sadd.s32 %s530, 1
      %p534 = scmp.eq.s32.totalorder %s103, 1
      %p535 = scmp.ne.s32.totalorder %s530, %s532
      %p536 = scmp.eq.s32.totalorder %s103, 0
      %p537 = por %p535, %p536
      %p538 = scmp.ne.s32.totalorder %s530, %s532
      %p539 = scmp.eq.s32.totalorder %s108, 1
      %p540 = por %p538, %p539
      %p541 = scmp.ne.s32.totalorder %s532, %s533
      %p542 = scmp.eq.s32.totalorder %s108, 0
      %p543 = por %p541, %p542
      %p544 = scmp.ne.s32.totalorder %s532, %s533
      %p545 = scmp.eq.s32.totalorder %s109, 1
      %p546 = por %p544, %p545
      %p548 = scmp.ne.s32.totalorder %s533, %s547
      %p549 = scmp.eq.s32.totalorder %s109, 0
      %p550 = por %p548, %p549
      %s552 = sadd.s32 %s551, 1
      %p555 = scmp.eq.s32.totalorder %s103, 1
      %p556 = scmp.ne.s32.totalorder %s551, %s553
      %p557 = scmp.eq.s32.totalorder %s103, 0
      %p558 = por %p556, %p557
      %p559 = scmp.ne.s32.totalorder %s551, %s553
      %p560 = scmp.eq.s32.totalorder %s108, 1
      %p561 = por %p559, %p560
      %p562 = scmp.ne.s32.totalorder %s553, %s554
      %p563 = scmp.eq.s32.totalorder %s108, 0
      %p564 = por %p562, %p563
      %p565 = scmp.ne.s32.totalorder %s553, %s554
      %p566 = scmp.eq.s32.totalorder %s109, 1
      %p567 = por %p565, %p566
      %p569 = scmp.ne.s32.totalorder %s554, %s568
      %p570 = scmp.eq.s32.totalorder %s109, 0
      %p571 = por %p569, %p570
      %s573 = sadd.s32 %s572, 1
      %p576 = scmp.eq.s32.totalorder %s103, 1
      %p577 = scmp.ne.s32.totalorder %s572, %s574
      %p578 = scmp.eq.s32.totalorder %s103, 0
      %p579 = por %p577, %p578
      %p580 = scmp.ne.s32.totalorder %s572, %s574
      %p581 = scmp.eq.s32.totalorder %s108, 1
      %p582 = por %p580, %p581
      %p583 = scmp.ne.s32.totalorder %s574, %s575
      %p584 = scmp.eq.s32.totalorder %s108, 0
      %p585 = por %p583, %p584
      %p586 = scmp.ne.s32.totalorder %s574, %s575
      %p587 = scmp.eq.s32.totalorder %s109, 1
      %p588 = por %p586, %p587
      %p590 = scmp.ne.s32.totalorder %s575, %s589
      %p591 = scmp.eq.s32.totalorder %s109, 0
      %p592 = por %p590, %p591
      %s594 = sadd.s32 %s593, 1
      %p597 = scmp.eq.s32.totalorder %s103, 1
      %p598 = scmp.ne.s32.totalorder %s593, %s595
      %p599 = scmp.eq.s32.totalorder %s103, 0
      %p600 = por %p598, %p599
      %p601 = scmp.ne.s32.totalorder %s593, %s595
      %p602 = scmp.eq.s32.totalorder %s108, 1
      %p603 = por %p601, %p602
      %p604 = scmp.ne.s32.totalorder %s595, %s596
      %p605 = scmp.eq.s32.totalorder %s108, 0
      %p606 = por %p604, %p605
      %p607 = scmp.ne.s32.totalorder %s595, %s596
      %p608 = scmp.eq.s32.totalorder %s109, 1
      %p609 = por %p607, %p608
      %p611 = scmp.ne.s32.totalorder %s596, %s610
      %p612 = scmp.eq.s32.totalorder %s109, 0
      %p613 = por %p611, %p612
      %s615 = sadd.s32 %s614, 1
      %p618 = scmp.eq.s32.totalorder %s103, 1
      %p619 = scmp.ne.s32.totalorder %s614, %s616
      %p620 = scmp.eq.s32.totalorder %s103, 0
      %p621 = por %p619, %p620
      %p622 = scmp.ne.s32.totalorder %s614, %s616
      %p623 = scmp.eq.s32.totalorder %s108, 1
      %p624 = por %p622, %p623
      %p625 = scmp.ne.s32.totalorder %s616, %s617
      %p626 = scmp.eq.s32.totalorder %s108, 0
      %p627 = por %p625, %p626
      %p628 = scmp.ne.s32.totalorder %s616, %s617
      %p629 = scmp.eq.s32.totalorder %s109, 1
      %p630 = por %p628, %p629
      %p632 = scmp.ne.s32.totalorder %s617, %s631
      %p633 = scmp.eq.s32.totalorder %s109, 0
      %p634 = por %p632, %p633
      %s636 = sadd.s32 %s635, 1
      %p639 = scmp.eq.s32.totalorder %s103, 1
      %p640 = scmp.ne.s32.totalorder %s635, %s637
      %p641 = scmp.eq.s32.totalorder %s103, 0
      %p642 = por %p640, %p641
      %p643 = scmp.ne.s32.totalorder %s635, %s637
      %p644 = scmp.eq.s32.totalorder %s108, 1
      %p645 = por %p643, %p644
      %p646 = scmp.ne.s32.totalorder %s637, %s638
      %p647 = scmp.eq.s32.totalorder %s108, 0
      %p648 = por %p646, %p647
      %p649 = scmp.ne.s32.totalorder %s637, %s638
      %p650 = scmp.eq.s32.totalorder %s109, 1
      %p651 = por %p649, %p650
      %p653 = scmp.ne.s32.totalorder %s638, %s652
      %p654 = scmp.eq.s32.totalorder %s109, 0
      %p655 = por %p653, %p654
      %s657 = sadd.s32 %s656, 1
      %p660 = scmp.eq.s32.totalorder %s103, 1
      %p661 = scmp.ne.s32.totalorder %s656, %s658
      %p662 = scmp.eq.s32.totalorder %s103, 0
      %p663 = por %p661, %p662
      %p664 = scmp.ne.s32.totalorder %s656, %s658
      %p665 = scmp.eq.s32.totalorder %s108, 1
      %p666 = por %p664, %p665
      %p667 = scmp.ne.s32.totalorder %s658, %s659
      %p668 = scmp.eq.s32.totalorder %s108, 0
      %p669 = por %p667, %p668
      %p670 = scmp.ne.s32.totalorder %s658, %s659
      %p671 = scmp.eq.s32.totalorder %s109, 1
      %p672 = por %p670, %p671
      %p674 = scmp.ne.s32.totalorder %s659, %s673
      %p675 = scmp.eq.s32.totalorder %s109, 0
      %p676 = por %p674, %p675
      %s678 = sadd.s32 %s677, 1
      %p681 = scmp.eq.s32.totalorder %s103, 1
      %p682 = scmp.ne.s32.totalorder %s677, %s679
      %p683 = scmp.eq.s32.totalorder %s103, 0
      %p684 = por %p682, %p683
      %p685 = scmp.ne.s32.totalorder %s677, %s679
      %p686 = scmp.eq.s32.totalorder %s108, 1
      %p687 = por %p685, %p686
      %p688 = scmp.ne.s32.totalorder %s679, %s680
      %p689 = scmp.eq.s32.totalorder %s108, 0
      %p690 = por %p688, %p689
      %p691 = scmp.ne.s32.totalorder %s679, %s680
      %p692 = scmp.eq.s32.totalorder %s109, 1
      %p693 = por %p691, %p692
      %p695 = scmp.ne.s32.totalorder %s680, %s694
      %p696 = scmp.eq.s32.totalorder %s109, 0
      %p697 = por %p695, %p696
      %s699 = sadd.s32 %s698, 1
      %p702 = scmp.eq.s32.totalorder %s103, 1
      %p703 = scmp.ne.s32.totalorder %s698, %s700
      %p704 = scmp.eq.s32.totalorder %s103, 0
      %p705 = por %p703, %p704
      %p706 = scmp.ne.s32.totalorder %s698, %s700
      %p707 = scmp.eq.s32.totalorder %s108, 1
      %p708 = por %p706, %p707
      %p709 = scmp.ne.s32.totalorder %s700, %s701
      %p710 = scmp.eq.s32.totalorder %s108, 0
      %p711 = por %p709, %p710
      %p712 = scmp.ne.s32.totalorder %s700, %s701
      %p713 = scmp.eq.s32.totalorder %s109, 1
      %p714 = por %p712, %p713
      %p716 = scmp.ne.s32.totalorder %s701, %s715
      %p717 = scmp.eq.s32.totalorder %s109, 0
      %p718 = por %p716, %p717
      %s720 = sadd.s32 %s719, 1
      %p723 = scmp.eq.s32.totalorder %s103, 1
      %p724 = scmp.ne.s32.totalorder %s719, %s721
      %p725 = scmp.eq.s32.totalorder %s103, 0
      %p726 = por %p724, %p725
      %p727 = scmp.ne.s32.totalorder %s719, %s721
      %p728 = scmp.eq.s32.totalorder %s108, 1
      %p729 = por %p727, %p728
      %p730 = scmp.ne.s32.totalorder %s721, %s722
      %p731 = scmp.eq.s32.totalorder %s108, 0
      %p732 = por %p730, %p731
      %p733 = scmp.ne.s32.totalorder %s721, %s722
      %p734 = scmp.eq.s32.totalorder %s109, 1
      %p735 = por %p733, %p734
      %p737 = scmp.ne.s32.totalorder %s722, %s736
      %p738 = scmp.eq.s32.totalorder %s109, 0
      %p739 = por %p737, %p738
      %s741 = sadd.s32 %s740, 1
      %p744 = scmp.eq.s32.totalorder %s103, 1
      %p745 = scmp.ne.s32.totalorder %s740, %s742
      %p746 = scmp.eq.s32.totalorder %s103, 0
      %p747 = por %p745, %p746
      %p748 = scmp.ne.s32.totalorder %s740, %s742
      %p749 = scmp.eq.s32.totalorder %s108, 1
      %p750 = por %p748, %p749
      %p751 = scmp.ne.s32.totalorder %s742, %s743
      %p752 = scmp.eq.s32.totalorder %s108, 0
      %p753 = por %p751, %p752
      %p754 = scmp.ne.s32.totalorder %s742, %s743
      %p755 = scmp.eq.s32.totalorder %s109, 1
      %p756 = por %p754, %p755
      %p758 = scmp.ne.s32.totalorder %s743, %s757
      %p759 = scmp.eq.s32.totalorder %s109, 0
      %p760 = por %p758, %p759
      %s762 = sadd.s32 %s761, 1
      %p765 = scmp.eq.s32.totalorder %s103, 1
      %p766 = scmp.ne.s32.totalorder %s761, %s763
      %p767 = scmp.eq.s32.totalorder %s103, 0
      %p768 = por %p766, %p767
      %p769 = scmp.ne.s32.totalorder %s761, %s763
      %p770 = scmp.eq.s32.totalorder %s108, 1
      %p771 = por %p769, %p770
      %p772 = scmp.ne.s32.totalorder %s763, %s764
      %p773 = scmp.eq.s32.totalorder %s108, 0
      %p774 = por %p772, %p773
      %p775 = scmp.ne.s32.totalorder %s763, %s764
      %p776 = scmp.eq.s32.totalorder %s109, 1
      %p777 = por %p775, %p776
      %p779 = scmp.ne.s32.totalorder %s764, %s778
      %p780 = scmp.eq.s32.totalorder %s109, 0
      %p781 = por %p779, %p780
      %s783 = sadd.s32 %s782, 1
      %p786 = scmp.eq.s32.totalorder %s103, 1
      %p787 = scmp.ne.s32.totalorder %s782, %s784
      %p788 = scmp.eq.s32.totalorder %s103, 0
      %p789 = por %p787, %p788
      %p790 = scmp.ne.s32.totalorder %s782, %s784
      %p791 = scmp.eq.s32.totalorder %s108, 1
      %p792 = por %p790, %p791
      %p793 = scmp.ne.s32.totalorder %s784, %s785
      %p794 = scmp.eq.s32.totalorder %s108, 0
      %p795 = por %p793, %p794
      %p796 = scmp.ne.s32.totalorder %s784, %s785
      %p797 = scmp.eq.s32.totalorder %s109, 1
      %p798 = por %p796, %p797
      %p800 = scmp.ne.s32.totalorder %s785, %s799
      %p801 = scmp.eq.s32.totalorder %s109, 0
      %p802 = por %p800, %p801
      %s803 = ssub.s32 %s103, %s110
      %p804 = scmp.eq.s32.totalorder %s803, 0
      %s806 = sadd.s32 %s805, 1
      %s807 = scalar_select %p804, %s805, %s806
      %p810 = pneg %p804
      %p811 = scmp.eq.s32.totalorder %s103, 1
      %p812 = por %p810, %p811
      %p813 = scmp.ne.s32.totalorder %s805, %s808
      %p814 = scmp.eq.s32.totalorder %s103, 0
      %p815 = por %p813, %p814
      %p816 = scmp.ne.s32.totalorder %s805, %s808
      %p817 = scmp.eq.s32.totalorder %s108, 1
      %p818 = por %p816, %p817
      %p819 = scmp.ne.s32.totalorder %s808, %s809
      %p820 = scmp.eq.s32.totalorder %s108, 0
      %p821 = por %p819, %p820
      %p822 = scmp.ne.s32.totalorder %s808, %s809
      %p823 = scmp.eq.s32.totalorder %s109, 1
      %p824 = por %p822, %p823
      %p826 = scmp.ne.s32.totalorder %s809, %s825
      %p827 = scmp.eq.s32.totalorder %s109, 0
      %p828 = por %p826, %p827
      %s829 = ssub.s32 %s103, %s110
      %p830 = scmp.eq.s32.totalorder %s829, 0
      %s832 = sadd.s32 %s831, 1
      %s833 = scalar_select %p830, %s831, %s832
      %p836 = pneg %p830
      %p837 = scmp.eq.s32.totalorder %s103, 1
      %p838 = por %p836, %p837
      %p839 = scmp.ne.s32.totalorder %s831, %s834
      %p840 = scmp.eq.s32.totalorder %s103, 0
      %p841 = por %p839, %p840
      %p842 = scmp.ne.s32.totalorder %s831, %s834
      %p843 = scmp.eq.s32.totalorder %s108, 1
      %p844 = por %p842, %p843
      %p845 = scmp.ne.s32.totalorder %s834, %s835
      %p846 = scmp.eq.s32.totalorder %s108, 0
      %p847 = por %p845, %p846
      %p848 = scmp.ne.s32.totalorder %s834, %s835
      %p849 = scmp.eq.s32.totalorder %s109, 1
      %p850 = por %p848, %p849
      %p852 = scmp.ne.s32.totalorder %s835, %s851
      %p853 = scmp.eq.s32.totalorder %s109, 0
      %p854 = por %p852, %p853
      %p855 = scmp.le.s32.totalorder 1, %s103
      %p856 = scmp.lt.s32.totalorder %s103, 3
      %p857 = pnand %p855, %p856
      %p858 = pneg %p857
      // Predicated region
      $region9: #{run.2} parent=5 // pred_check
        _
      $region10: #{run.2} parent=5 // pred_check_branch
        %860 = sbr.rel (%p857) target = $region12
      $region11: #{run.2} parent=5 // pred_region
        %s861 = ssub.s32 %s103, 1
        // Predicated region
        $region13: #{run.2} parent=11 // pred_check
          %p862 = pneg %p228
        $region14: #{run.2} parent=11 // pred_check_branch
          %864 = sbr.rel (%p862) target = $region16
        $region15: #{run.2} parent=11 // pred_region
          %s866 = ssub.s32 1024, 1024
          %867 = vsyncadd [#allocation9], %s866
          %s868 = sshll.u32 [#allocation10], 4
          %s869 = int_to_ptr.vmem [resolvable:$true] %s868
          %874 = dma.hbm_to_vmem [thread:$0]  %s9, 1024, %s869, [#allocation9], 64, 64, 4
        $region16: #{run.2} parent=11 // pred_fallthru
          _
        // Predicated region
        $region17: #{run.2} parent=11 // pred_check
          %p875 = pneg %p249
        $region18: #{run.2} parent=11 // pred_check_branch
          %877 = sbr.rel (%p875) target = $region20
        $region19: #{run.2} parent=11 // pred_region
          %s879 = ssub.s32 16, 16
          %880 = vsyncadd [#allocation12], %s879
          %s882 = sshll.u32 [#allocation11], 4
          %s883 = int_to_ptr.vmem [resolvable:$true] %s882
          %885 = dma.hbm_to_vmem [thread:$0]  %s11, 16, %s883, [#allocation12]
        $region20: #{run.2} parent=11 // pred_fallthru
          _
        // Predicated region
        $region21: #{run.2} parent=11 // pred_check
          %p886 = pneg %p270
        $region22: #{run.2} parent=11 // pred_check_branch
          %888 = sbr.rel (%p886) target = $region24
        $region23: #{run.2} parent=11 // pred_region
          %s890 = ssub.s32 1024, 1024
          %891 = vsyncadd [#allocation12], %s890
          %s892 = sshll.u32 [#allocation13], 4
          %s893 = int_to_ptr.vmem [resolvable:$true] %s892
          %898 = dma.hbm_to_vmem [thread:$0]  %s13, 1024, %s893, [#allocation12], 64, 64, 4
        $region24: #{run.2} parent=11 // pred_fallthru
          _
        // Predicated region
        $region25: #{run.2} parent=11 // pred_check
          %p899 = pneg %p291
        $region26: #{run.2} parent=11 // pred_check_branch
          %901 = sbr.rel (%p899) target = $region28
        $region27: #{run.2} parent=11 // pred_region
          %s903 = ssub.s32 16, 16
          %904 = vsyncadd [#allocation15], %s903
          %s906 = sshll.u32 [#allocation14], 4
          %s907 = int_to_ptr.vmem [resolvable:$true] %s906
          %909 = dma.hbm_to_vmem [thread:$0]  %s15, 16, %s907, [#allocation15]
        $region28: #{run.2} parent=11 // pred_fallthru
          _
        // Predicated region
        $region29: #{run.2} parent=11 // pred_check
          %p910 = pneg %p312
        $region30: #{run.2} parent=11 // pred_check_branch
          %912 = sbr.rel (%p910) target = $region32
        $region31: #{run.2} parent=11 // pred_region
          %s914 = ssub.s32 1024, 1024
          %915 = vsyncadd [#allocation15], %s914
          %s916 = sshll.u32 [#allocation16], 4
          %s917 = int_to_ptr.vmem [resolvable:$true] %s916
          %922 = dma.hbm_to_vmem [thread:$0]  %s17, 1024, %s917, [#allocation15], 64, 64, 4
        $region32: #{run.2} parent=11 // pred_fallthru
          _
        // Predicated region
        $region33: #{run.2} parent=11 // pred_check
          %p923 = pneg %p333
        $region34: #{run.2} parent=11 // pred_check_branch
          %925 = sbr.rel (%p923) target = $region36
        $region35: #{run.2} parent=11 // pred_region
          %s927 = ssub.s32 16, 16
          %928 = vsyncadd [#allocation18], %s927
          %s930 = sshll.u32 [#allocation17], 4
          %s931 = int_to_ptr.vmem [resolvable:$true] %s930
          %933 = dma.hbm_to_vmem [thread:$0]  %s19, 16, %s931, [#allocation18]
        $region36: #{run.2} parent=11 // pred_fallthru
          _
        // Predicated region
        $region37: #{run.2} parent=11 // pred_check
          %p934 = pneg %p354
        $region38: #{run.2} parent=11 // pred_check_branch
          %936 = sbr.rel (%p934) target = $region40
        $region39: #{run.2} parent=11 // pred_region
          %s938 = ssub.s32 1024, 1024
          %939 = vsyncadd [#allocation18], %s938
          %s940 = sshll.u32 [#allocation19], 4
          %s941 = int_to_ptr.vmem [resolvable:$true] %s940
          %946 = dma.hbm_to_vmem [thread:$0]  %s21, 1024, %s941, [#allocation18], 64, 64, 4
        $region40: #{run.2} parent=11 // pred_fallthru
          _
        // Predicated region
        $region41: #{run.2} parent=11 // pred_check
          %p947 = pneg %p375
        $region42: #{run.2} parent=11 // pred_check_branch
          %949 = sbr.rel (%p947) target = $region44
        $region43: #{run.2} parent=11 // pred_region
          %s951 = ssub.s32 16, 16
          %952 = vsyncadd [#allocation21], %s951
          %s954 = sshll.u32 [#allocation20], 4
          %s955 = int_to_ptr.vmem [resolvable:$true] %s954
          %957 = dma.hbm_to_vmem [thread:$0]  %s23, 16, %s955, [#allocation21]
        $region44: #{run.2} parent=11 // pred_fallthru
          _
        // Predicated region
        $region45: #{run.2} parent=11 // pred_check
          %p958 = pneg %p396
        $region46: #{run.2} parent=11 // pred_check_branch
          %960 = sbr.rel (%p958) target = $region48
        $region47: #{run.2} parent=11 // pred_region
          %s962 = ssub.s32 16, 16
          %963 = vsyncadd [#allocation21], %s962
          %s965 = sshll.u32 [#allocation22], 4
          %s966 = int_to_ptr.vmem [resolvable:$true] %s965
          %968 = dma.hbm_to_vmem [thread:$0]  %s25, 16, %s966, [#allocation21]
        $region48: #{run.2} parent=11 // pred_fallthru
          _
        // Predicated region
        $region49: #{run.2} parent=11 // pred_check
          %p969 = pneg %p417
        $region50: #{run.2} parent=11 // pred_check_branch
          %971 = sbr.rel (%p969) target = $region52
        $region51: #{run.2} parent=11 // pred_region
          %s973 = ssub.s32 16, 16
          %974 = vsyncadd [#allocation24], %s973
          %s976 = sshll.u32 [#allocation23], 4
          %s977 = int_to_ptr.vmem [resolvable:$true] %s976
          %979 = dma.hbm_to_vmem [thread:$0]  %s27, 16, %s977, [#allocation24]
        $region52: #{run.2} parent=11 // pred_fallthru
          _
        // Predicated region
        $region53: #{run.2} parent=11 // pred_check
          %p980 = pneg %p438
        $region54: #{run.2} parent=11 // pred_check_branch
          %982 = sbr.rel (%p980) target = $region56
        $region55: #{run.2} parent=11 // pred_region
          %s984 = ssub.s32 1024, 1024
          %985 = vsyncadd [#allocation24], %s984
          %s986 = sshll.u32 [#allocation25], 4
          %s987 = int_to_ptr.vmem [resolvable:$true] %s986
          %992 = dma.hbm_to_vmem [thread:$0]  %s29, 1024, %s987, [#allocation24], 64, 64, 4
        $region56: #{run.2} parent=11 // pred_fallthru
          _
        // Predicated region
        $region57: #{run.2} parent=11 // pred_check
          %p993 = pneg %p459
        $region58: #{run.2} parent=11 // pred_check_branch
          %995 = sbr.rel (%p993) target = $region60
        $region59: #{run.2} parent=11 // pred_region
          %s997 = ssub.s32 16, 16
          %998 = vsyncadd [#allocation27], %s997
          %s1000 = sshll.u32 [#allocation26], 4
          %s1001 = int_to_ptr.vmem [resolvable:$true] %s1000
          %1003 = dma.hbm_to_vmem [thread:$0]  %s31, 16, %s1001, [#allocation27]
        $region60: #{run.2} parent=11 // pred_fallthru
          _
        // Predicated region
        $region61: #{run.2} parent=11 // pred_check
          %p1004 = pneg %p480
        $region62: #{run.2} parent=11 // pred_check_branch
          %1006 = sbr.rel (%p1004) target = $region64
        $region63: #{run.2} parent=11 // pred_region
          %s1008 = ssub.s32 1024, 1024
          %1009 = vsyncadd [#allocation27], %s1008
          %s1010 = sshll.u32 [#allocation28], 4
          %s1011 = int_to_ptr.vmem [resolvable:$true] %s1010
          %1016 = dma.hbm_to_vmem [thread:$0]  %s33, 1024, %s1011, [#allocation27], 64, 64, 4
        $region64: #{run.2} parent=11 // pred_fallthru
          _
        // Predicated region
        $region65: #{run.2} parent=11 // pred_check
          %p1017 = pneg %p501
        $region66: #{run.2} parent=11 // pred_check_branch
          %1019 = sbr.rel (%p1017) target = $region68
        $region67: #{run.2} parent=11 // pred_region
          %s1021 = ssub.s32 16, 16
          %1022 = vsyncadd [#allocation30], %s1021
          %s1024 = sshll.u32 [#allocation29], 4
          %s1025 = int_to_ptr.vmem [resolvable:$true] %s1024
          %1027 = dma.hbm_to_vmem [thread:$0]  %s35, 16, %s1025, [#allocation30]
        $region68: #{run.2} parent=11 // pred_fallthru
          _
        // Predicated region
        $region69: #{run.2} parent=11 // pred_check
          %p1028 = pneg %p522
        $region70: #{run.2} parent=11 // pred_check_branch
          %1030 = sbr.rel (%p1028) target = $region72
        $region71: #{run.2} parent=11 // pred_region
          %s1032 = ssub.s32 1024, 1024
          %1033 = vsyncadd [#allocation30], %s1032
          %s1034 = sshll.u32 [#allocation31], 4
          %s1035 = int_to_ptr.vmem [resolvable:$true] %s1034
          %1040 = dma.hbm_to_vmem [thread:$0]  %s37, 1024, %s1035, [#allocation30], 64, 64, 4
        $region72: #{run.2} parent=11 // pred_fallthru
          _
        // Predicated region
        $region73: #{run.2} parent=11 // pred_check
          %p1041 = pneg %p543
        $region74: #{run.2} parent=11 // pred_check_branch
          %1043 = sbr.rel (%p1041) target = $region76
        $region75: #{run.2} parent=11 // pred_region
          %s1045 = ssub.s32 16, 16
          %1046 = vsyncadd [#allocation33], %s1045
          %s1048 = sshll.u32 [#allocation32], 4
          %s1049 = int_to_ptr.vmem [resolvable:$true] %s1048
          %1051 = dma.hbm_to_vmem [thread:$0]  %s39, 16, %s1049, [#allocation33]
        $region76: #{run.2} parent=11 // pred_fallthru
          _
        // Predicated region
        $region77: #{run.2} parent=11 // pred_check
          %p1052 = pneg %p564
        $region78: #{run.2} parent=11 // pred_check_branch
          %1054 = sbr.rel (%p1052) target = $region80
        $region79: #{run.2} parent=11 // pred_region
          %s1056 = ssub.s32 1024, 1024
          %1057 = vsyncadd [#allocation33], %s1056
          %s1058 = sshll.u32 [#allocation34], 4
          %s1059 = int_to_ptr.vmem [resolvable:$true] %s1058
          %1064 = dma.hbm_to_vmem [thread:$0]  %s41, 1024, %s1059, [#allocation33], 64, 64, 4
        $region80: #{run.2} parent=11 // pred_fallthru
          _
        // Predicated region
        $region81: #{run.2} parent=11 // pred_check
          %p1065 = pneg %p585
        $region82: #{run.2} parent=11 // pred_check_branch
          %1067 = sbr.rel (%p1065) target = $region84
        $region83: #{run.2} parent=11 // pred_region
          %s1069 = ssub.s32 16, 16
          %1070 = vsyncadd [#allocation36], %s1069
          %s1072 = sshll.u32 [#allocation35], 4
          %s1073 = int_to_ptr.vmem [resolvable:$true] %s1072
          %1075 = dma.hbm_to_vmem [thread:$0]  %s43, 16, %s1073, [#allocation36]
        $region84: #{run.2} parent=11 // pred_fallthru
          _
        // Predicated region
        $region85: #{run.2} parent=11 // pred_check
          %p1076 = pneg %p606
        $region86: #{run.2} parent=11 // pred_check_branch
          %1078 = sbr.rel (%p1076) target = $region88
        $region87: #{run.2} parent=11 // pred_region
          %s1080 = ssub.s32 16, 16
          %1081 = vsyncadd [#allocation36], %s1080
          %s1083 = sshll.u32 [#allocation37], 4
          %s1084 = int_to_ptr.vmem [resolvable:$true] %s1083
          %1086 = dma.hbm_to_vmem [thread:$0]  %s45, 16, %s1084, [#allocation36]
        $region88: #{run.2} parent=11 // pred_fallthru
          _
        // Predicated region
        $region89: #{run.2} parent=11 // pred_check
          %p1087 = pneg %p627
        $region90: #{run.2} parent=11 // pred_check_branch
          %1089 = sbr.rel (%p1087) target = $region92
        $region91: #{run.2} parent=11 // pred_region
          %s1091 = ssub.s32 16, 16
          %1092 = vsyncadd [#allocation39], %s1091
          %s1094 = sshll.u32 [#allocation38], 4
          %s1095 = int_to_ptr.vmem [resolvable:$true] %s1094
          %1097 = dma.hbm_to_vmem [thread:$0]  %s47, 16, %s1095, [#allocation39]
        $region92: #{run.2} parent=11 // pred_fallthru
          _
        // Predicated region
        $region93: #{run.2} parent=11 // pred_check
          %p1098 = pneg %p648
        $region94: #{run.2} parent=11 // pred_check_branch
          %1100 = sbr.rel (%p1098) target = $region96
        $region95: #{run.2} parent=11 // pred_region
          %s1102 = ssub.s32 2048, 2048
          %1103 = vsyncadd [#allocation39], %s1102
          %s1104 = sshll.u32 [#allocation40], 4
          %s1105 = int_to_ptr.vmem [resolvable:$true] %s1104
          %1110 = dma.hbm_to_vmem [thread:$0]  %s49, 2048, %s1105, [#allocation39], 128, 128, 8
        $region96: #{run.2} parent=11 // pred_fallthru
          _
        // Predicated region
        $region97: #{run.2} parent=11 // pred_check
          %p1111 = pneg %p669
        $region98: #{run.2} parent=11 // pred_check_branch
          %1113 = sbr.rel (%p1111) target = $region100
        $region99: #{run.2} parent=11 // pred_region
          %s1115 = ssub.s32 32, 32
          %1116 = vsyncadd [#allocation42], %s1115
          %s1118 = sshll.u32 [#allocation41], 4
          %s1119 = int_to_ptr.vmem [resolvable:$true] %s1118
          %1121 = dma.hbm_to_vmem [thread:$0]  %s51, 32, %s1119, [#allocation42]
        $region100: #{run.2} parent=11 // pred_fallthru
          _
        // Predicated region
        $region101: #{run.2} parent=11 // pred_check
          %p1122 = pneg %p690
        $region102: #{run.2} parent=11 // pred_check_branch
          %1124 = sbr.rel (%p1122) target = $region104
        $region103: #{run.2} parent=11 // pred_region
          %s1126 = ssub.s32 2048, 2048
          %1127 = vsyncadd [#allocation42], %s1126
          %s1128 = sshll.u32 [#allocation43], 4
          %s1129 = int_to_ptr.vmem [resolvable:$true] %s1128
          %1134 = dma.hbm_to_vmem [thread:$0]  %s53, 2048, %s1129, [#allocation42], 64, 64, 4
        $region104: #{run.2} parent=11 // pred_fallthru
          _
        // Predicated region
        $region105: #{run.2} parent=11 // pred_check
          %p1135 = pneg %p711
        $region106: #{run.2} parent=11 // pred_check_branch
          %1137 = sbr.rel (%p1135) target = $region108
        $region107: #{run.2} parent=11 // pred_region
          %s1139 = ssub.s32 16, 16
          %1140 = vsyncadd [#allocation45], %s1139
          %s1142 = sshll.u32 [#allocation44], 4
          %s1143 = int_to_ptr.vmem [resolvable:$true] %s1142
          %1145 = dma.hbm_to_vmem [thread:$0]  %s55, 16, %s1143, [#allocation45]
        $region108: #{run.2} parent=11 // pred_fallthru
          _
        // Predicated region
        $region109: #{run.2} parent=11 // pred_check
          %p1146 = pneg %p732
        $region110: #{run.2} parent=11 // pred_check_branch
          %1148 = sbr.rel (%p1146) target = $region112
        $region111: #{run.2} parent=11 // pred_region
          %s1150 = ssub.s32 16, 16
          %1151 = vsyncadd [#allocation45], %s1150
          %s1153 = sshll.u32 [#allocation46], 4
          %s1154 = int_to_ptr.vmem [resolvable:$true] %s1153
          %1156 = dma.hbm_to_vmem [thread:$0]  %s57, 16, %s1154, [#allocation45]
        $region112: #{run.2} parent=11 // pred_fallthru
          _
        // Predicated region
        $region113: #{run.2} parent=11 // pred_check
          %p1157 = pneg %p753
        $region114: #{run.2} parent=11 // pred_check_branch
          %1159 = sbr.rel (%p1157) target = $region116
        $region115: #{run.2} parent=11 // pred_region
          %s1161 = ssub.s32 16, 16
          %1162 = vsyncadd [#allocation48], %s1161
          %s1164 = sshll.u32 [#allocation47], 4
          %s1165 = int_to_ptr.vmem [resolvable:$true] %s1164
          %1167 = dma.hbm_to_vmem [thread:$0]  %s59, 16, %s1165, [#allocation48]
        $region116: #{run.2} parent=11 // pred_fallthru
          _
        // Predicated region
        $region117: #{run.2} parent=11 // pred_check
          %p1168 = pneg %p774
        $region118: #{run.2} parent=11 // pred_check_branch
          %1170 = sbr.rel (%p1168) target = $region120
        $region119: #{run.2} parent=11 // pred_region
          %s1172 = ssub.s32 16, 16
          %1173 = vsyncadd [#allocation48], %s1172
          %s1175 = sshll.u32 [#allocation49], 4
          %s1176 = int_to_ptr.vmem [resolvable:$true] %s1175
          %1178 = dma.hbm_to_vmem [thread:$0]  %s61, 16, %s1176, [#allocation48]
        $region120: #{run.2} parent=11 // pred_fallthru
          _
        // Predicated region
        $region121: #{run.2} parent=11 // pred_check
          %p1179 = pneg %p795
        $region122: #{run.2} parent=11 // pred_check_branch
          %1181 = sbr.rel (%p1179) target = $region124
        $region123: #{run.2} parent=11 // pred_region
          %s1183 = ssub.s32 16, 16
          %1184 = vsyncadd [#allocation51], %s1183
          %s1186 = sshll.u32 [#allocation50], 4
          %s1187 = int_to_ptr.vmem [resolvable:$true] %s1186
          %1189 = dma.hbm_to_vmem [thread:$0]  %s63, 16, %s1187, [#allocation51]
        $region124: #{run.2} parent=11 // pred_fallthru
          _
      $region12: #{run.2} parent=5 // pred_fallthru
        _
      %p1190 = scmp.lt.s32.totalorder %s103, 2
      // Predicated region
      $region125: #{run.2} parent=5 // pred_check
        %p1191 = pneg %p1190
      $region126: #{run.2} parent=5 // pred_check_branch
        %1193 = sbr.rel (%p1191) target = $region128
      $region127: #{run.2} parent=5 // pred_region
        // Predicated region
        $region129: #{run.2} parent=127 // pred_check
          %p1194 = pneg %p123
        $region130: #{run.2} parent=127 // pred_check_branch
          %1196 = sbr.rel (%p1194) target = $region132
        $region131: #{run.2} parent=127 // pred_region
          %s1197 = sand.u32 %s113, 1
          %s1198 = scalar_lea.sflag [#allocation3], %s1197
          %s1199 = sand.u32 %s113, 1
          %s1200 = smul.addr %s1199, 8
          %s1201 = scalar_lea.vmem [#allocation2], %s1200
          %s1202 = smul.u32 2, %s103
          %s1204 = ssub.s32 128, 128
          %1205 = vsyncadd %s1198, %s1204
          %s1206 = smul.addr %s1202, 64
          %s1207 = scalar_lea.hbm %s1, %s1206
          %s1208 = sshll.u32 %s1201, 4
          %s1209 = int_to_ptr.vmem [resolvable:$true] %s1208
          %1214 = dma.hbm_to_vmem [thread:$0]  %s1207, 128, %s1209, %s1198, 64, 64, 4
        $region132: #{run.2} parent=127 // pred_fallthru
          _
        // Predicated region
        $region133: #{run.2} parent=127 // pred_check
          %p1215 = pneg %p149
        $region134: #{run.2} parent=127 // pred_check_branch
          %1217 = sbr.rel (%p1215) target = $region136
        $region135: #{run.2} parent=127 // pred_region
          %s1218 = sand.u32 %s103, 1
          %s1219 = scalar_lea.sflag [#allocation6], %s1218
          %s1220 = sand.u32 %s139, 1
          %s1221 = smul.addr %s1220, 8
          %s1222 = scalar_lea.vmem [#allocation5], %s1221
          %s1223 = smul.u32 2, %s103
          %s1225 = ssub.s32 128, 128
          %1226 = vsyncadd %s1219, %s1225
          %s1227 = smul.addr %s1223, 64
          %s1228 = scalar_lea.hbm %s3, %s1227
          %s1229 = sshll.u32 %s1222, 4
          %s1230 = int_to_ptr.vmem [resolvable:$true] %s1229
          %1235 = dma.hbm_to_vmem [thread:$0]  %s1228, 128, %s1230, %s1219, 64, 64, 4
        $region136: #{run.2} parent=127 // pred_fallthru
          _
        // Predicated region
        $region137: #{run.2} parent=127 // pred_check
          %p1236 = pneg %p175
        $region138: #{run.2} parent=127 // pred_check_branch
          %1238 = sbr.rel (%p1236) target = $region140
        $region139: #{run.2} parent=127 // pred_region
          %s1239 = sand.u32 %s103, 1
          %s1240 = scalar_lea.sflag [#allocation6], %s1239
          %s1241 = sand.u32 %s165, 1
          %s1242 = smul.addr %s1241, 16
          %s1243 = scalar_lea.vmem [#allocation7], %s1242
          %s1244 = smul.u32 4, %s103
          %s1246 = ssub.s32 256, 256
          %1247 = vsyncadd %s1240, %s1246
          %s1248 = smul.addr %s1244, 64
          %s1249 = scalar_lea.hbm %s5, %s1248
          %s1250 = sshll.u32 %s1243, 4
          %s1251 = int_to_ptr.vmem [resolvable:$true] %s1250
          %1256 = dma.hbm_to_vmem [thread:$0]  %s1249, 256, %s1251, %s1240, 64, 64, 4
        $region140: #{run.2} parent=127 // pred_fallthru
          _
        // Predicated region
        $region141: #{run.2} parent=127 // pred_check
          %p1257 = pneg %p201
        $region142: #{run.2} parent=127 // pred_check_branch
          %1259 = sbr.rel (%p1257) target = $region144
        $region143: #{run.2} parent=127 // pred_region
          %s1260 = sand.u32 %s103, 1
          %s1261 = scalar_lea.sflag [#allocation9], %s1260
          %s1262 = sand.u32 %s191, 1
          %s1263 = smul.addr %s1262, 16
          %s1264 = scalar_lea.vmem [#allocation8], %s1263
          %s1265 = smul.u32 4, %s103
          %s1267 = ssub.s32 256, 256
          %1268 = vsyncadd %s1261, %s1267
          %s1269 = smul.addr %s1265, 64
          %s1270 = scalar_lea.hbm %s7, %s1269
          %s1271 = sshll.u32 %s1264, 4
          %s1272 = int_to_ptr.vmem [resolvable:$true] %s1271
          %1277 = dma.hbm_to_vmem [thread:$0]  %s1270, 256, %s1272, %s1261, 64, 64, 4
        $region144: #{run.2} parent=127 // pred_fallthru
          _
      $region128: #{run.2} parent=5 // pred_fallthru
        _
      %p1278 = scmp.le.s32.totalorder 1, %s103
      %p1279 = scmp.lt.s32.totalorder %s103, 3
      %p1280 = pnand %p1278, %p1279
      %p1281 = pneg %p1280
      // Predicated region
      $region145: #{run.2} parent=5 // pred_check
        _
      $region146: #{run.2} parent=5 // pred_check_branch
        %1283 = sbr.rel (%p1280) target = $region148
      $region147: #{run.2} parent=5 // pred_region
        %s1284 = ssub.s32 %s103, 1
        %s1285 = sand.u32 %s116, 1
        %s1286 = scalar_lea.sflag [#allocation3], %s1285
        %s1287 = sand.u32 %s116, 1
        %s1288 = smul.addr %s1287, 8
        %s1289 = scalar_lea.vmem [#allocation2], %s1288
        // Predicated region
        $region149: #{run.2} parent=147 // pred_check
          %p1290 = pneg %p129
        $region150: #{run.2} parent=147 // pred_check_branch
          %1292 = sbr.rel (%p1290) target = $region152
        $region151: #{run.2} parent=147 // pred_region
          %1293 = dma.done %s1286, 128
        $region152: #{run.2} parent=147 // pred_fallthru
          _
        %s1294 = sand.u32 %s108, 1
        %s1295 = scalar_lea.sflag [#allocation6], %s1294
        %s1296 = sand.u32 %s142, 1
        %s1297 = smul.addr %s1296, 8
        %s1298 = scalar_lea.vmem [#allocation5], %s1297
        // Predicated region
        $region153: #{run.2} parent=147 // pred_check
          %p1299 = pneg %p155
        $region154: #{run.2} parent=147 // pred_check_branch
          %1301 = sbr.rel (%p1299) target = $region156
        $region155: #{run.2} parent=147 // pred_region
          %1302 = dma.done %s1295, 128
        $region156: #{run.2} parent=147 // pred_fallthru
          _
        %s1303 = sand.u32 %s108, 1
        %s1304 = scalar_lea.sflag [#allocation6], %s1303
        %s1305 = sand.u32 %s168, 1
        %s1306 = smul.addr %s1305, 16
        %s1307 = scalar_lea.vmem [#allocation7], %s1306
        // Predicated region
        $region157: #{run.2} parent=147 // pred_check
          %p1308 = pneg %p181
        $region158: #{run.2} parent=147 // pred_check_branch
          %1310 = sbr.rel (%p1308) target = $region160
        $region159: #{run.2} parent=147 // pred_region
          %1311 = dma.done %s1304, 256
        $region160: #{run.2} parent=147 // pred_fallthru
          _
        %s1312 = sand.u32 %s108, 1
        %s1313 = scalar_lea.sflag [#allocation9], %s1312
        %s1314 = sand.u32 %s194, 1
        %s1315 = smul.addr %s1314, 16
        %s1316 = scalar_lea.vmem [#allocation8], %s1315
        // Predicated region
        $region161: #{run.2} parent=147 // pred_check
          %p1317 = pneg %p207
        $region162: #{run.2} parent=147 // pred_check_branch
          %1319 = sbr.rel (%p1317) target = $region164
        $region163: #{run.2} parent=147 // pred_region
          %1320 = dma.done %s1313, 256
        $region164: #{run.2} parent=147 // pred_fallthru
          _
        // Predicated region
        $region165: #{run.2} parent=147 // pred_check
          %p1321 = pneg %p228
        $region166: #{run.2} parent=147 // pred_check_branch
          %1323 = sbr.rel (%p1321) target = $region168
        $region167: #{run.2} parent=147 // pred_region
          %1324 = dma.done [#allocation9], 1024
        $region168: #{run.2} parent=147 // pred_fallthru
          _
        // Predicated region
        $region169: #{run.2} parent=147 // pred_check
          %p1325 = pneg %p249
        $region170: #{run.2} parent=147 // pred_check_branch
          %1327 = sbr.rel (%p1325) target = $region172
        $region171: #{run.2} parent=147 // pred_region
          %1328 = dma.done [#allocation12], 16
        $region172: #{run.2} parent=147 // pred_fallthru
          _
        // Predicated region
        $region173: #{run.2} parent=147 // pred_check
          %p1329 = pneg %p270
        $region174: #{run.2} parent=147 // pred_check_branch
          %1331 = sbr.rel (%p1329) target = $region176
        $region175: #{run.2} parent=147 // pred_region
          %1332 = dma.done [#allocation12], 1024
        $region176: #{run.2} parent=147 // pred_fallthru
          _
        // Predicated region
        $region177: #{run.2} parent=147 // pred_check
          %p1333 = pneg %p291
        $region178: #{run.2} parent=147 // pred_check_branch
          %1335 = sbr.rel (%p1333) target = $region180
        $region179: #{run.2} parent=147 // pred_region
          %1336 = dma.done [#allocation15], 16
        $region180: #{run.2} parent=147 // pred_fallthru
          _
        // Predicated region
        $region181: #{run.2} parent=147 // pred_check
          %p1337 = pneg %p312
        $region182: #{run.2} parent=147 // pred_check_branch
          %1339 = sbr.rel (%p1337) target = $region184
        $region183: #{run.2} parent=147 // pred_region
          %1340 = dma.done [#allocation15], 1024
        $region184: #{run.2} parent=147 // pred_fallthru
          _
        // Predicated region
        $region185: #{run.2} parent=147 // pred_check
          %p1341 = pneg %p333
        $region186: #{run.2} parent=147 // pred_check_branch
          %1343 = sbr.rel (%p1341) target = $region188
        $region187: #{run.2} parent=147 // pred_region
          %1344 = dma.done [#allocation18], 16
        $region188: #{run.2} parent=147 // pred_fallthru
          _
        // Predicated region
        $region189: #{run.2} parent=147 // pred_check
          %p1345 = pneg %p354
        $region190: #{run.2} parent=147 // pred_check_branch
          %1347 = sbr.rel (%p1345) target = $region192
        $region191: #{run.2} parent=147 // pred_region
          %1348 = dma.done [#allocation18], 1024
        $region192: #{run.2} parent=147 // pred_fallthru
          _
        // Predicated region
        $region193: #{run.2} parent=147 // pred_check
          %p1349 = pneg %p375
        $region194: #{run.2} parent=147 // pred_check_branch
          %1351 = sbr.rel (%p1349) target = $region196
        $region195: #{run.2} parent=147 // pred_region
          %1352 = dma.done [#allocation21], 16
        $region196: #{run.2} parent=147 // pred_fallthru
          _
        // Predicated region
        $region197: #{run.2} parent=147 // pred_check
          %p1353 = pneg %p396
        $region198: #{run.2} parent=147 // pred_check_branch
          %1355 = sbr.rel (%p1353) target = $region200
        $region199: #{run.2} parent=147 // pred_region
          %1356 = dma.done [#allocation21], 16
        $region200: #{run.2} parent=147 // pred_fallthru
          _
        // Predicated region
        $region201: #{run.2} parent=147 // pred_check
          %p1357 = pneg %p417
        $region202: #{run.2} parent=147 // pred_check_branch
          %1359 = sbr.rel (%p1357) target = $region204
        $region203: #{run.2} parent=147 // pred_region
          %1360 = dma.done [#allocation24], 16
        $region204: #{run.2} parent=147 // pred_fallthru
          _
        // Predicated region
        $region205: #{run.2} parent=147 // pred_check
          %p1361 = pneg %p438
        $region206: #{run.2} parent=147 // pred_check_branch
          %1363 = sbr.rel (%p1361) target = $region208
        $region207: #{run.2} parent=147 // pred_region
          %1364 = dma.done [#allocation24], 1024
        $region208: #{run.2} parent=147 // pred_fallthru
          _
        // Predicated region
        $region209: #{run.2} parent=147 // pred_check
          %p1365 = pneg %p459
        $region210: #{run.2} parent=147 // pred_check_branch
          %1367 = sbr.rel (%p1365) target = $region212
        $region211: #{run.2} parent=147 // pred_region
          %1368 = dma.done [#allocation27], 16
        $region212: #{run.2} parent=147 // pred_fallthru
          _
        // Predicated region
        $region213: #{run.2} parent=147 // pred_check
          %p1369 = pneg %p480
        $region214: #{run.2} parent=147 // pred_check_branch
          %1371 = sbr.rel (%p1369) target = $region216
        $region215: #{run.2} parent=147 // pred_region
          %1372 = dma.done [#allocation27], 1024
        $region216: #{run.2} parent=147 // pred_fallthru
          _
        // Predicated region
        $region217: #{run.2} parent=147 // pred_check
          %p1373 = pneg %p501
        $region218: #{run.2} parent=147 // pred_check_branch
          %1375 = sbr.rel (%p1373) target = $region220
        $region219: #{run.2} parent=147 // pred_region
          %1376 = dma.done [#allocation30], 16
        $region220: #{run.2} parent=147 // pred_fallthru
          _
        // Predicated region
        $region221: #{run.2} parent=147 // pred_check
          %p1377 = pneg %p522
        $region222: #{run.2} parent=147 // pred_check_branch
          %1379 = sbr.rel (%p1377) target = $region224
        $region223: #{run.2} parent=147 // pred_region
          %1380 = dma.done [#allocation30], 1024
        $region224: #{run.2} parent=147 // pred_fallthru
          _
        // Predicated region
        $region225: #{run.2} parent=147 // pred_check
          %p1381 = pneg %p543
        $region226: #{run.2} parent=147 // pred_check_branch
          %1383 = sbr.rel (%p1381) target = $region228
        $region227: #{run.2} parent=147 // pred_region
          %1384 = dma.done [#allocation33], 16
        $region228: #{run.2} parent=147 // pred_fallthru
          _
        // Predicated region
        $region229: #{run.2} parent=147 // pred_check
          %p1385 = pneg %p564
        $region230: #{run.2} parent=147 // pred_check_branch
          %1387 = sbr.rel (%p1385) target = $region232
        $region231: #{run.2} parent=147 // pred_region
          %1388 = dma.done [#allocation33], 1024
        $region232: #{run.2} parent=147 // pred_fallthru
          _
        // Predicated region
        $region233: #{run.2} parent=147 // pred_check
          %p1389 = pneg %p585
        $region234: #{run.2} parent=147 // pred_check_branch
          %1391 = sbr.rel (%p1389) target = $region236
        $region235: #{run.2} parent=147 // pred_region
          %1392 = dma.done [#allocation36], 16
        $region236: #{run.2} parent=147 // pred_fallthru
          _
        // Predicated region
        $region237: #{run.2} parent=147 // pred_check
          %p1393 = pneg %p606
        $region238: #{run.2} parent=147 // pred_check_branch
          %1395 = sbr.rel (%p1393) target = $region240
        $region239: #{run.2} parent=147 // pred_region
          %1396 = dma.done [#allocation36], 16
        $region240: #{run.2} parent=147 // pred_fallthru
          _
        // Predicated region
        $region241: #{run.2} parent=147 // pred_check
          %p1397 = pneg %p627
        $region242: #{run.2} parent=147 // pred_check_branch
          %1399 = sbr.rel (%p1397) target = $region244
        $region243: #{run.2} parent=147 // pred_region
          %1400 = dma.done [#allocation39], 16
        $region244: #{run.2} parent=147 // pred_fallthru
          _
        // Predicated region
        $region245: #{run.2} parent=147 // pred_check
          %p1401 = pneg %p648
        $region246: #{run.2} parent=147 // pred_check_branch
          %1403 = sbr.rel (%p1401) target = $region248
        $region247: #{run.2} parent=147 // pred_region
          %1404 = dma.done [#allocation39], 2048
        $region248: #{run.2} parent=147 // pred_fallthru
          _
        // Predicated region
        $region249: #{run.2} parent=147 // pred_check
          %p1405 = pneg %p669
        $region250: #{run.2} parent=147 // pred_check_branch
          %1407 = sbr.rel (%p1405) target = $region252
        $region251: #{run.2} parent=147 // pred_region
          %1408 = dma.done [#allocation42], 32
        $region252: #{run.2} parent=147 // pred_fallthru
          _
        // Predicated region
        $region253: #{run.2} parent=147 // pred_check
          %p1409 = pneg %p690
        $region254: #{run.2} parent=147 // pred_check_branch
          %1411 = sbr.rel (%p1409) target = $region256
        $region255: #{run.2} parent=147 // pred_region
          %1412 = dma.done [#allocation42], 2048
        $region256: #{run.2} parent=147 // pred_fallthru
          _
        // Predicated region
        $region257: #{run.2} parent=147 // pred_check
          %p1413 = pneg %p711
        $region258: #{run.2} parent=147 // pred_check_branch
          %1415 = sbr.rel (%p1413) target = $region260
        $region259: #{run.2} parent=147 // pred_region
          %1416 = dma.done [#allocation45], 16
        $region260: #{run.2} parent=147 // pred_fallthru
          _
        // Predicated region
        $region261: #{run.2} parent=147 // pred_check
          %p1417 = pneg %p732
        $region262: #{run.2} parent=147 // pred_check_branch
          %1419 = sbr.rel (%p1417) target = $region264
        $region263: #{run.2} parent=147 // pred_region
          %1420 = dma.done [#allocation45], 16
        $region264: #{run.2} parent=147 // pred_fallthru
          _
        // Predicated region
        $region265: #{run.2} parent=147 // pred_check
          %p1421 = pneg %p753
        $region266: #{run.2} parent=147 // pred_check_branch
          %1423 = sbr.rel (%p1421) target = $region268
        $region267: #{run.2} parent=147 // pred_region
          %1424 = dma.done [#allocation48], 16
        $region268: #{run.2} parent=147 // pred_fallthru
          _
        // Predicated region
        $region269: #{run.2} parent=147 // pred_check
          %p1425 = pneg %p774
        $region270: #{run.2} parent=147 // pred_check_branch
          %1427 = sbr.rel (%p1425) target = $region272
        $region271: #{run.2} parent=147 // pred_region
          %1428 = dma.done [#allocation48], 16
        $region272: #{run.2} parent=147 // pred_fallthru
          _
        // Predicated region
        $region273: #{run.2} parent=147 // pred_check
          %p1429 = pneg %p795
        $region274: #{run.2} parent=147 // pred_check_branch
          %1431 = sbr.rel (%p1429) target = $region276
        $region275: #{run.2} parent=147 // pred_region
          %1432 = dma.done [#allocation51], 16
        $region276: #{run.2} parent=147 // pred_fallthru
          _
        %s1433 = sand.u32 %s116, 1
        %s1434 = scalar_lea.sflag [#allocation3], %s1433
        %s1435 = sand.u32 %s116, 1
        %s1436 = smul.addr %s1435, 8
        %s1437 = scalar_lea.vmem [#allocation2], %s1436
        %p1438 = pneg %p129
        %p1439 = pneg %p126
        %s1440 = sand.u32 %s108, 1
        %s1441 = scalar_lea.sflag [#allocation6], %s1440
        %s1442 = sand.u32 %s142, 1
        %s1443 = smul.addr %s1442, 8
        %s1444 = scalar_lea.vmem [#allocation5], %s1443
        %p1445 = pneg %p155
        %p1446 = pneg %p152
        %s1447 = sand.u32 %s108, 1
        %s1448 = scalar_lea.sflag [#allocation6], %s1447
        %s1449 = sand.u32 %s168, 1
        %s1450 = smul.addr %s1449, 16
        %s1451 = scalar_lea.vmem [#allocation7], %s1450
        %p1452 = pneg %p181
        %p1453 = pneg %p178
        %s1454 = sand.u32 %s108, 1
        %s1455 = scalar_lea.sflag [#allocation9], %s1454
        %s1456 = sand.u32 %s194, 1
        %s1457 = smul.addr %s1456, 16
        %s1458 = scalar_lea.vmem [#allocation8], %s1457
        %p1459 = pneg %p207
        %p1460 = pneg %p204
        %p1461 = pneg %p228
        %p1462 = pneg %p225
        %p1463 = pneg %p249
        %p1464 = pneg %p246
        %p1465 = pneg %p270
        %p1466 = pneg %p267
        %p1467 = pneg %p291
        %p1468 = pneg %p288
        %p1469 = pneg %p312
        %p1470 = pneg %p309
        %p1471 = pneg %p333
        %p1472 = pneg %p330
        %p1473 = pneg %p354
        %p1474 = pneg %p351
        %p1475 = pneg %p375
        %p1476 = pneg %p372
        %p1477 = pneg %p396
        %p1478 = pneg %p393
        %p1479 = pneg %p417
        %p1480 = pneg %p414
        %p1481 = pneg %p438
        %p1482 = pneg %p435
        %p1483 = pneg %p459
        %p1484 = pneg %p456
        %p1485 = pneg %p480
        %p1486 = pneg %p477
        %p1487 = pneg %p501
        %p1488 = pneg %p498
        %p1489 = pneg %p522
        %p1490 = pneg %p519
        %p1491 = pneg %p543
        %p1492 = pneg %p540
        %p1493 = pneg %p564
        %p1494 = pneg %p561
        %p1495 = pneg %p585
        %p1496 = pneg %p582
        %p1497 = pneg %p606
        %p1498 = pneg %p603
        %p1499 = pneg %p627
        %p1500 = pneg %p624
        %p1501 = pneg %p648
        %p1502 = pneg %p645
        %p1503 = pneg %p669
        %p1504 = pneg %p666
        %p1505 = pneg %p690
        %p1506 = pneg %p687
        %p1507 = pneg %p711
        %p1508 = pneg %p708
        %p1509 = pneg %p732
        %p1510 = pneg %p729
        %p1511 = pneg %p753
        %p1512 = pneg %p750
        %p1513 = pneg %p774
        %p1514 = pneg %p771
        %p1515 = pneg %p795
        %p1516 = pneg %p792
        %p1517 = pneg %p821
        %p1518 = pneg %p818
        %s1519 = sand.u32 %s808, 1
        %s1520 = scalar_lea.sflag [#allocation4], %s1519
        %s1521 = sand.u32 %s808, 1
        %s1522 = smul.addr %s1521, 8
        %s1523 = scalar_lea.vmem [#allocation52], %s1522
        %p1524 = pneg %p847
        %p1525 = pneg %p844
        %s1526 = sand.u32 %s834, 1
        %s1527 = scalar_lea.sflag [#allocation54], %s1526
        %s1528 = sand.u32 %s834, 1
        %s1529 = smul.addr %s1528, 16
        %s1530 = scalar_lea.vmem [#allocation53], %s1529
        %s1531 = smul.u32 2, %s108
        %s1532 = smul.u32 2, %s108
        %s1533 = smul.u32 4, %s108
        %s1534 = smul.u32 4, %s108
        %s1535 = smul.u32 2, %s108
        %s1536 = smul.u32 2, %s108
        %v1538 = vld [vmem:[%s1289] sm:$0xf]
        %v1539 = vld [vmem:[%s1289 + $0x4] sm:$0xf]
        %v1540 = vld [vmem:[%s1298] sm:$0xf]
        %v1541 = vld [vmem:[%s1298 + $0x4] sm:$0xf]
        %v1542 = vunpack.c.l.bf16 %v1540
        %v1543 = vunpack.c.l.bf16 %v1541
        %v1544 = vunpack.c.l.bf16 %v1538
        %v1545 = vunpack.c.l.bf16 %v1539
        %v1546 = vadd.f32 %v1544, %v1542
        %v1547 = vadd.f32 %v1545, %v1543
        %v1548 = vpack.c.bf16 %v1547, %v1546
        %v1549 = vld [vmem:[#allocation10] sm:$0xf]
        %v1550 = vld [vmem:[#allocation10 + $0x4] sm:$0xf]
        %v1551 = vld [vmem:[#allocation10 + $0x8] sm:$0xf]
        %v1552 = vld [vmem:[#allocation10 + $0xc] sm:$0xf]
        %v1553 = vld [vmem:[#allocation10 + $0x10] sm:$0xf]
        %v1554 = vld [vmem:[#allocation10 + $0x14] sm:$0xf]
        %v1555 = vld [vmem:[#allocation10 + $0x18] sm:$0xf]
        %v1556 = vld [vmem:[#allocation10 + $0x1c] sm:$0xf]
        %v1557 = vld [vmem:[#allocation10 + $0x20] sm:$0xf]
        %v1558 = vld [vmem:[#allocation10 + $0x24] sm:$0xf]
        %v1559 = vld [vmem:[#allocation10 + $0x28] sm:$0xf]
        %v1560 = vld [vmem:[#allocation10 + $0x2c] sm:$0xf]
        %v1561 = vld [vmem:[#allocation10 + $0x30] sm:$0xf]
        %v1562 = vld [vmem:[#allocation10 + $0x34] sm:$0xf]
        %v1563 = vld [vmem:[#allocation10 + $0x38] sm:$0xf]
        %v1564 = vld [vmem:[#allocation10 + $0x3c] sm:$0xf]
        %v1565 = vld [vmem:[#allocation11] sm:$0x1]
        %v1566 = vld [vmem:[#allocation13] sm:$0xf]
        %v1567 = vld [vmem:[#allocation13 + $0x4] sm:$0xf]
        %v1568 = vld [vmem:[#allocation13 + $0x8] sm:$0xf]
        %v1569 = vld [vmem:[#allocation13 + $0xc] sm:$0xf]
        %v1570 = vld [vmem:[#allocation13 + $0x10] sm:$0xf]
        %v1571 = vld [vmem:[#allocation13 + $0x14] sm:$0xf]
        %v1572 = vld [vmem:[#allocation13 + $0x18] sm:$0xf]
        %v1573 = vld [vmem:[#allocation13 + $0x1c] sm:$0xf]
        %v1574 = vld [vmem:[#allocation13 + $0x20] sm:$0xf]
        %v1575 = vld [vmem:[#allocation13 + $0x24] sm:$0xf]
        %v1576 = vld [vmem:[#allocation13 + $0x28] sm:$0xf]
        %v1577 = vld [vmem:[#allocation13 + $0x2c] sm:$0xf]
        %v1578 = vld [vmem:[#allocation13 + $0x30] sm:$0xf]
        %v1579 = vld [vmem:[#allocation13 + $0x34] sm:$0xf]
        %v1580 = vld [vmem:[#allocation13 + $0x38] sm:$0xf]
        %v1581 = vld [vmem:[#allocation13 + $0x3c] sm:$0xf]
        %v1582 = vld [vmem:[#allocation14] sm:$0x1]
        %v1583 = vld [vmem:[#allocation16] sm:$0xf]
        %v1584 = vld [vmem:[#allocation16 + $0x4] sm:$0xf]
        %v1585 = vld [vmem:[#allocation16 + $0x8] sm:$0xf]
        %v1586 = vld [vmem:[#allocation16 + $0xc] sm:$0xf]
        %v1587 = vld [vmem:[#allocation16 + $0x10] sm:$0xf]
        %v1588 = vld [vmem:[#allocation16 + $0x14] sm:$0xf]
        %v1589 = vld [vmem:[#allocation16 + $0x18] sm:$0xf]
        %v1590 = vld [vmem:[#allocation16 + $0x1c] sm:$0xf]
        %v1591 = vld [vmem:[#allocation16 + $0x20] sm:$0xf]
        %v1592 = vld [vmem:[#allocation16 + $0x24] sm:$0xf]
        %v1593 = vld [vmem:[#allocation16 + $0x28] sm:$0xf]
        %v1594 = vld [vmem:[#allocation16 + $0x2c] sm:$0xf]
        %v1595 = vld [vmem:[#allocation16 + $0x30] sm:$0xf]
        %v1596 = vld [vmem:[#allocation16 + $0x34] sm:$0xf]
        %v1597 = vld [vmem:[#allocation16 + $0x38] sm:$0xf]
        %v1598 = vld [vmem:[#allocation16 + $0x3c] sm:$0xf]
        %v1599 = vld [vmem:[#allocation17] sm:$0x1]
        %v1600 = vld [vmem:[#allocation19] sm:$0xf]
        %v1601 = vld [vmem:[#allocation19 + $0x4] sm:$0xf]
        %v1602 = vld [vmem:[#allocation19 + $0x8] sm:$0xf]
        %v1603 = vld [vmem:[#allocation19 + $0xc] sm:$0xf]
        %v1604 = vld [vmem:[#allocation19 + $0x10] sm:$0xf]
        %v1605 = vld [vmem:[#allocation19 + $0x14] sm:$0xf]
        %v1606 = vld [vmem:[#allocation19 + $0x18] sm:$0xf]
        %v1607 = vld [vmem:[#allocation19 + $0x1c] sm:$0xf]
        %v1608 = vld [vmem:[#allocation19 + $0x20] sm:$0xf]
        %v1609 = vld [vmem:[#allocation19 + $0x24] sm:$0xf]
        %v1610 = vld [vmem:[#allocation19 + $0x28] sm:$0xf]
        %v1611 = vld [vmem:[#allocation19 + $0x2c] sm:$0xf]
        %v1612 = vld [vmem:[#allocation19 + $0x30] sm:$0xf]
        %v1613 = vld [vmem:[#allocation19 + $0x34] sm:$0xf]
        %v1614 = vld [vmem:[#allocation19 + $0x38] sm:$0xf]
        %v1615 = vld [vmem:[#allocation19 + $0x3c] sm:$0xf]
        %v1616 = vld [vmem:[#allocation20] sm:$0x1]
        %v1618 = vlaneseq
        %v1619 = vshrl.u32 %v1618, 7
        %v1620 = vsub.s32 0, %v1619
        %v1621 = vrot.slane %v1565, %v1620
        %v1639 = vunpack.c.l.b16 %v1549
        %v1640 = vunpack.c.l.b16 %v1550
        %v1641 = vunpack.c.l.b16 %v1551
        %v1642 = vunpack.c.l.b16 %v1552
        %v1643 = vunpack.c.l.b16 %v1553
        %v1644 = vunpack.c.l.b16 %v1554
        %v1645 = vunpack.c.l.b16 %v1555
        %v1646 = vunpack.c.l.b16 %v1556
        %v1647 = vunpack.c.l.b16 %v1557
        %v1648 = vunpack.c.l.b16 %v1558
        %v1649 = vunpack.c.l.b16 %v1559
        %v1650 = vunpack.c.l.b16 %v1560
        %v1651 = vunpack.c.l.b16 %v1561
        %v1652 = vunpack.c.l.b16 %v1562
        %v1653 = vunpack.c.l.b16 %v1563
        %v1654 = vunpack.c.l.b16 %v1564
        %v1655 = vpack.c.b16 %v1640, %v1639
        %v1656 = vpack.c.b16 %v1642, %v1641
        %v1657 = vpack.c.b16 %v1644, %v1643
        %v1658 = vpack.c.b16 %v1646, %v1645
        %v1659 = vpack.c.b16 %v1648, %v1647
        %v1660 = vpack.c.b16 %v1650, %v1649
        %v1661 = vpack.c.b16 %v1652, %v1651
        %v1662 = vpack.c.b16 %v1654, %v1653
        %1671 = vmatprep.subr.bf16.mxu0 0
        %1672 = vmatpush1.bf16.msra.mxu0 %v1655
        %1673 = vmatprep.subr.bf16.mxu0 0
        %1674 = vmatpush1.bf16.msra.mxu0 %v1656
        %1675 = vmatprep.subr.bf16.mxu0 0
        %1676 = vmatpush1.bf16.msra.mxu0 %v1657
        %1677 = vmatprep.subr.bf16.mxu0 0
        %1678 = vmatpush1.bf16.msra.mxu0 %v1658
        %1679 = vmatprep.subr.bf16.mxu0 0
        %1680 = vmatpush1.bf16.msra.mxu0 %v1659
        %1681 = vmatprep.subr.bf16.mxu0 0
        %1682 = vmatpush1.bf16.msra.mxu0 %v1660
        %1683 = vmatprep.subr.bf16.mxu0 0
        %1684 = vmatpush1.bf16.msra.mxu0 %v1661
        %1685 = vmatprep.subr.bf16.mxu0 0
        %1686 = vmatpush1.bf16.msra.mxu0 %v1662
        %1687 = vmatprep.subr.bf16.mxu0 0
        %1688 = vmatpush1.bf16.msra.mxu0 0
        %1689 = vmatprep.subr.bf16.mxu0 0
        %1690 = vmatpush1.bf16.msra.mxu0 0
        %1691 = vmatprep.subr.bf16.mxu0 0
        %1692 = vmatpush1.bf16.msra.mxu0 0
        %1693 = vmatprep.subr.bf16.mxu0 0
        %1694 = vmatpush1.bf16.msra.mxu0 0
        %1695 = vmatprep.subr.bf16.mxu0 0
        %1696 = vmatpush1.bf16.msra.mxu0 0
        %1697 = vmatprep.subr.bf16.mxu0 0
        %1698 = vmatpush1.bf16.msra.mxu0 0
        %1699 = vmatprep.subr.bf16.mxu0 0
        %1700 = vmatpush1.bf16.msra.mxu0 0
        %1701 = vmatprep.subr.bf16.mxu0 0
        %1702 = vmatpush1.bf16.msra.mxu0 0
        %1703 = vmatprep.mubr.bf16.mxu0 0
        %1704 = vmatmul.mubr.bf16.gmra.mrb[0].mxu0 %v1548
        %v1705 = vpop.f32.mrb[0].mxu0
        %v1706 = vadd.f32 %v1621, %v1705
        %v1707 = vpop.f32.mrb[0].mxu0
        %v1708 = vpop.f32.mrb[0].mxu0
        %v1709 = vadd.f32 %v1621, %v1708
        %v1710 = vpop.f32.mrb[0].mxu0
        %1711 = vdwg.mxu0
        %v1712 = vpack.c.bf16 %v1709, %v1706
        %v1714 = vlaneseq
        %v1715 = vshrl.u32 %v1714, 7
        %v1716 = vsub.s32 0, %v1715
        %v1717 = vrot.slane %v1582, %v1716
        %v1735 = vunpack.c.l.b16 %v1566
        %v1736 = vunpack.c.l.b16 %v1567
        %v1737 = vunpack.c.l.b16 %v1568
        %v1738 = vunpack.c.l.b16 %v1569
        %v1739 = vunpack.c.l.b16 %v1570
        %v1740 = vunpack.c.l.b16 %v1571
        %v1741 = vunpack.c.l.b16 %v1572
        %v1742 = vunpack.c.l.b16 %v1573
        %v1743 = vunpack.c.l.b16 %v1574
        %v1744 = vunpack.c.l.b16 %v1575
        %v1745 = vunpack.c.l.b16 %v1576
        %v1746 = vunpack.c.l.b16 %v1577
        %v1747 = vunpack.c.l.b16 %v1578
        %v1748 = vunpack.c.l.b16 %v1579
        %v1749 = vunpack.c.l.b16 %v1580
        %v1750 = vunpack.c.l.b16 %v1581
        %v1751 = vpack.c.b16 %v1736, %v1735
        %v1752 = vpack.c.b16 %v1738, %v1737
        %v1753 = vpack.c.b16 %v1740, %v1739
        %v1754 = vpack.c.b16 %v1742, %v1741
        %v1755 = vpack.c.b16 %v1744, %v1743
        %v1756 = vpack.c.b16 %v1746, %v1745
        %v1757 = vpack.c.b16 %v1748, %v1747
        %v1758 = vpack.c.b16 %v1750, %v1749
        %1767 = vmatprep.subr.bf16.mxu0 0
        %1768 = vmatpush1.bf16.msra.mxu0 %v1751
        %1769 = vmatprep.subr.bf16.mxu0 0
        %1770 = vmatpush1.bf16.msra.mxu0 %v1752
        %1771 = vmatprep.subr.bf16.mxu0 0
        %1772 = vmatpush1.bf16.msra.mxu0 %v1753
        %1773 = vmatprep.subr.bf16.mxu0 0
        %1774 = vmatpush1.bf16.msra.mxu0 %v1754
        %1775 = vmatprep.subr.bf16.mxu0 0
        %1776 = vmatpush1.bf16.msra.mxu0 %v1755
        %1777 = vmatprep.subr.bf16.mxu0 0
        %1778 = vmatpush1.bf16.msra.mxu0 %v1756
        %1779 = vmatprep.subr.bf16.mxu0 0
        %1780 = vmatpush1.bf16.msra.mxu0 %v1757
        %1781 = vmatprep.subr.bf16.mxu0 0
        %1782 = vmatpush1.bf16.msra.mxu0 %v1758
        %1783 = vmatprep.subr.bf16.mxu0 0
        %1784 = vmatpush1.bf16.msra.mxu0 0
        %1785 = vmatprep.subr.bf16.mxu0 0
        %1786 = vmatpush1.bf16.msra.mxu0 0
        %1787 = vmatprep.subr.bf16.mxu0 0
        %1788 = vmatpush1.bf16.msra.mxu0 0
        %1789 = vmatprep.subr.bf16.mxu0 0
        %1790 = vmatpush1.bf16.msra.mxu0 0
        %1791 = vmatprep.subr.bf16.mxu0 0
        %1792 = vmatpush1.bf16.msra.mxu0 0
        %1793 = vmatprep.subr.bf16.mxu0 0
        %1794 = vmatpush1.bf16.msra.mxu0 0
        %1795 = vmatprep.subr.bf16.mxu0 0
        %1796 = vmatpush1.bf16.msra.mxu0 0
        %1797 = vmatprep.subr.bf16.mxu0 0
        %1798 = vmatpush1.bf16.msra.mxu0 0
        %1799 = vmatprep.mubr.bf16.mxu0 0
        %1800 = vmatmul.mubr.bf16.gmra.mrb[0].mxu0 %v1548
        %v1801 = vpop.f32.mrb[0].mxu0
        %v1802 = vadd.f32 %v1717, %v1801
        %v1803 = vpop.f32.mrb[0].mxu0
        %v1804 = vpop.f32.mrb[0].mxu0
        %v1805 = vadd.f32 %v1717, %v1804
        %v1806 = vpop.f32.mrb[0].mxu0
        %1807 = vdwg.mxu0
        %v1808 = vpack.c.bf16 %v1805, %v1802
        %v1810 = vlaneseq
        %v1811 = vshrl.u32 %v1810, 7
        %v1812 = vsub.s32 0, %v1811
        %v1813 = vrot.slane %v1599, %v1812
        %v1817 = vunpack.c.l.b16 %v1538
        %v1818 = vunpack.c.l.b16 %v1539
        %v1819 = vpack.c.b16 %v1818, %v1817
        %v1837 = vunpack.c.l.b16 %v1583
        %v1838 = vunpack.c.l.b16 %v1584
        %v1839 = vunpack.c.l.b16 %v1585
        %v1840 = vunpack.c.l.b16 %v1586
        %v1841 = vunpack.c.l.b16 %v1587
        %v1842 = vunpack.c.l.b16 %v1588
        %v1843 = vunpack.c.l.b16 %v1589
        %v1844 = vunpack.c.l.b16 %v1590
        %v1845 = vunpack.c.l.b16 %v1591
        %v1846 = vunpack.c.l.b16 %v1592
        %v1847 = vunpack.c.l.b16 %v1593
        %v1848 = vunpack.c.l.b16 %v1594
        %v1849 = vunpack.c.l.b16 %v1595
        %v1850 = vunpack.c.l.b16 %v1596
        %v1851 = vunpack.c.l.b16 %v1597
        %v1852 = vunpack.c.l.b16 %v1598
        %v1853 = vpack.c.b16 %v1838, %v1837
        %v1854 = vpack.c.b16 %v1840, %v1839
        %v1855 = vpack.c.b16 %v1842, %v1841
        %v1856 = vpack.c.b16 %v1844, %v1843
        %v1857 = vpack.c.b16 %v1846, %v1845
        %v1858 = vpack.c.b16 %v1848, %v1847
        %v1859 = vpack.c.b16 %v1850, %v1849
        %v1860 = vpack.c.b16 %v1852, %v1851
        %1869 = vmatprep.subr.bf16.mxu0 0
        %1870 = vmatpush1.bf16.msra.mxu0 %v1853
        %1871 = vmatprep.subr.bf16.mxu0 0
        %1872 = vmatpush1.bf16.msra.mxu0 %v1854
        %1873 = vmatprep.subr.bf16.mxu0 0
        %1874 = vmatpush1.bf16.msra.mxu0 %v1855
        %1875 = vmatprep.subr.bf16.mxu0 0
        %1876 = vmatpush1.bf16.msra.mxu0 %v1856
        %1877 = vmatprep.subr.bf16.mxu0 0
        %1878 = vmatpush1.bf16.msra.mxu0 %v1857
        %1879 = vmatprep.subr.bf16.mxu0 0
        %1880 = vmatpush1.bf16.msra.mxu0 %v1858
        %1881 = vmatprep.subr.bf16.mxu0 0
        %1882 = vmatpush1.bf16.msra.mxu0 %v1859
        %1883 = vmatprep.subr.bf16.mxu0 0
        %1884 = vmatpush1.bf16.msra.mxu0 %v1860
        %1885 = vmatprep.subr.bf16.mxu0 0
        %1886 = vmatpush1.bf16.msra.mxu0 0
        %1887 = vmatprep.subr.bf16.mxu0 0
        %1888 = vmatpush1.bf16.msra.mxu0 0
        %1889 = vmatprep.subr.bf16.mxu0 0
        %1890 = vmatpush1.bf16.msra.mxu0 0
        %1891 = vmatprep.subr.bf16.mxu0 0
        %1892 = vmatpush1.bf16.msra.mxu0 0
        %1893 = vmatprep.subr.bf16.mxu0 0
        %1894 = vmatpush1.bf16.msra.mxu0 0
        %1895 = vmatprep.subr.bf16.mxu0 0
        %1896 = vmatpush1.bf16.msra.mxu0 0
        %1897 = vmatprep.subr.bf16.mxu0 0
        %1898 = vmatpush1.bf16.msra.mxu0 0
        %1899 = vmatprep.subr.bf16.mxu0 0
        %1900 = vmatpush1.bf16.msra.mxu0 0
        %1901 = vmatprep.mubr.bf16.mxu0 0
        %1902 = vmatmul.mubr.bf16.gmra.mrb[0].mxu0 %v1819
        %v1903 = vpop.f32.mrb[0].mxu0
        %v1904 = vadd.f32 %v1813, %v1903
        %v1905 = vpop.f32.mrb[0].mxu0
        %v1906 = vpop.f32.mrb[0].mxu0
        %v1907 = vadd.f32 %v1813, %v1906
        %v1908 = vpop.f32.mrb[0].mxu0
        %1909 = vdwg.mxu0
        %v1910 = vpack.c.bf16 %v1907, %v1904
        %vm1911 = vcmask 130048
        %v1913 = vsel %vm1911, %v1712, 0
        %v1916 = vsel %vm1911, %v1808, 0
        %1918 = vmatprep.subr.bf16.mxu0 0
        %1919 = vmatpush1.bf16.xpose.msra.mxu0 %v1916
        %1920 = vmatprep.subr.bf16.mxu0 0
        %1921 = vmatpush1.bf16.xpose.msra.mxu0 0
        %1922 = vmatprep.subr.bf16.mxu0 0
        %1923 = vmatpush1.bf16.xpose.msra.mxu0 0
        %1924 = vmatprep.subr.bf16.mxu0 0
        %1925 = vmatpush1.bf16.xpose.msra.mxu0 0
        %1926 = vmatprep.subr.bf16.mxu0 0
        %1927 = vmatpush1.bf16.xpose.msra.mxu0 0
        %1928 = vmatprep.subr.bf16.mxu0 0
        %1929 = vmatpush1.bf16.xpose.msra.mxu0 0
        %1930 = vmatprep.subr.bf16.mxu0 0
        %1931 = vmatpush1.bf16.xpose.msra.mxu0 0
        %1932 = vmatprep.subr.bf16.mxu0 0
        %1933 = vmatpush1.bf16.xpose.msra.mxu0 0
        %1934 = vmatprep.subr.bf16.mxu0 0
        %1935 = vmatpush1.bf16.xpose.msra.mxu0 0
        %1936 = vmatprep.subr.bf16.mxu0 0
        %1937 = vmatpush1.bf16.xpose.msra.mxu0 0
        %1938 = vmatprep.subr.bf16.mxu0 0
        %1939 = vmatpush1.bf16.xpose.msra.mxu0 0
        %1940 = vmatprep.subr.bf16.mxu0 0
        %1941 = vmatpush1.bf16.xpose.msra.mxu0 0
        %1942 = vmatprep.subr.bf16.mxu0 0
        %1943 = vmatpush1.bf16.xpose.msra.mxu0 0
        %1944 = vmatprep.subr.bf16.mxu0 0
        %1945 = vmatpush1.bf16.xpose.msra.mxu0 0
        %1946 = vmatprep.subr.bf16.mxu0 0
        %1947 = vmatpush1.bf16.xpose.msra.mxu0 0
        %1948 = vmatprep.subr.bf16.mxu0 0
        %1949 = vmatpush1.bf16.xpose.msra.mxu0 0
        %1950 = vmatprep.mubr.bf16.mxu0 0
        %1951 = vmatmul.mubr.bf16.gmra.mrb[0].mxu0 %v1913
        %v1952 = vpop.f32.mrb[0].mxu0
        %v1953 = vadd.f32 0.0, %v1952
        %v1954 = vpop.f32.mrb[0].mxu0
        %v1955 = vpop.f32.mrb[0].mxu0
        %v1956 = vadd.f32 0.0, %v1955
        %v1957 = vpop.f32.mrb[0].mxu0
        %1958 = vdwg.mxu0
        %v1959 = vmul.f32 %v1953, 0.25
        %v1960 = vmul.f32 %v1956, 0.25
        %v1961 = vsel %vm1911, %v1959, -inf
        %1962 = vmax.xlane.f32.xlu0 %v1961
        %v1963 = vpop.xlane.xlu0 %1962
        %v1964 = vsel %vm1911, %v1960, -inf
        %1965 = vmax.xlane.f32.xlu0 %v1964
        %v1966 = vpop.xlane.xlu0 %1965
        %v1967 = vsub.f32 %v1959, %v1963
        %v1968 = vsub.f32 %v1960, %v1966
        %v1969 = vmul.f32 %v1967, 1.442695
        %v1970 = vpow.pop %v1969
        %v1971 = vmul.f32 %v1968, 1.442695
        %v1972 = vpow.pop %v1971
        %v1973 = vsel %vm1911, %v1970, 0.0
        %1974 = vadd.xlane.f32.xlu0 %v1973
        %v1975 = vpop.xlane.xlu0 %1974
        %v1976 = vsel %vm1911, %v1972, 0.0
        %1977 = vadd.xlane.f32.xlu0 %v1976
        %v1978 = vpop.xlane.xlu0 %1977
        %v1979 = vrcp.pop %v1975
        %v1980 = vrcp.pop %v1978
        %v1981 = vmul.f32 %v1970, %v1979
        %v1982 = vmul.f32 %v1972, %v1980
        %v1983 = vpack.c.bf16 %v1982, %v1981
        %v1985 = vsel %vm1911, %v1983, 0
        %1987 = vmatprep.subr.bf16.mxu0 0
        %1988 = vmatpush1.bf16.msra.mxu0 %v1910
        %1989 = vmatprep.subr.bf16.mxu0 0
        %1990 = vmatpush1.bf16.msra.mxu0 0
        %1991 = vmatprep.subr.bf16.mxu0 0
        %1992 = vmatpush1.bf16.msra.mxu0 0
        %1993 = vmatprep.subr.bf16.mxu0 0
        %1994 = vmatpush1.bf16.msra.mxu0 0
        %1995 = vmatprep.subr.bf16.mxu0 0
        %1996 = vmatpush1.bf16.msra.mxu0 0
        %1997 = vmatprep.subr.bf16.mxu0 0
        %1998 = vmatpush1.bf16.msra.mxu0 0
        %1999 = vmatprep.subr.bf16.mxu0 0
        %2000 = vmatpush1.bf16.msra.mxu0 0
        %2001 = vmatprep.subr.bf16.mxu0 0
        %2002 = vmatpush1.bf16.msra.mxu0 0
        %2003 = vmatprep.subr.bf16.mxu0 0
        %2004 = vmatpush1.bf16.msra.mxu0 0
        %2005 = vmatprep.subr.bf16.mxu0 0
        %2006 = vmatpush1.bf16.msra.mxu0 0
        %2007 = vmatprep.subr.bf16.mxu0 0
        %2008 = vmatpush1.bf16.msra.mxu0 0
        %2009 = vmatprep.subr.bf16.mxu0 0
        %2010 = vmatpush1.bf16.msra.mxu0 0
        %2011 = vmatprep.subr.bf16.mxu0 0
        %2012 = vmatpush1.bf16.msra.mxu0 0
        %2013 = vmatprep.subr.bf16.mxu0 0
        %2014 = vmatpush1.bf16.msra.mxu0 0
        %2015 = vmatprep.subr.bf16.mxu0 0
        %2016 = vmatpush1.bf16.msra.mxu0 0
        %2017 = vmatprep.subr.bf16.mxu0 0
        %2018 = vmatpush1.bf16.msra.mxu0 0
        %2019 = vmatprep.mubr.bf16.mxu0 0
        %2020 = vmatmul.mubr.bf16.gmra.mrb[0].mxu0 %v1985
        %v2021 = vpop.f32.mrb[0].mxu0
        %v2022 = vadd.f32 0.0, %v2021
        %v2023 = vpop.f32.mrb[0].mxu0
        %v2024 = vpop.f32.mrb[0].mxu0
        %v2025 = vadd.f32 0.0, %v2024
        %v2026 = vpop.f32.mrb[0].mxu0
        %2027 = vdwg.mxu0
        %2029 = vrot.lane.b32.xlu0 %v1712, 112
        %v2030 = vpop.permute.xlu0 %2029
        %2032 = vrot.lane.b32.xlu0 %v1808, 112
        %v2033 = vpop.permute.xlu0 %2032
        %v2035 = vsel %vm1911, %v2030, 0
        %v2038 = vsel %vm1911, %v2033, 0
        %2040 = vmatprep.subr.bf16.mxu0 0
        %2041 = vmatpush1.bf16.xpose.msra.mxu0 %v2038
        %2042 = vmatprep.subr.bf16.mxu0 0
        %2043 = vmatpush1.bf16.xpose.msra.mxu0 0
        %2044 = vmatprep.subr.bf16.mxu0 0
        %2045 = vmatpush1.bf16.xpose.msra.mxu0 0
        %2046 = vmatprep.subr.bf16.mxu0 0
        %2047 = vmatpush1.bf16.xpose.msra.mxu0 0
        %2048 = vmatprep.subr.bf16.mxu0 0
        %2049 = vmatpush1.bf16.xpose.msra.mxu0 0
        %2050 = vmatprep.subr.bf16.mxu0 0
        %2051 = vmatpush1.bf16.xpose.msra.mxu0 0
        %2052 = vmatprep.subr.bf16.mxu0 0
        %2053 = vmatpush1.bf16.xpose.msra.mxu0 0
        %2054 = vmatprep.subr.bf16.mxu0 0
        %2055 = vmatpush1.bf16.xpose.msra.mxu0 0
        %2056 = vmatprep.subr.bf16.mxu0 0
        %2057 = vmatpush1.bf16.xpose.msra.mxu0 0
        %2058 = vmatprep.subr.bf16.mxu0 0
        %2059 = vmatpush1.bf16.xpose.msra.mxu0 0
        %2060 = vmatprep.subr.bf16.mxu0 0
        %2061 = vmatpush1.bf16.xpose.msra.mxu0 0
        %2062 = vmatprep.subr.bf16.mxu0 0
        %2063 = vmatpush1.bf16.xpose.msra.mxu0 0
        %2064 = vmatprep.subr.bf16.mxu0 0
        %2065 = vmatpush1.bf16.xpose.msra.mxu0 0
        %2066 = vmatprep.subr.bf16.mxu0 0
        %2067 = vmatpush1.bf16.xpose.msra.mxu0 0
        %2068 = vmatprep.subr.bf16.mxu0 0
        %2069 = vmatpush1.bf16.xpose.msra.mxu0 0
        %2070 = vmatprep.subr.bf16.mxu0 0
        %2071 = vmatpush1.bf16.xpose.msra.mxu0 0
        %2072 = vmatprep.mubr.bf16.mxu0 0
        %2073 = vmatmul.mubr.bf16.gmra.mrb[0].mxu0 %v2035
        %v2074 = vpop.f32.mrb[0].mxu0
        %v2075 = vadd.f32 0.0, %v2074
        %v2076 = vpop.f32.mrb[0].mxu0
        %v2077 = vpop.f32.mrb[0].mxu0
        %v2078 = vadd.f32 0.0, %v2077
        %v2079 = vpop.f32.mrb[0].mxu0
        %2080 = vdwg.mxu0
        %v2081 = vmul.f32 %v2075, 0.25
        %v2082 = vmul.f32 %v2078, 0.25
        %v2083 = vsel %vm1911, %v2081, -inf
        %2084 = vmax.xlane.f32.xlu0 %v2083
        %v2085 = vpop.xlane.xlu0 %2084
        %v2086 = vsel %vm1911, %v2082, -inf
        %2087 = vmax.xlane.f32.xlu0 %v2086
        %v2088 = vpop.xlane.xlu0 %2087
        %v2089 = vsub.f32 %v2081, %v2085
        %v2090 = vsub.f32 %v2082, %v2088
        %v2091 = vmul.f32 %v2089, 1.442695
        %v2092 = vpow.pop %v2091
        %v2093 = vmul.f32 %v2090, 1.442695
        %v2094 = vpow.pop %v2093
        %v2095 = vsel %vm1911, %v2092, 0.0
        %2096 = vadd.xlane.f32.xlu0 %v2095
        %v2097 = vpop.xlane.xlu0 %2096
        %v2098 = vsel %vm1911, %v2094, 0.0
        %2099 = vadd.xlane.f32.xlu0 %v2098
        %v2100 = vpop.xlane.xlu0 %2099
        %v2101 = vrcp.pop %v2097
        %v2102 = vrcp.pop %v2100
        %v2103 = vmul.f32 %v2092, %v2101
        %v2104 = vmul.f32 %v2094, %v2102
        %v2105 = vpack.c.bf16 %v2104, %v2103
        %2107 = vrot.lane.b32.xlu0 %v1910, 112
        %v2108 = vpop.permute.xlu0 %2107
        %v2111 = vsel %vm1911, %v2105, 0
        %2113 = vmatprep.subr.bf16.mxu0 0
        %2114 = vmatpush1.bf16.msra.mxu0 %v2108
        %2115 = vmatprep.subr.bf16.mxu0 0
        %2116 = vmatpush1.bf16.msra.mxu0 0
        %2117 = vmatprep.subr.bf16.mxu0 0
        %2118 = vmatpush1.bf16.msra.mxu0 0
        %2119 = vmatprep.subr.bf16.mxu0 0
        %2120 = vmatpush1.bf16.msra.mxu0 0
        %2121 = vmatprep.subr.bf16.mxu0 0
        %2122 = vmatpush1.bf16.msra.mxu0 0
        %2123 = vmatprep.subr.bf16.mxu0 0
        %2124 = vmatpush1.bf16.msra.mxu0 0
        %2125 = vmatprep.subr.bf16.mxu0 0
        %2126 = vmatpush1.bf16.msra.mxu0 0
        %2127 = vmatprep.subr.bf16.mxu0 0
        %2128 = vmatpush1.bf16.msra.mxu0 0
        %2129 = vmatprep.subr.bf16.mxu0 0
        %2130 = vmatpush1.bf16.msra.mxu0 0
        %2131 = vmatprep.subr.bf16.mxu0 0
        %2132 = vmatpush1.bf16.msra.mxu0 0
        %2133 = vmatprep.subr.bf16.mxu0 0
        %2134 = vmatpush1.bf16.msra.mxu0 0
        %2135 = vmatprep.subr.bf16.mxu0 0
        %2136 = vmatpush1.bf16.msra.mxu0 0
        %2137 = vmatprep.subr.bf16.mxu0 0
        %2138 = vmatpush1.bf16.msra.mxu0 0
        %2139 = vmatprep.subr.bf16.mxu0 0
        %2140 = vmatpush1.bf16.msra.mxu0 0
        %2141 = vmatprep.subr.bf16.mxu0 0
        %2142 = vmatpush1.bf16.msra.mxu0 0
        %2143 = vmatprep.subr.bf16.mxu0 0
        %2144 = vmatpush1.bf16.msra.mxu0 0
        %2145 = vmatprep.mubr.bf16.mxu0 0
        %2146 = vmatmul.mubr.bf16.gmra.mrb[0].mxu0 %v2111
        %v2147 = vpop.f32.mrb[0].mxu0
        %v2148 = vadd.f32 0.0, %v2147
        %v2149 = vpop.f32.mrb[0].mxu0
        %v2150 = vpop.f32.mrb[0].mxu0
        %v2151 = vadd.f32 0.0, %v2150
        %v2152 = vpop.f32.mrb[0].mxu0
        %2153 = vdwg.mxu0
        %2154 = vrot.lane.b32.xlu0 %v1712, 96
        %v2155 = vpop.permute.xlu0 %2154
        %2156 = vrot.lane.b32.xlu0 %v1808, 96
        %v2157 = vpop.permute.xlu0 %2156
        %v2159 = vsel %vm1911, %v2155, 0
        %v2162 = vsel %vm1911, %v2157, 0
        %2164 = vmatprep.subr.bf16.mxu0 0
        %2165 = vmatpush1.bf16.xpose.msra.mxu0 %v2162
        %2166 = vmatprep.subr.bf16.mxu0 0
        %2167 = vmatpush1.bf16.xpose.msra.mxu0 0
        %2168 = vmatprep.subr.bf16.mxu0 0
        %2169 = vmatpush1.bf16.xpose.msra.mxu0 0
        %2170 = vmatprep.subr.bf16.mxu0 0
        %2171 = vmatpush1.bf16.xpose.msra.mxu0 0
        %2172 = vmatprep.subr.bf16.mxu0 0
        %2173 = vmatpush1.bf16.xpose.msra.mxu0 0
        %2174 = vmatprep.subr.bf16.mxu0 0
        %2175 = vmatpush1.bf16.xpose.msra.mxu0 0
        %2176 = vmatprep.subr.bf16.mxu0 0
        %2177 = vmatpush1.bf16.xpose.msra.mxu0 0
        %2178 = vmatprep.subr.bf16.mxu0 0
        %2179 = vmatpush1.bf16.xpose.msra.mxu0 0
        %2180 = vmatprep.subr.bf16.mxu0 0
        %2181 = vmatpush1.bf16.xpose.msra.mxu0 0
        %2182 = vmatprep.subr.bf16.mxu0 0
        %2183 = vmatpush1.bf16.xpose.msra.mxu0 0
        %2184 = vmatprep.subr.bf16.mxu0 0
        %2185 = vmatpush1.bf16.xpose.msra.mxu0 0
        %2186 = vmatprep.subr.bf16.mxu0 0
        %2187 = vmatpush1.bf16.xpose.msra.mxu0 0
        %2188 = vmatprep.subr.bf16.mxu0 0
        %2189 = vmatpush1.bf16.xpose.msra.mxu0 0
        %2190 = vmatprep.subr.bf16.mxu0 0
        %2191 = vmatpush1.bf16.xpose.msra.mxu0 0
        %2192 = vmatprep.subr.bf16.mxu0 0
        %2193 = vmatpush1.bf16.xpose.msra.mxu0 0
        %2194 = vmatprep.subr.bf16.mxu0 0
        %2195 = vmatpush1.bf16.xpose.msra.mxu0 0
        %2196 = vmatprep.mubr.bf16.mxu0 0
        %2197 = vmatmul.mubr.bf16.gmra.mrb[0].mxu0 %v2159
        %v2198 = vpop.f32.mrb[0].mxu0
        %v2199 = vadd.f32 0.0, %v2198
        %v2200 = vpop.f32.mrb[0].mxu0
        %v2201 = vpop.f32.mrb[0].mxu0
        %v2202 = vadd.f32 0.0, %v2201
        %v2203 = vpop.f32.mrb[0].mxu0
        %2204 = vdwg.mxu0
        %v2205 = vmul.f32 %v2199, 0.25
        %v2206 = vmul.f32 %v2202, 0.25
        %v2207 = vsel %vm1911, %v2205, -inf
        %2208 = vmax.xlane.f32.xlu0 %v2207
        %v2209 = vpop.xlane.xlu0 %2208
        %v2210 = vsel %vm1911, %v2206, -inf
        %2211 = vmax.xlane.f32.xlu0 %v2210
        %v2212 = vpop.xlane.xlu0 %2211
        %v2213 = vsub.f32 %v2205, %v2209
        %v2214 = vsub.f32 %v2206, %v2212
        %v2215 = vmul.f32 %v2213, 1.442695
        %v2216 = vpow.pop %v2215
        %v2217 = vmul.f32 %v2214, 1.442695
        %v2218 = vpow.pop %v2217
        %v2219 = vsel %vm1911, %v2216, 0.0
        %2220 = vadd.xlane.f32.xlu0 %v2219
        %v2221 = vpop.xlane.xlu0 %2220
        %v2222 = vsel %vm1911, %v2218, 0.0
        %2223 = vadd.xlane.f32.xlu0 %v2222
        %v2224 = vpop.xlane.xlu0 %2223
        %v2225 = vrcp.pop %v2221
        %v2226 = vrcp.pop %v2224
        %v2227 = vmul.f32 %v2216, %v2225
        %v2228 = vmul.f32 %v2218, %v2226
        %v2229 = vpack.c.bf16 %v2228, %v2227
        %2230 = vrot.lane.b32.xlu0 %v1910, 96
        %v2231 = vpop.permute.xlu0 %2230
        %v2234 = vsel %vm1911, %v2229, 0
        %2236 = vmatprep.subr.bf16.mxu0 0
        %2237 = vmatpush1.bf16.msra.mxu0 %v2231
        %2238 = vmatprep.subr.bf16.mxu0 0
        %2239 = vmatpush1.bf16.msra.mxu0 0
        %2240 = vmatprep.subr.bf16.mxu0 0
        %2241 = vmatpush1.bf16.msra.mxu0 0
        %2242 = vmatprep.subr.bf16.mxu0 0
        %2243 = vmatpush1.bf16.msra.mxu0 0
        %2244 = vmatprep.subr.bf16.mxu0 0
        %2245 = vmatpush1.bf16.msra.mxu0 0
        %2246 = vmatprep.subr.bf16.mxu0 0
        %2247 = vmatpush1.bf16.msra.mxu0 0
        %2248 = vmatprep.subr.bf16.mxu0 0
        %2249 = vmatpush1.bf16.msra.mxu0 0
        %2250 = vmatprep.subr.bf16.mxu0 0
        %2251 = vmatpush1.bf16.msra.mxu0 0
        %2252 = vmatprep.subr.bf16.mxu0 0
        %2253 = vmatpush1.bf16.msra.mxu0 0
        %2254 = vmatprep.subr.bf16.mxu0 0
        %2255 = vmatpush1.bf16.msra.mxu0 0
        %2256 = vmatprep.subr.bf16.mxu0 0
        %2257 = vmatpush1.bf16.msra.mxu0 0
        %2258 = vmatprep.subr.bf16.mxu0 0
        %2259 = vmatpush1.bf16.msra.mxu0 0
        %2260 = vmatprep.subr.bf16.mxu0 0
        %2261 = vmatpush1.bf16.msra.mxu0 0
        %2262 = vmatprep.subr.bf16.mxu0 0
        %2263 = vmatpush1.bf16.msra.mxu0 0
        %2264 = vmatprep.subr.bf16.mxu0 0
        %2265 = vmatpush1.bf16.msra.mxu0 0
        %2266 = vmatprep.subr.bf16.mxu0 0
        %2267 = vmatpush1.bf16.msra.mxu0 0
        %2268 = vmatprep.mubr.bf16.mxu0 0
        %2269 = vmatmul.mubr.bf16.gmra.mrb[0].mxu0 %v2234
        %v2270 = vpop.f32.mrb[0].mxu0
        %v2271 = vadd.f32 0.0, %v2270
        %v2272 = vpop.f32.mrb[0].mxu0
        %v2273 = vpop.f32.mrb[0].mxu0
        %v2274 = vadd.f32 0.0, %v2273
        %v2275 = vpop.f32.mrb[0].mxu0
        %2276 = vdwg.mxu0
        %2277 = vrot.lane.b32.xlu0 %v1712, 80
        %v2278 = vpop.permute.xlu0 %2277
        %2279 = vrot.lane.b32.xlu0 %v1808, 80
        %v2280 = vpop.permute.xlu0 %2279
        %v2282 = vsel %vm1911, %v2278, 0
        %v2285 = vsel %vm1911, %v2280, 0
        %2287 = vmatprep.subr.bf16.mxu0 0
        %2288 = vmatpush1.bf16.xpose.msra.mxu0 %v2285
        %2289 = vmatprep.subr.bf16.mxu0 0
        %2290 = vmatpush1.bf16.xpose.msra.mxu0 0
        %2291 = vmatprep.subr.bf16.mxu0 0
        %2292 = vmatpush1.bf16.xpose.msra.mxu0 0
        %2293 = vmatprep.subr.bf16.mxu0 0
        %2294 = vmatpush1.bf16.xpose.msra.mxu0 0
        %2295 = vmatprep.subr.bf16.mxu0 0
        %2296 = vmatpush1.bf16.xpose.msra.mxu0 0
        %2297 = vmatprep.subr.bf16.mxu0 0
        %2298 = vmatpush1.bf16.xpose.msra.mxu0 0
        %2299 = vmatprep.subr.bf16.mxu0 0
        %2300 = vmatpush1.bf16.xpose.msra.mxu0 0
        %2301 = vmatprep.subr.bf16.mxu0 0
        %2302 = vmatpush1.bf16.xpose.msra.mxu0 0
        %2303 = vmatprep.subr.bf16.mxu0 0
        %2304 = vmatpush1.bf16.xpose.msra.mxu0 0
        %2305 = vmatprep.subr.bf16.mxu0 0
        %2306 = vmatpush1.bf16.xpose.msra.mxu0 0
        %2307 = vmatprep.subr.bf16.mxu0 0
        %2308 = vmatpush1.bf16.xpose.msra.mxu0 0
        %2309 = vmatprep.subr.bf16.mxu0 0
        %2310 = vmatpush1.bf16.xpose.msra.mxu0 0
        %2311 = vmatprep.subr.bf16.mxu0 0
        %2312 = vmatpush1.bf16.xpose.msra.mxu0 0
        %2313 = vmatprep.subr.bf16.mxu0 0
        %2314 = vmatpush1.bf16.xpose.msra.mxu0 0
        %2315 = vmatprep.subr.bf16.mxu0 0
        %2316 = vmatpush1.bf16.xpose.msra.mxu0 0
        %2317 = vmatprep.subr.bf16.mxu0 0
        %2318 = vmatpush1.bf16.xpose.msra.mxu0 0
        %2319 = vmatprep.mubr.bf16.mxu0 0
        %2320 = vmatmul.mubr.bf16.gmra.mrb[0].mxu0 %v2282
        %v2321 = vpop.f32.mrb[0].mxu0
        %v2322 = vadd.f32 0.0, %v2321
        %v2323 = vpop.f32.mrb[0].mxu0
        %v2324 = vpop.f32.mrb[0].mxu0
        %v2325 = vadd.f32 0.0, %v2324
        %v2326 = vpop.f32.mrb[0].mxu0
        %2327 = vdwg.mxu0
        %v2328 = vmul.f32 %v2322, 0.25
        %v2329 = vmul.f32 %v2325, 0.25
        %v2330 = vsel %vm1911, %v2328, -inf
        %2331 = vmax.xlane.f32.xlu0 %v2330
        %v2332 = vpop.xlane.xlu0 %2331
        %v2333 = vsel %vm1911, %v2329, -inf
        %2334 = vmax.xlane.f32.xlu0 %v2333
        %v2335 = vpop.xlane.xlu0 %2334
        %v2336 = vsub.f32 %v2328, %v2332
        %v2337 = vsub.f32 %v2329, %v2335
        %v2338 = vmul.f32 %v2336, 1.442695
        %v2339 = vpow.pop %v2338
        %v2340 = vmul.f32 %v2337, 1.442695
        %v2341 = vpow.pop %v2340
        %v2342 = vsel %vm1911, %v2339, 0.0
        %2343 = vadd.xlane.f32.xlu0 %v2342
        %v2344 = vpop.xlane.xlu0 %2343
        %v2345 = vsel %vm1911, %v2341, 0.0
        %2346 = vadd.xlane.f32.xlu0 %v2345
        %v2347 = vpop.xlane.xlu0 %2346
        %v2348 = vrcp.pop %v2344
        %v2349 = vrcp.pop %v2347
        %v2350 = vmul.f32 %v2339, %v2348
        %v2351 = vmul.f32 %v2341, %v2349
        %v2352 = vpack.c.bf16 %v2351, %v2350
        %2353 = vrot.lane.b32.xlu0 %v1910, 80
        %v2354 = vpop.permute.xlu0 %2353
        %v2357 = vsel %vm1911, %v2352, 0
        %2359 = vmatprep.subr.bf16.mxu0 0
        %2360 = vmatpush1.bf16.msra.mxu0 %v2354
        %2361 = vmatprep.subr.bf16.mxu0 0
        %2362 = vmatpush1.bf16.msra.mxu0 0
        %2363 = vmatprep.subr.bf16.mxu0 0
        %2364 = vmatpush1.bf16.msra.mxu0 0
        %2365 = vmatprep.subr.bf16.mxu0 0
        %2366 = vmatpush1.bf16.msra.mxu0 0
        %2367 = vmatprep.subr.bf16.mxu0 0
        %2368 = vmatpush1.bf16.msra.mxu0 0
        %2369 = vmatprep.subr.bf16.mxu0 0
        %2370 = vmatpush1.bf16.msra.mxu0 0
        %2371 = vmatprep.subr.bf16.mxu0 0
        %2372 = vmatpush1.bf16.msra.mxu0 0
        %2373 = vmatprep.subr.bf16.mxu0 0
        %2374 = vmatpush1.bf16.msra.mxu0 0
        %2375 = vmatprep.subr.bf16.mxu0 0
        %2376 = vmatpush1.bf16.msra.mxu0 0
        %2377 = vmatprep.subr.bf16.mxu0 0
        %2378 = vmatpush1.bf16.msra.mxu0 0
        %2379 = vmatprep.subr.bf16.mxu0 0
        %2380 = vmatpush1.bf16.msra.mxu0 0
        %2381 = vmatprep.subr.bf16.mxu0 0
        %2382 = vmatpush1.bf16.msra.mxu0 0
        %2383 = vmatprep.subr.bf16.mxu0 0
        %2384 = vmatpush1.bf16.msra.mxu0 0
        %2385 = vmatprep.subr.bf16.mxu0 0
        %2386 = vmatpush1.bf16.msra.mxu0 0
        %2387 = vmatprep.subr.bf16.mxu0 0
        %2388 = vmatpush1.bf16.msra.mxu0 0
        %2389 = vmatprep.subr.bf16.mxu0 0
        %2390 = vmatpush1.bf16.msra.mxu0 0
        %2391 = vmatprep.mubr.bf16.mxu0 0
        %2392 = vmatmul.mubr.bf16.gmra.mrb[0].mxu0 %v2357
        %v2393 = vpop.f32.mrb[0].mxu0
        %v2394 = vadd.f32 0.0, %v2393
        %v2395 = vpop.f32.mrb[0].mxu0
        %v2396 = vpop.f32.mrb[0].mxu0
        %v2397 = vadd.f32 0.0, %v2396
        %v2398 = vpop.f32.mrb[0].mxu0
        %2399 = vdwg.mxu0
        %2400 = vrot.lane.b32.xlu0 %v1712, 64
        %v2401 = vpop.permute.xlu0 %2400
        %2402 = vrot.lane.b32.xlu0 %v1808, 64
        %v2403 = vpop.permute.xlu0 %2402
        %v2405 = vsel %vm1911, %v2401, 0
        %v2408 = vsel %vm1911, %v2403, 0
        %2410 = vmatprep.subr.bf16.mxu0 0
        %2411 = vmatpush1.bf16.xpose.msra.mxu0 %v2408
        %2412 = vmatprep.subr.bf16.mxu0 0
        %2413 = vmatpush1.bf16.xpose.msra.mxu0 0
        %2414 = vmatprep.subr.bf16.mxu0 0
        %2415 = vmatpush1.bf16.xpose.msra.mxu0 0
        %2416 = vmatprep.subr.bf16.mxu0 0
        %2417 = vmatpush1.bf16.xpose.msra.mxu0 0
        %2418 = vmatprep.subr.bf16.mxu0 0
        %2419 = vmatpush1.bf16.xpose.msra.mxu0 0
        %2420 = vmatprep.subr.bf16.mxu0 0
        %2421 = vmatpush1.bf16.xpose.msra.mxu0 0
        %2422 = vmatprep.subr.bf16.mxu0 0
        %2423 = vmatpush1.bf16.xpose.msra.mxu0 0
        %2424 = vmatprep.subr.bf16.mxu0 0
        %2425 = vmatpush1.bf16.xpose.msra.mxu0 0
        %2426 = vmatprep.subr.bf16.mxu0 0
        %2427 = vmatpush1.bf16.xpose.msra.mxu0 0
        %2428 = vmatprep.subr.bf16.mxu0 0
        %2429 = vmatpush1.bf16.xpose.msra.mxu0 0
        %2430 = vmatprep.subr.bf16.mxu0 0
        %2431 = vmatpush1.bf16.xpose.msra.mxu0 0
        %2432 = vmatprep.subr.bf16.mxu0 0
        %2433 = vmatpush1.bf16.xpose.msra.mxu0 0
        %2434 = vmatprep.subr.bf16.mxu0 0
        %2435 = vmatpush1.bf16.xpose.msra.mxu0 0
        %2436 = vmatprep.subr.bf16.mxu0 0
        %2437 = vmatpush1.bf16.xpose.msra.mxu0 0
        %2438 = vmatprep.subr.bf16.mxu0 0
        %2439 = vmatpush1.bf16.xpose.msra.mxu0 0
        %2440 = vmatprep.subr.bf16.mxu0 0
        %2441 = vmatpush1.bf16.xpose.msra.mxu0 0
        %2442 = vmatprep.mubr.bf16.mxu0 0
        %2443 = vmatmul.mubr.bf16.gmra.mrb[0].mxu0 %v2405
        %v2444 = vpop.f32.mrb[0].mxu0
        %v2445 = vadd.f32 0.0, %v2444
        %v2446 = vpop.f32.mrb[0].mxu0
        %v2447 = vpop.f32.mrb[0].mxu0
        %v2448 = vadd.f32 0.0, %v2447
        %v2449 = vpop.f32.mrb[0].mxu0
        %2450 = vdwg.mxu0
        %v2451 = vmul.f32 %v2445, 0.25
        %v2452 = vmul.f32 %v2448, 0.25
        %v2453 = vsel %vm1911, %v2451, -inf
        %2454 = vmax.xlane.f32.xlu0 %v2453
        %v2455 = vpop.xlane.xlu0 %2454
        %v2456 = vsel %vm1911, %v2452, -inf
        %2457 = vmax.xlane.f32.xlu0 %v2456
        %v2458 = vpop.xlane.xlu0 %2457
        %v2459 = vsub.f32 %v2451, %v2455
        %v2460 = vsub.f32 %v2452, %v2458
        %v2461 = vmul.f32 %v2459, 1.442695
        %v2462 = vpow.pop %v2461
        %v2463 = vmul.f32 %v2460, 1.442695
        %v2464 = vpow.pop %v2463
        %v2465 = vsel %vm1911, %v2462, 0.0
        %2466 = vadd.xlane.f32.xlu0 %v2465
        %v2467 = vpop.xlane.xlu0 %2466
        %v2468 = vsel %vm1911, %v2464, 0.0
        %2469 = vadd.xlane.f32.xlu0 %v2468
        %v2470 = vpop.xlane.xlu0 %2469
        %v2471 = vrcp.pop %v2467
        %v2472 = vrcp.pop %v2470
        %v2473 = vmul.f32 %v2462, %v2471
        %v2474 = vmul.f32 %v2464, %v2472
        %v2475 = vpack.c.bf16 %v2474, %v2473
        %2476 = vrot.lane.b32.xlu0 %v1910, 64
        %v2477 = vpop.permute.xlu0 %2476
        %v2480 = vsel %vm1911, %v2475, 0
        %2482 = vmatprep.subr.bf16.mxu0 0
        %2483 = vmatpush1.bf16.msra.mxu0 %v2477
        %2484 = vmatprep.subr.bf16.mxu0 0
        %2485 = vmatpush1.bf16.msra.mxu0 0
        %2486 = vmatprep.subr.bf16.mxu0 0
        %2487 = vmatpush1.bf16.msra.mxu0 0
        %2488 = vmatprep.subr.bf16.mxu0 0
        %2489 = vmatpush1.bf16.msra.mxu0 0
        %2490 = vmatprep.subr.bf16.mxu0 0
        %2491 = vmatpush1.bf16.msra.mxu0 0
        %2492 = vmatprep.subr.bf16.mxu0 0
        %2493 = vmatpush1.bf16.msra.mxu0 0
        %2494 = vmatprep.subr.bf16.mxu0 0
        %2495 = vmatpush1.bf16.msra.mxu0 0
        %2496 = vmatprep.subr.bf16.mxu0 0
        %2497 = vmatpush1.bf16.msra.mxu0 0
        %2498 = vmatprep.subr.bf16.mxu0 0
        %2499 = vmatpush1.bf16.msra.mxu0 0
        %2500 = vmatprep.subr.bf16.mxu0 0
        %2501 = vmatpush1.bf16.msra.mxu0 0
        %2502 = vmatprep.subr.bf16.mxu0 0
        %2503 = vmatpush1.bf16.msra.mxu0 0
        %2504 = vmatprep.subr.bf16.mxu0 0
        %2505 = vmatpush1.bf16.msra.mxu0 0
        %2506 = vmatprep.subr.bf16.mxu0 0
        %2507 = vmatpush1.bf16.msra.mxu0 0
        %2508 = vmatprep.subr.bf16.mxu0 0
        %2509 = vmatpush1.bf16.msra.mxu0 0
        %2510 = vmatprep.subr.bf16.mxu0 0
        %2511 = vmatpush1.bf16.msra.mxu0 0
        %2512 = vmatprep.subr.bf16.mxu0 0
        %2513 = vmatpush1.bf16.msra.mxu0 0
        %2514 = vmatprep.mubr.bf16.mxu0 0
        %2515 = vmatmul.mubr.bf16.gmra.mrb[0].mxu0 %v2480
        %v2516 = vpop.f32.mrb[0].mxu0
        %v2517 = vadd.f32 0.0, %v2516
        %v2518 = vpop.f32.mrb[0].mxu0
        %v2519 = vpop.f32.mrb[0].mxu0
        %v2520 = vadd.f32 0.0, %v2519
        %v2521 = vpop.f32.mrb[0].mxu0
        %2522 = vdwg.mxu0
        %2523 = vrot.lane.b32.xlu0 %v1712, 48
        %v2524 = vpop.permute.xlu0 %2523
        %2525 = vrot.lane.b32.xlu0 %v1808, 48
        %v2526 = vpop.permute.xlu0 %2525
        %v2528 = vsel %vm1911, %v2524, 0
        %v2531 = vsel %vm1911, %v2526, 0
        %2533 = vmatprep.subr.bf16.mxu0 0
        %2534 = vmatpush1.bf16.xpose.msra.mxu0 %v2531
        %2535 = vmatprep.subr.bf16.mxu0 0
        %2536 = vmatpush1.bf16.xpose.msra.mxu0 0
        %2537 = vmatprep.subr.bf16.mxu0 0
        %2538 = vmatpush1.bf16.xpose.msra.mxu0 0
        %2539 = vmatprep.subr.bf16.mxu0 0
        %2540 = vmatpush1.bf16.xpose.msra.mxu0 0
        %2541 = vmatprep.subr.bf16.mxu0 0
        %2542 = vmatpush1.bf16.xpose.msra.mxu0 0
        %2543 = vmatprep.subr.bf16.mxu0 0
        %2544 = vmatpush1.bf16.xpose.msra.mxu0 0
        %2545 = vmatprep.subr.bf16.mxu0 0
        %2546 = vmatpush1.bf16.xpose.msra.mxu0 0
        %2547 = vmatprep.subr.bf16.mxu0 0
        %2548 = vmatpush1.bf16.xpose.msra.mxu0 0
        %2549 = vmatprep.subr.bf16.mxu0 0
        %2550 = vmatpush1.bf16.xpose.msra.mxu0 0
        %2551 = vmatprep.subr.bf16.mxu0 0
        %2552 = vmatpush1.bf16.xpose.msra.mxu0 0
        %2553 = vmatprep.subr.bf16.mxu0 0
        %2554 = vmatpush1.bf16.xpose.msra.mxu0 0
        %2555 = vmatprep.subr.bf16.mxu0 0
        %2556 = vmatpush1.bf16.xpose.msra.mxu0 0
        %2557 = vmatprep.subr.bf16.mxu0 0
        %2558 = vmatpush1.bf16.xpose.msra.mxu0 0
        %2559 = vmatprep.subr.bf16.mxu0 0
        %2560 = vmatpush1.bf16.xpose.msra.mxu0 0
        %2561 = vmatprep.subr.bf16.mxu0 0
        %2562 = vmatpush1.bf16.xpose.msra.mxu0 0
        %2563 = vmatprep.subr.bf16.mxu0 0
        %2564 = vmatpush1.bf16.xpose.msra.mxu0 0
        %2565 = vmatprep.mubr.bf16.mxu0 0
        %2566 = vmatmul.mubr.bf16.gmra.mrb[0].mxu0 %v2528
        %v2567 = vpop.f32.mrb[0].mxu0
        %v2568 = vadd.f32 0.0, %v2567
        %v2569 = vpop.f32.mrb[0].mxu0
        %v2570 = vpop.f32.mrb[0].mxu0
        %v2571 = vadd.f32 0.0, %v2570
        %v2572 = vpop.f32.mrb[0].mxu0
        %2573 = vdwg.mxu0
        %v2574 = vmul.f32 %v2568, 0.25
        %v2575 = vmul.f32 %v2571, 0.25
        %v2576 = vsel %vm1911, %v2574, -inf
        %2577 = vmax.xlane.f32.xlu0 %v2576
        %v2578 = vpop.xlane.xlu0 %2577
        %v2579 = vsel %vm1911, %v2575, -inf
        %2580 = vmax.xlane.f32.xlu0 %v2579
        %v2581 = vpop.xlane.xlu0 %2580
        %v2582 = vsub.f32 %v2574, %v2578
        %v2583 = vsub.f32 %v2575, %v2581
        %v2584 = vmul.f32 %v2582, 1.442695
        %v2585 = vpow.pop %v2584
        %v2586 = vmul.f32 %v2583, 1.442695
        %v2587 = vpow.pop %v2586
        %v2588 = vsel %vm1911, %v2585, 0.0
        %2589 = vadd.xlane.f32.xlu0 %v2588
        %v2590 = vpop.xlane.xlu0 %2589
        %v2591 = vsel %vm1911, %v2587, 0.0
        %2592 = vadd.xlane.f32.xlu0 %v2591
        %v2593 = vpop.xlane.xlu0 %2592
        %v2594 = vrcp.pop %v2590
        %v2595 = vrcp.pop %v2593
        %v2596 = vmul.f32 %v2585, %v2594
        %v2597 = vmul.f32 %v2587, %v2595
        %v2598 = vpack.c.bf16 %v2597, %v2596
        %2599 = vrot.lane.b32.xlu0 %v1910, 48
        %v2600 = vpop.permute.xlu0 %2599
        %v2603 = vsel %vm1911, %v2598, 0
        %2605 = vmatprep.subr.bf16.mxu0 0
        %2606 = vmatpush1.bf16.msra.mxu0 %v2600
        %2607 = vmatprep.subr.bf16.mxu0 0
        %2608 = vmatpush1.bf16.msra.mxu0 0
        %2609 = vmatprep.subr.bf16.mxu0 0
        %2610 = vmatpush1.bf16.msra.mxu0 0
        %2611 = vmatprep.subr.bf16.mxu0 0
        %2612 = vmatpush1.bf16.msra.mxu0 0
        %2613 = vmatprep.subr.bf16.mxu0 0
        %2614 = vmatpush1.bf16.msra.mxu0 0
        %2615 = vmatprep.subr.bf16.mxu0 0
        %2616 = vmatpush1.bf16.msra.mxu0 0
        %2617 = vmatprep.subr.bf16.mxu0 0
        %2618 = vmatpush1.bf16.msra.mxu0 0
        %2619 = vmatprep.subr.bf16.mxu0 0
        %2620 = vmatpush1.bf16.msra.mxu0 0
        %2621 = vmatprep.subr.bf16.mxu0 0
        %2622 = vmatpush1.bf16.msra.mxu0 0
        %2623 = vmatprep.subr.bf16.mxu0 0
        %2624 = vmatpush1.bf16.msra.mxu0 0
        %2625 = vmatprep.subr.bf16.mxu0 0
        %2626 = vmatpush1.bf16.msra.mxu0 0
        %2627 = vmatprep.subr.bf16.mxu0 0
        %2628 = vmatpush1.bf16.msra.mxu0 0
        %2629 = vmatprep.subr.bf16.mxu0 0
        %2630 = vmatpush1.bf16.msra.mxu0 0
        %2631 = vmatprep.subr.bf16.mxu0 0
        %2632 = vmatpush1.bf16.msra.mxu0 0
        %2633 = vmatprep.subr.bf16.mxu0 0
        %2634 = vmatpush1.bf16.msra.mxu0 0
        %2635 = vmatprep.subr.bf16.mxu0 0
        %2636 = vmatpush1.bf16.msra.mxu0 0
        %2637 = vmatprep.mubr.bf16.mxu0 0
        %2638 = vmatmul.mubr.bf16.gmra.mrb[0].mxu0 %v2603
        %v2639 = vpop.f32.mrb[0].mxu0
        %v2640 = vadd.f32 0.0, %v2639
        %v2641 = vpop.f32.mrb[0].mxu0
        %v2642 = vpop.f32.mrb[0].mxu0
        %v2643 = vadd.f32 0.0, %v2642
        %v2644 = vpop.f32.mrb[0].mxu0
        %2645 = vdwg.mxu0
        %2646 = vrot.lane.b32.xlu0 %v1712, 32
        %v2647 = vpop.permute.xlu0 %2646
        %2648 = vrot.lane.b32.xlu0 %v1808, 32
        %v2649 = vpop.permute.xlu0 %2648
        %v2651 = vsel %vm1911, %v2647, 0
        %v2654 = vsel %vm1911, %v2649, 0
        %2656 = vmatprep.subr.bf16.mxu0 0
        %2657 = vmatpush1.bf16.xpose.msra.mxu0 %v2654
        %2658 = vmatprep.subr.bf16.mxu0 0
        %2659 = vmatpush1.bf16.xpose.msra.mxu0 0
        %2660 = vmatprep.subr.bf16.mxu0 0
        %2661 = vmatpush1.bf16.xpose.msra.mxu0 0
        %2662 = vmatprep.subr.bf16.mxu0 0
        %2663 = vmatpush1.bf16.xpose.msra.mxu0 0
        %2664 = vmatprep.subr.bf16.mxu0 0
        %2665 = vmatpush1.bf16.xpose.msra.mxu0 0
        %2666 = vmatprep.subr.bf16.mxu0 0
        %2667 = vmatpush1.bf16.xpose.msra.mxu0 0
        %2668 = vmatprep.subr.bf16.mxu0 0
        %2669 = vmatpush1.bf16.xpose.msra.mxu0 0
        %2670 = vmatprep.subr.bf16.mxu0 0
        %2671 = vmatpush1.bf16.xpose.msra.mxu0 0
        %2672 = vmatprep.subr.bf16.mxu0 0
        %2673 = vmatpush1.bf16.xpose.msra.mxu0 0
        %2674 = vmatprep.subr.bf16.mxu0 0
        %2675 = vmatpush1.bf16.xpose.msra.mxu0 0
        %2676 = vmatprep.subr.bf16.mxu0 0
        %2677 = vmatpush1.bf16.xpose.msra.mxu0 0
        %2678 = vmatprep.subr.bf16.mxu0 0
        %2679 = vmatpush1.bf16.xpose.msra.mxu0 0
        %2680 = vmatprep.subr.bf16.mxu0 0
        %2681 = vmatpush1.bf16.xpose.msra.mxu0 0
        %2682 = vmatprep.subr.bf16.mxu0 0
        %2683 = vmatpush1.bf16.xpose.msra.mxu0 0
        %2684 = vmatprep.subr.bf16.mxu0 0
        %2685 = vmatpush1.bf16.xpose.msra.mxu0 0
        %2686 = vmatprep.subr.bf16.mxu0 0
        %2687 = vmatpush1.bf16.xpose.msra.mxu0 0
        %2688 = vmatprep.mubr.bf16.mxu0 0
        %2689 = vmatmul.mubr.bf16.gmra.mrb[0].mxu0 %v2651
        %v2690 = vpop.f32.mrb[0].mxu0
        %v2691 = vadd.f32 0.0, %v2690
        %v2692 = vpop.f32.mrb[0].mxu0
        %v2693 = vpop.f32.mrb[0].mxu0
        %v2694 = vadd.f32 0.0, %v2693
        %v2695 = vpop.f32.mrb[0].mxu0
        %2696 = vdwg.mxu0
        %v2697 = vmul.f32 %v2691, 0.25
        %v2698 = vmul.f32 %v2694, 0.25
        %v2699 = vsel %vm1911, %v2697, -inf
        %2700 = vmax.xlane.f32.xlu0 %v2699
        %v2701 = vpop.xlane.xlu0 %2700
        %v2702 = vsel %vm1911, %v2698, -inf
        %2703 = vmax.xlane.f32.xlu0 %v2702
        %v2704 = vpop.xlane.xlu0 %2703
        %v2705 = vsub.f32 %v2697, %v2701
        %v2706 = vsub.f32 %v2698, %v2704
        %v2707 = vmul.f32 %v2705, 1.442695
        %v2708 = vpow.pop %v2707
        %v2709 = vmul.f32 %v2706, 1.442695
        %v2710 = vpow.pop %v2709
        %v2711 = vsel %vm1911, %v2708, 0.0
        %2712 = vadd.xlane.f32.xlu0 %v2711
        %v2713 = vpop.xlane.xlu0 %2712
        %v2714 = vsel %vm1911, %v2710, 0.0
        %2715 = vadd.xlane.f32.xlu0 %v2714
        %v2716 = vpop.xlane.xlu0 %2715
        %v2717 = vrcp.pop %v2713
        %v2718 = vrcp.pop %v2716
        %v2719 = vmul.f32 %v2708, %v2717
        %v2720 = vmul.f32 %v2710, %v2718
        %v2721 = vpack.c.bf16 %v2720, %v2719
        %2722 = vrot.lane.b32.xlu0 %v1910, 32
        %v2723 = vpop.permute.xlu0 %2722
        %v2726 = vsel %vm1911, %v2721, 0
        %2728 = vmatprep.subr.bf16.mxu0 0
        %2729 = vmatpush1.bf16.msra.mxu0 %v2723
        %2730 = vmatprep.subr.bf16.mxu0 0
        %2731 = vmatpush1.bf16.msra.mxu0 0
        %2732 = vmatprep.subr.bf16.mxu0 0
        %2733 = vmatpush1.bf16.msra.mxu0 0
        %2734 = vmatprep.subr.bf16.mxu0 0
        %2735 = vmatpush1.bf16.msra.mxu0 0
        %2736 = vmatprep.subr.bf16.mxu0 0
        %2737 = vmatpush1.bf16.msra.mxu0 0
        %2738 = vmatprep.subr.bf16.mxu0 0
        %2739 = vmatpush1.bf16.msra.mxu0 0
        %2740 = vmatprep.subr.bf16.mxu0 0
        %2741 = vmatpush1.bf16.msra.mxu0 0
        %2742 = vmatprep.subr.bf16.mxu0 0
        %2743 = vmatpush1.bf16.msra.mxu0 0
        %2744 = vmatprep.subr.bf16.mxu0 0
        %2745 = vmatpush1.bf16.msra.mxu0 0
        %2746 = vmatprep.subr.bf16.mxu0 0
        %2747 = vmatpush1.bf16.msra.mxu0 0
        %2748 = vmatprep.subr.bf16.mxu0 0
        %2749 = vmatpush1.bf16.msra.mxu0 0
        %2750 = vmatprep.subr.bf16.mxu0 0
        %2751 = vmatpush1.bf16.msra.mxu0 0
        %2752 = vmatprep.subr.bf16.mxu0 0
        %2753 = vmatpush1.bf16.msra.mxu0 0
        %2754 = vmatprep.subr.bf16.mxu0 0
        %2755 = vmatpush1.bf16.msra.mxu0 0
        %2756 = vmatprep.subr.bf16.mxu0 0
        %2757 = vmatpush1.bf16.msra.mxu0 0
        %2758 = vmatprep.subr.bf16.mxu0 0
        %2759 = vmatpush1.bf16.msra.mxu0 0
        %2760 = vmatprep.mubr.bf16.mxu0 0
        %2761 = vmatmul.mubr.bf16.gmra.mrb[0].mxu0 %v2726
        %v2762 = vpop.f32.mrb[0].mxu0
        %v2763 = vadd.f32 0.0, %v2762
        %v2764 = vpop.f32.mrb[0].mxu0
        %v2765 = vpop.f32.mrb[0].mxu0
        %v2766 = vadd.f32 0.0, %v2765
        %v2767 = vpop.f32.mrb[0].mxu0
        %2768 = vdwg.mxu0
        %2769 = vrot.lane.b32.xlu0 %v1712, 16
        %v2770 = vpop.permute.xlu0 %2769
        %2771 = vrot.lane.b32.xlu0 %v1808, 16
        %v2772 = vpop.permute.xlu0 %2771
        %v2774 = vsel %vm1911, %v2770, 0
        %v2777 = vsel %vm1911, %v2772, 0
        %2779 = vmatprep.subr.bf16.mxu0 0
        %2780 = vmatpush1.bf16.xpose.msra.mxu0 %v2777
        %2781 = vmatprep.subr.bf16.mxu0 0
        %2782 = vmatpush1.bf16.xpose.msra.mxu0 0
        %2783 = vmatprep.subr.bf16.mxu0 0
        %2784 = vmatpush1.bf16.xpose.msra.mxu0 0
        %2785 = vmatprep.subr.bf16.mxu0 0
        %2786 = vmatpush1.bf16.xpose.msra.mxu0 0
        %2787 = vmatprep.subr.bf16.mxu0 0
        %2788 = vmatpush1.bf16.xpose.msra.mxu0 0
        %2789 = vmatprep.subr.bf16.mxu0 0
        %2790 = vmatpush1.bf16.xpose.msra.mxu0 0
        %2791 = vmatprep.subr.bf16.mxu0 0
        %2792 = vmatpush1.bf16.xpose.msra.mxu0 0
        %2793 = vmatprep.subr.bf16.mxu0 0
        %2794 = vmatpush1.bf16.xpose.msra.mxu0 0
        %2795 = vmatprep.subr.bf16.mxu0 0
        %2796 = vmatpush1.bf16.xpose.msra.mxu0 0
        %2797 = vmatprep.subr.bf16.mxu0 0
        %2798 = vmatpush1.bf16.xpose.msra.mxu0 0
        %2799 = vmatprep.subr.bf16.mxu0 0
        %2800 = vmatpush1.bf16.xpose.msra.mxu0 0
        %2801 = vmatprep.subr.bf16.mxu0 0
        %2802 = vmatpush1.bf16.xpose.msra.mxu0 0
        %2803 = vmatprep.subr.bf16.mxu0 0
        %2804 = vmatpush1.bf16.xpose.msra.mxu0 0
        %2805 = vmatprep.subr.bf16.mxu0 0
        %2806 = vmatpush1.bf16.xpose.msra.mxu0 0
        %2807 = vmatprep.subr.bf16.mxu0 0
        %2808 = vmatpush1.bf16.xpose.msra.mxu0 0
        %2809 = vmatprep.subr.bf16.mxu0 0
        %2810 = vmatpush1.bf16.xpose.msra.mxu0 0
        %2811 = vmatprep.mubr.bf16.mxu0 0
        %2812 = vmatmul.mubr.bf16.gmra.mrb[0].mxu0 %v2774
        %v2813 = vpop.f32.mrb[0].mxu0
        %v2814 = vadd.f32 0.0, %v2813
        %v2815 = vpop.f32.mrb[0].mxu0
        %v2816 = vpop.f32.mrb[0].mxu0
        %v2817 = vadd.f32 0.0, %v2816
        %v2818 = vpop.f32.mrb[0].mxu0
        %2819 = vdwg.mxu0
        %v2820 = vmul.f32 %v2814, 0.25
        %v2821 = vmul.f32 %v2817, 0.25
        %v2822 = vsel %vm1911, %v2820, -inf
        %2823 = vmax.xlane.f32.xlu0 %v2822
        %v2824 = vpop.xlane.xlu0 %2823
        %v2825 = vsel %vm1911, %v2821, -inf
        %2826 = vmax.xlane.f32.xlu0 %v2825
        %v2827 = vpop.xlane.xlu0 %2826
        %v2828 = vsub.f32 %v2820, %v2824
        %v2829 = vsub.f32 %v2821, %v2827
        %v2830 = vmul.f32 %v2828, 1.442695
        %v2831 = vpow.pop %v2830
        %v2832 = vmul.f32 %v2829, 1.442695
        %v2833 = vpow.pop %v2832
        %v2834 = vsel %vm1911, %v2831, 0.0
        %2835 = vadd.xlane.f32.xlu0 %v2834
        %v2836 = vpop.xlane.xlu0 %2835
        %v2837 = vsel %vm1911, %v2833, 0.0
        %2838 = vadd.xlane.f32.xlu0 %v2837
        %v2839 = vpop.xlane.xlu0 %2838
        %v2840 = vrcp.pop %v2836
        %v2841 = vrcp.pop %v2839
        %v2842 = vmul.f32 %v2831, %v2840
        %v2843 = vmul.f32 %v2833, %v2841
        %v2844 = vpack.c.bf16 %v2843, %v2842
        %2845 = vrot.lane.b32.xlu0 %v1910, 16
        %v2846 = vpop.permute.xlu0 %2845
        %v2849 = vsel %vm1911, %v2844, 0
        %2851 = vmatprep.subr.bf16.mxu0 0
        %2852 = vmatpush1.bf16.msra.mxu0 %v2846
        %2853 = vmatprep.subr.bf16.mxu0 0
        %2854 = vmatpush1.bf16.msra.mxu0 0
        %2855 = vmatprep.subr.bf16.mxu0 0
        %2856 = vmatpush1.bf16.msra.mxu0 0
        %2857 = vmatprep.subr.bf16.mxu0 0
        %2858 = vmatpush1.bf16.msra.mxu0 0
        %2859 = vmatprep.subr.bf16.mxu0 0
        %2860 = vmatpush1.bf16.msra.mxu0 0
        %2861 = vmatprep.subr.bf16.mxu0 0
        %2862 = vmatpush1.bf16.msra.mxu0 0
        %2863 = vmatprep.subr.bf16.mxu0 0
        %2864 = vmatpush1.bf16.msra.mxu0 0
        %2865 = vmatprep.subr.bf16.mxu0 0
        %2866 = vmatpush1.bf16.msra.mxu0 0
        %2867 = vmatprep.subr.bf16.mxu0 0
        %2868 = vmatpush1.bf16.msra.mxu0 0
        %2869 = vmatprep.subr.bf16.mxu0 0
        %2870 = vmatpush1.bf16.msra.mxu0 0
        %2871 = vmatprep.subr.bf16.mxu0 0
        %2872 = vmatpush1.bf16.msra.mxu0 0
        %2873 = vmatprep.subr.bf16.mxu0 0
        %2874 = vmatpush1.bf16.msra.mxu0 0
        %2875 = vmatprep.subr.bf16.mxu0 0
        %2876 = vmatpush1.bf16.msra.mxu0 0
        %2877 = vmatprep.subr.bf16.mxu0 0
        %2878 = vmatpush1.bf16.msra.mxu0 0
        %2879 = vmatprep.subr.bf16.mxu0 0
        %2880 = vmatpush1.bf16.msra.mxu0 0
        %2881 = vmatprep.subr.bf16.mxu0 0
        %2882 = vmatpush1.bf16.msra.mxu0 0
        %2883 = vmatprep.mubr.bf16.mxu0 0
        %2884 = vmatmul.mubr.bf16.gmra.mrb[0].mxu0 %v2849
        %v2885 = vpop.f32.mrb[0].mxu0
        %v2886 = vadd.f32 0.0, %v2885
        %v2887 = vpop.f32.mrb[0].mxu0
        %v2888 = vpop.f32.mrb[0].mxu0
        %v2889 = vadd.f32 0.0, %v2888
        %v2890 = vpop.f32.mrb[0].mxu0
        %2891 = vdwg.mxu0
        %2894 = vrot.lane.b32.xlu0 %v2148, 16
        %v2895 = vpop.permute.xlu0 %2894
        %2896 = vrot.lane.b32.xlu0 %v2151, 16
        %v2897 = vpop.permute.xlu0 %2896
        %2902 = vrot.lane.b32.xlu0 %v2271, 32
        %v2903 = vpop.permute.xlu0 %2902
        %2904 = vrot.lane.b32.xlu0 %v2274, 32
        %v2905 = vpop.permute.xlu0 %2904
        %2910 = vrot.lane.b32.xlu0 %v2394, 48
        %v2911 = vpop.permute.xlu0 %2910
        %2912 = vrot.lane.b32.xlu0 %v2397, 48
        %v2913 = vpop.permute.xlu0 %2912
        %2918 = vrot.lane.b32.xlu0 %v2517, 64
        %v2919 = vpop.permute.xlu0 %2918
        %2920 = vrot.lane.b32.xlu0 %v2520, 64
        %v2921 = vpop.permute.xlu0 %2920
        %2926 = vrot.lane.b32.xlu0 %v2640, 80
        %v2927 = vpop.permute.xlu0 %2926
        %2928 = vrot.lane.b32.xlu0 %v2643, 80
        %v2929 = vpop.permute.xlu0 %2928
        %2934 = vrot.lane.b32.xlu0 %v2763, 96
        %v2935 = vpop.permute.xlu0 %2934
        %2936 = vrot.lane.b32.xlu0 %v2766, 96
        %v2937 = vpop.permute.xlu0 %2936
        %2942 = vrot.lane.b32.xlu0 %v2886, 112
        %v2943 = vpop.permute.xlu0 %2942
        %2944 = vrot.lane.b32.xlu0 %v2889, 112
        %v2945 = vpop.permute.xlu0 %2944
        %v2948 = vsel %vm1911, %v2022, %v2895
        %v2949 = vsel %vm1911, %v2025, %v2897
        %vm2950 = vcmask 261120
        %v2951 = vsel %vm2950, %v2948, %v2903
        %v2952 = vsel %vm2950, %v2949, %v2905
        %vm2953 = vcmask 392192
        %v2954 = vsel %vm2953, %v2951, %v2911
        %v2955 = vsel %vm2953, %v2952, %v2913
        %vm2956 = vcmask 523264
        %v2957 = vsel %vm2956, %v2954, %v2919
        %v2958 = vsel %vm2956, %v2955, %v2921
        %vm2959 = vcmask 654336
        %v2960 = vsel %vm2959, %v2957, %v2927
        %v2961 = vsel %vm2959, %v2958, %v2929
        %vm2962 = vcmask 785408
        %v2963 = vsel %vm2962, %v2960, %v2935
        %v2964 = vsel %vm2962, %v2961, %v2937
        %vm2965 = vcmask 916480
        %v2966 = vsel %vm2965, %v2963, %v2943
        %v2967 = vsel %vm2965, %v2964, %v2945
        %v2968 = vpack.c.bf16 %v2967, %v2966
        %v2970 = vlaneseq
        %v2971 = vshrl.u32 %v2970, 7
        %v2972 = vsub.s32 0, %v2971
        %v2973 = vrot.slane %v1616, %v2972
        %v2991 = vunpack.c.l.b16 %v1600
        %v2992 = vunpack.c.l.b16 %v1601
        %v2993 = vunpack.c.l.b16 %v1602
        %v2994 = vunpack.c.l.b16 %v1603
        %v2995 = vunpack.c.l.b16 %v1604
        %v2996 = vunpack.c.l.b16 %v1605
        %v2997 = vunpack.c.l.b16 %v1606
        %v2998 = vunpack.c.l.b16 %v1607
        %v2999 = vunpack.c.l.b16 %v1608
        %v3000 = vunpack.c.l.b16 %v1609
        %v3001 = vunpack.c.l.b16 %v1610
        %v3002 = vunpack.c.l.b16 %v1611
        %v3003 = vunpack.c.l.b16 %v1612
        %v3004 = vunpack.c.l.b16 %v1613
        %v3005 = vunpack.c.l.b16 %v1614
        %v3006 = vunpack.c.l.b16 %v1615
        %v3007 = vpack.c.b16 %v2992, %v2991
        %v3008 = vpack.c.b16 %v2994, %v2993
        %v3009 = vpack.c.b16 %v2996, %v2995
        %v3010 = vpack.c.b16 %v2998, %v2997
        %v3011 = vpack.c.b16 %v3000, %v2999
        %v3012 = vpack.c.b16 %v3002, %v3001
        %v3013 = vpack.c.b16 %v3004, %v3003
        %v3014 = vpack.c.b16 %v3006, %v3005
        %3023 = vmatprep.subr.bf16.mxu0 0
        %3024 = vmatpush1.bf16.msra.mxu0 %v3007
        %3025 = vmatprep.subr.bf16.mxu0 0
        %3026 = vmatpush1.bf16.msra.mxu0 %v3008
        %3027 = vmatprep.subr.bf16.mxu0 0
        %3028 = vmatpush1.bf16.msra.mxu0 %v3009
        %3029 = vmatprep.subr.bf16.mxu0 0
        %3030 = vmatpush1.bf16.msra.mxu0 %v3010
        %3031 = vmatprep.subr.bf16.mxu0 0
        %3032 = vmatpush1.bf16.msra.mxu0 %v3011
        %3033 = vmatprep.subr.bf16.mxu0 0
        %3034 = vmatpush1.bf16.msra.mxu0 %v3012
        %3035 = vmatprep.subr.bf16.mxu0 0
        %3036 = vmatpush1.bf16.msra.mxu0 %v3013
        %3037 = vmatprep.subr.bf16.mxu0 0
        %3038 = vmatpush1.bf16.msra.mxu0 %v3014
        %3039 = vmatprep.subr.bf16.mxu0 0
        %3040 = vmatpush1.bf16.msra.mxu0 0
        %3041 = vmatprep.subr.bf16.mxu0 0
        %3042 = vmatpush1.bf16.msra.mxu0 0
        %3043 = vmatprep.subr.bf16.mxu0 0
        %3044 = vmatpush1.bf16.msra.mxu0 0
        %3045 = vmatprep.subr.bf16.mxu0 0
        %3046 = vmatpush1.bf16.msra.mxu0 0
        %3047 = vmatprep.subr.bf16.mxu0 0
        %3048 = vmatpush1.bf16.msra.mxu0 0
        %3049 = vmatprep.subr.bf16.mxu0 0
        %3050 = vmatpush1.bf16.msra.mxu0 0
        %3051 = vmatprep.subr.bf16.mxu0 0
        %3052 = vmatpush1.bf16.msra.mxu0 0
        %3053 = vmatprep.subr.bf16.mxu0 0
        %3054 = vmatpush1.bf16.msra.mxu0 0
        %3055 = vmatprep.mubr.bf16.mxu0 0
        %3056 = vmatmul.mubr.bf16.gmra.mrb[0].mxu0 %v2968
        %v3057 = vpop.f32.mrb[0].mxu0
        %v3058 = vadd.f32 %v2973, %v3057
        %v3059 = vpop.f32.mrb[0].mxu0
        %v3060 = vpop.f32.mrb[0].mxu0
        %v3061 = vadd.f32 %v2973, %v3060
        %v3062 = vpop.f32.mrb[0].mxu0
        %3063 = vdwg.mxu0
        %v3064 = vadd.f32 %v1544, %v3058
        %v3065 = vadd.f32 %v1545, %v3061
        %v3066 = vld [vmem:[#allocation22] sm:$0x1]
        %v3067 = vld [vmem:[#allocation23] sm:$0x1]
        %3068 = vadd.xlane.f32.xlu0 %v3064
        %v3069 = vpop.xlane.xlu0 %3068
        %3070 = vadd.xlane.f32.xlu0 %v3065
        %v3071 = vpop.xlane.xlu0 %3070
        %v3072 = vrcp.pop 128.0
        %v3073 = vmul.f32 %v3069, %v3072
        %v3074 = vmul.f32 %v3071, %v3072
        %v3075 = vsub.f32 %v3064, %v3073
        %v3076 = vsub.f32 %v3065, %v3074
        %v3077 = vmul.f32 %v3075, %v3075
        %v3078 = vmul.f32 %v3076, %v3076
        %3079 = vadd.xlane.f32.xlu0 %v3077
        %v3080 = vpop.xlane.xlu0 %3079
        %3081 = vadd.xlane.f32.xlu0 %v3078
        %v3082 = vpop.xlane.xlu0 %3081
        %v3083 = vmul.f32 %v3080, %v3072
        %v3084 = vmul.f32 %v3082, %v3072
        %v3085 = vadd.f32 %v3083, 1e-05
        %v3086 = vadd.f32 %v3084, 1e-05
        %v3087 = vrsqrt.pop %v3085
        %v3088 = vrsqrt.pop %v3086
        %v3089 = vmul.f32 %v3075, %v3087
        %v3090 = vmul.f32 %v3076, %v3088
        %v3092 = vlaneseq
        %v3093 = vshrl.u32 %v3092, 7
        %v3094 = vsub.s32 0, %v3093
        %v3095 = vrot.slane %v3066, %v3094
        %v3097 = vmul.f32 %v3089, %v3095
        %v3098 = vmul.f32 %v3090, %v3095
        %v3100 = vlaneseq
        %v3101 = vshrl.u32 %v3100, 7
        %v3102 = vsub.s32 0, %v3101
        %v3103 = vrot.slane %v3067, %v3102
        %v3105 = vadd.f32 %v3097, %v3103
        %v3106 = vadd.f32 %v3098, %v3103
        %v3107 = vadd.f32 %v3105, %v1542
        %v3108 = vadd.f32 %v3106, %v1543
        %v3109 = vpack.c.bf16 %v3108, %v3107
        %v3110 = vld [vmem:[%s1307] sm:$0xf]
        %v3111 = vld [vmem:[%s1307 + $0x4] sm:$0xf]
        %v3112 = vld [vmem:[%s1307 + $0x8] sm:$0xf]
        %v3113 = vld [vmem:[%s1307 + $0xc] sm:$0xf]
        %v3114 = vld [vmem:[%s1316] sm:$0xf]
        %v3115 = vld [vmem:[%s1316 + $0x4] sm:$0xf]
        %v3116 = vld [vmem:[%s1316 + $0x8] sm:$0xf]
        %v3117 = vld [vmem:[%s1316 + $0xc] sm:$0xf]
        %v3118 = vld [vmem:[#allocation25] sm:$0xf]
        %v3119 = vld [vmem:[#allocation25 + $0x4] sm:$0xf]
        %v3120 = vld [vmem:[#allocation25 + $0x8] sm:$0xf]
        %v3121 = vld [vmem:[#allocation25 + $0xc] sm:$0xf]
        %v3122 = vld [vmem:[#allocation25 + $0x10] sm:$0xf]
        %v3123 = vld [vmem:[#allocation25 + $0x14] sm:$0xf]
        %v3124 = vld [vmem:[#allocation25 + $0x18] sm:$0xf]
        %v3125 = vld [vmem:[#allocation25 + $0x1c] sm:$0xf]
        %v3126 = vld [vmem:[#allocation25 + $0x20] sm:$0xf]
        %v3127 = vld [vmem:[#allocation25 + $0x24] sm:$0xf]
        %v3128 = vld [vmem:[#allocation25 + $0x28] sm:$0xf]
        %v3129 = vld [vmem:[#allocation25 + $0x2c] sm:$0xf]
        %v3130 = vld [vmem:[#allocation25 + $0x30] sm:$0xf]
        %v3131 = vld [vmem:[#allocation25 + $0x34] sm:$0xf]
        %v3132 = vld [vmem:[#allocation25 + $0x38] sm:$0xf]
        %v3133 = vld [vmem:[#allocation25 + $0x3c] sm:$0xf]
        %v3134 = vld [vmem:[#allocation26] sm:$0x1]
        %v3135 = vld [vmem:[#allocation28] sm:$0xf]
        %v3136 = vld [vmem:[#allocation28 + $0x4] sm:$0xf]
        %v3137 = vld [vmem:[#allocation28 + $0x8] sm:$0xf]
        %v3138 = vld [vmem:[#allocation28 + $0xc] sm:$0xf]
        %v3139 = vld [vmem:[#allocation28 + $0x10] sm:$0xf]
        %v3140 = vld [vmem:[#allocation28 + $0x14] sm:$0xf]
        %v3141 = vld [vmem:[#allocation28 + $0x18] sm:$0xf]
        %v3142 = vld [vmem:[#allocation28 + $0x1c] sm:$0xf]
        %v3143 = vld [vmem:[#allocation28 + $0x20] sm:$0xf]
        %v3144 = vld [vmem:[#allocation28 + $0x24] sm:$0xf]
        %v3145 = vld [vmem:[#allocation28 + $0x28] sm:$0xf]
        %v3146 = vld [vmem:[#allocation28 + $0x2c] sm:$0xf]
        %v3147 = vld [vmem:[#allocation28 + $0x30] sm:$0xf]
        %v3148 = vld [vmem:[#allocation28 + $0x34] sm:$0xf]
        %v3149 = vld [vmem:[#allocation28 + $0x38] sm:$0xf]
        %v3150 = vld [vmem:[#allocation28 + $0x3c] sm:$0xf]
        %v3151 = vld [vmem:[#allocation29] sm:$0x1]
        %v3152 = vld [vmem:[#allocation31] sm:$0xf]
        %v3153 = vld [vmem:[#allocation31 + $0x4] sm:$0xf]
        %v3154 = vld [vmem:[#allocation31 + $0x8] sm:$0xf]
        %v3155 = vld [vmem:[#allocation31 + $0xc] sm:$0xf]
        %v3156 = vld [vmem:[#allocation31 + $0x10] sm:$0xf]
        %v3157 = vld [vmem:[#allocation31 + $0x14] sm:$0xf]
        %v3158 = vld [vmem:[#allocation31 + $0x18] sm:$0xf]
        %v3159 = vld [vmem:[#allocation31 + $0x1c] sm:$0xf]
        %v3160 = vld [vmem:[#allocation31 + $0x20] sm:$0xf]
        %v3161 = vld [vmem:[#allocation31 + $0x24] sm:$0xf]
        %v3162 = vld [vmem:[#allocation31 + $0x28] sm:$0xf]
        %v3163 = vld [vmem:[#allocation31 + $0x2c] sm:$0xf]
        %v3164 = vld [vmem:[#allocation31 + $0x30] sm:$0xf]
        %v3165 = vld [vmem:[#allocation31 + $0x34] sm:$0xf]
        %v3166 = vld [vmem:[#allocation31 + $0x38] sm:$0xf]
        %v3167 = vld [vmem:[#allocation31 + $0x3c] sm:$0xf]
        %v3168 = vld [vmem:[#allocation32] sm:$0x1]
        %v3169 = vld [vmem:[#allocation34] sm:$0xf]
        %v3170 = vld [vmem:[#allocation34 + $0x4] sm:$0xf]
        %v3171 = vld [vmem:[#allocation34 + $0x8] sm:$0xf]
        %v3172 = vld [vmem:[#allocation34 + $0xc] sm:$0xf]
        %v3173 = vld [vmem:[#allocation34 + $0x10] sm:$0xf]
        %v3174 = vld [vmem:[#allocation34 + $0x14] sm:$0xf]
        %v3175 = vld [vmem:[#allocation34 + $0x18] sm:$0xf]
        %v3176 = vld [vmem:[#allocation34 + $0x1c] sm:$0xf]
        %v3177 = vld [vmem:[#allocation34 + $0x20] sm:$0xf]
        %v3178 = vld [vmem:[#allocation34 + $0x24] sm:$0xf]
        %v3179 = vld [vmem:[#allocation34 + $0x28] sm:$0xf]
        %v3180 = vld [vmem:[#allocation34 + $0x2c] sm:$0xf]
        %v3181 = vld [vmem:[#allocation34 + $0x30] sm:$0xf]
        %v3182 = vld [vmem:[#allocation34 + $0x34] sm:$0xf]
        %v3183 = vld [vmem:[#allocation34 + $0x38] sm:$0xf]
        %v3184 = vld [vmem:[#allocation34 + $0x3c] sm:$0xf]
        %v3185 = vld [vmem:[#allocation35] sm:$0x1]
        %v3187 = vlaneseq
        %v3188 = vshrl.u32 %v3187, 7
        %v3189 = vsub.s32 0, %v3188
        %v3190 = vrot.slane %v3134, %v3189
        %v3208 = vunpack.c.l.b16 %v3118
        %v3209 = vunpack.c.l.b16 %v3119
        %v3210 = vunpack.c.l.b16 %v3120
        %v3211 = vunpack.c.l.b16 %v3121
        %v3212 = vunpack.c.l.b16 %v3122
        %v3213 = vunpack.c.l.b16 %v3123
        %v3214 = vunpack.c.l.b16 %v3124
        %v3215 = vunpack.c.l.b16 %v3125
        %v3216 = vunpack.c.l.b16 %v3126
        %v3217 = vunpack.c.l.b16 %v3127
        %v3218 = vunpack.c.l.b16 %v3128
        %v3219 = vunpack.c.l.b16 %v3129
        %v3220 = vunpack.c.l.b16 %v3130
        %v3221 = vunpack.c.l.b16 %v3131
        %v3222 = vunpack.c.l.b16 %v3132
        %v3223 = vunpack.c.l.b16 %v3133
        %v3224 = vpack.c.b16 %v3209, %v3208
        %v3225 = vpack.c.b16 %v3211, %v3210
        %v3226 = vpack.c.b16 %v3213, %v3212
        %v3227 = vpack.c.b16 %v3215, %v3214
        %v3228 = vpack.c.b16 %v3217, %v3216
        %v3229 = vpack.c.b16 %v3219, %v3218
        %v3230 = vpack.c.b16 %v3221, %v3220
        %v3231 = vpack.c.b16 %v3223, %v3222
        %3240 = vmatprep.subr.bf16.mxu0 0
        %3241 = vmatpush1.bf16.msra.mxu0 %v3224
        %3242 = vmatprep.subr.bf16.mxu0 0
        %3243 = vmatpush1.bf16.msra.mxu0 %v3225
        %3244 = vmatprep.subr.bf16.mxu0 0
        %3245 = vmatpush1.bf16.msra.mxu0 %v3226
        %3246 = vmatprep.subr.bf16.mxu0 0
        %3247 = vmatpush1.bf16.msra.mxu0 %v3227
        %3248 = vmatprep.subr.bf16.mxu0 0
        %3249 = vmatpush1.bf16.msra.mxu0 %v3228
        %3250 = vmatprep.subr.bf16.mxu0 0
        %3251 = vmatpush1.bf16.msra.mxu0 %v3229
        %3252 = vmatprep.subr.bf16.mxu0 0
        %3253 = vmatpush1.bf16.msra.mxu0 %v3230
        %3254 = vmatprep.subr.bf16.mxu0 0
        %3255 = vmatpush1.bf16.msra.mxu0 %v3231
        %3256 = vmatprep.subr.bf16.mxu0 0
        %3257 = vmatpush1.bf16.msra.mxu0 0
        %3258 = vmatprep.subr.bf16.mxu0 0
        %3259 = vmatpush1.bf16.msra.mxu0 0
        %3260 = vmatprep.subr.bf16.mxu0 0
        %3261 = vmatpush1.bf16.msra.mxu0 0
        %3262 = vmatprep.subr.bf16.mxu0 0
        %3263 = vmatpush1.bf16.msra.mxu0 0
        %3264 = vmatprep.subr.bf16.mxu0 0
        %3265 = vmatpush1.bf16.msra.mxu0 0
        %3266 = vmatprep.subr.bf16.mxu0 0
        %3267 = vmatpush1.bf16.msra.mxu0 0
        %3268 = vmatprep.subr.bf16.mxu0 0
        %3269 = vmatpush1.bf16.msra.mxu0 0
        %3270 = vmatprep.subr.bf16.mxu0 0
        %3271 = vmatpush1.bf16.msra.mxu0 0
        %3272 = vmatprep.mubr.bf16.mxu0 0
        %3273 = vmatmul.mubr.bf16.gmra.mrb[0].mxu0 %v3109
        %v3274 = vpop.f32.mrb[0].mxu0
        %v3275 = vadd.f32 %v3190, %v3274
        %v3276 = vpop.f32.mrb[0].mxu0
        %v3277 = vpop.f32.mrb[0].mxu0
        %v3278 = vadd.f32 %v3190, %v3277
        %v3279 = vpop.f32.mrb[0].mxu0
        %3280 = vdwg.mxu0
        %v3281 = vpack.c.bf16 %v3278, %v3275
        %v3283 = vlaneseq
        %v3284 = vshrl.u32 %v3283, 7
        %v3285 = vsub.s32 0, %v3284
        %v3286 = vrot.slane %v3151, %v3285
        %v3292 = vunpack.c.l.b16 %v3110
        %v3293 = vunpack.c.l.b16 %v3111
        %v3294 = vunpack.c.l.b16 %v3112
        %v3295 = vunpack.c.l.b16 %v3113
        %v3296 = vpack.c.b16 %v3293, %v3292
        %v3297 = vpack.c.b16 %v3295, %v3294
        %v3316 = vunpack.c.l.b16 %v3135
        %v3317 = vunpack.c.l.b16 %v3136
        %v3318 = vunpack.c.l.b16 %v3137
        %v3319 = vunpack.c.l.b16 %v3138
        %v3320 = vunpack.c.l.b16 %v3139
        %v3321 = vunpack.c.l.b16 %v3140
        %v3322 = vunpack.c.l.b16 %v3141
        %v3323 = vunpack.c.l.b16 %v3142
        %v3324 = vunpack.c.l.b16 %v3143
        %v3325 = vunpack.c.l.b16 %v3144
        %v3326 = vunpack.c.l.b16 %v3145
        %v3327 = vunpack.c.l.b16 %v3146
        %v3328 = vunpack.c.l.b16 %v3147
        %v3329 = vunpack.c.l.b16 %v3148
        %v3330 = vunpack.c.l.b16 %v3149
        %v3331 = vunpack.c.l.b16 %v3150
        %v3332 = vpack.c.b16 %v3317, %v3316
        %v3333 = vpack.c.b16 %v3319, %v3318
        %v3334 = vpack.c.b16 %v3321, %v3320
        %v3335 = vpack.c.b16 %v3323, %v3322
        %v3336 = vpack.c.b16 %v3325, %v3324
        %v3337 = vpack.c.b16 %v3327, %v3326
        %v3338 = vpack.c.b16 %v3329, %v3328
        %v3339 = vpack.c.b16 %v3331, %v3330
        %3348 = vmatprep.subr.bf16.mxu0 0
        %3349 = vmatpush1.bf16.msra.mxu0 %v3332
        %3350 = vmatprep.subr.bf16.mxu0 0
        %3351 = vmatpush1.bf16.msra.mxu0 %v3333
        %3352 = vmatprep.subr.bf16.mxu0 0
        %3353 = vmatpush1.bf16.msra.mxu0 %v3334
        %3354 = vmatprep.subr.bf16.mxu0 0
        %3355 = vmatpush1.bf16.msra.mxu0 %v3335
        %3356 = vmatprep.subr.bf16.mxu0 0
        %3357 = vmatpush1.bf16.msra.mxu0 %v3336
        %3358 = vmatprep.subr.bf16.mxu0 0
        %3359 = vmatpush1.bf16.msra.mxu0 %v3337
        %3360 = vmatprep.subr.bf16.mxu0 0
        %3361 = vmatpush1.bf16.msra.mxu0 %v3338
        %3362 = vmatprep.subr.bf16.mxu0 0
        %3363 = vmatpush1.bf16.msra.mxu0 %v3339
        %3364 = vmatprep.subr.bf16.mxu0 0
        %3365 = vmatpush1.bf16.msra.mxu0 0
        %3366 = vmatprep.subr.bf16.mxu0 0
        %3367 = vmatpush1.bf16.msra.mxu0 0
        %3368 = vmatprep.subr.bf16.mxu0 0
        %3369 = vmatpush1.bf16.msra.mxu0 0
        %3370 = vmatprep.subr.bf16.mxu0 0
        %3371 = vmatpush1.bf16.msra.mxu0 0
        %3372 = vmatprep.subr.bf16.mxu0 0
        %3373 = vmatpush1.bf16.msra.mxu0 0
        %3374 = vmatprep.subr.bf16.mxu0 0
        %3375 = vmatpush1.bf16.msra.mxu0 0
        %3376 = vmatprep.subr.bf16.mxu0 0
        %3377 = vmatpush1.bf16.msra.mxu0 0
        %3378 = vmatprep.subr.bf16.mxu0 0
        %3379 = vmatpush1.bf16.msra.mxu0 0
        %3380 = vmatprep.mubr.bf16.mxu0 0
        %3381 = vmatmul.mubr.bf16.gmra.mrb[0].mxu0 %v3296
        %v3382 = vpop.f32.mrb[0].mxu0
        %v3383 = vadd.f32 %v3286, %v3382
        %v3384 = vpop.f32.mrb[0].mxu0
        %v3385 = vpop.f32.mrb[0].mxu0
        %v3386 = vadd.f32 %v3286, %v3385
        %v3387 = vpop.f32.mrb[0].mxu0
        %3388 = vmatprep.mubr.bf16.mxu0 0
        %3389 = vmatmul.mubr.bf16.gmra.mrb[0].mxu0 %v3297
        %v3390 = vpop.f32.mrb[0].mxu0
        %v3391 = vadd.f32 %v3286, %v3390
        %v3392 = vpop.f32.mrb[0].mxu0
        %v3393 = vpop.f32.mrb[0].mxu0
        %v3394 = vadd.f32 %v3286, %v3393
        %v3395 = vpop.f32.mrb[0].mxu0
        %3396 = vdwg.mxu0
        %v3397 = vpack.c.bf16 %v3386, %v3383
        %v3398 = vpack.c.bf16 %v3394, %v3391
        %v3400 = vlaneseq
        %v3401 = vshrl.u32 %v3400, 7
        %v3402 = vsub.s32 0, %v3401
        %v3403 = vrot.slane %v3168, %v3402
        %v3409 = vunpack.c.l.b16 %v3114
        %v3410 = vunpack.c.l.b16 %v3115
        %v3411 = vunpack.c.l.b16 %v3116
        %v3412 = vunpack.c.l.b16 %v3117
        %v3413 = vpack.c.b16 %v3410, %v3409
        %v3414 = vpack.c.b16 %v3412, %v3411
        %v3433 = vunpack.c.l.b16 %v3152
        %v3434 = vunpack.c.l.b16 %v3153
        %v3435 = vunpack.c.l.b16 %v3154
        %v3436 = vunpack.c.l.b16 %v3155
        %v3437 = vunpack.c.l.b16 %v3156
        %v3438 = vunpack.c.l.b16 %v3157
        %v3439 = vunpack.c.l.b16 %v3158
        %v3440 = vunpack.c.l.b16 %v3159
        %v3441 = vunpack.c.l.b16 %v3160
        %v3442 = vunpack.c.l.b16 %v3161
        %v3443 = vunpack.c.l.b16 %v3162
        %v3444 = vunpack.c.l.b16 %v3163
        %v3445 = vunpack.c.l.b16 %v3164
        %v3446 = vunpack.c.l.b16 %v3165
        %v3447 = vunpack.c.l.b16 %v3166
        %v3448 = vunpack.c.l.b16 %v3167
        %v3449 = vpack.c.b16 %v3434, %v3433
        %v3450 = vpack.c.b16 %v3436, %v3435
        %v3451 = vpack.c.b16 %v3438, %v3437
        %v3452 = vpack.c.b16 %v3440, %v3439
        %v3453 = vpack.c.b16 %v3442, %v3441
        %v3454 = vpack.c.b16 %v3444, %v3443
        %v3455 = vpack.c.b16 %v3446, %v3445
        %v3456 = vpack.c.b16 %v3448, %v3447
        %3465 = vmatprep.subr.bf16.mxu0 0
        %3466 = vmatpush1.bf16.msra.mxu0 %v3449
        %3467 = vmatprep.subr.bf16.mxu0 0
        %3468 = vmatpush1.bf16.msra.mxu0 %v3450
        %3469 = vmatprep.subr.bf16.mxu0 0
        %3470 = vmatpush1.bf16.msra.mxu0 %v3451
        %3471 = vmatprep.subr.bf16.mxu0 0
        %3472 = vmatpush1.bf16.msra.mxu0 %v3452
        %3473 = vmatprep.subr.bf16.mxu0 0
        %3474 = vmatpush1.bf16.msra.mxu0 %v3453
        %3475 = vmatprep.subr.bf16.mxu0 0
        %3476 = vmatpush1.bf16.msra.mxu0 %v3454
        %3477 = vmatprep.subr.bf16.mxu0 0
        %3478 = vmatpush1.bf16.msra.mxu0 %v3455
        %3479 = vmatprep.subr.bf16.mxu0 0
        %3480 = vmatpush1.bf16.msra.mxu0 %v3456
        %3481 = vmatprep.subr.bf16.mxu0 0
        %3482 = vmatpush1.bf16.msra.mxu0 0
        %3483 = vmatprep.subr.bf16.mxu0 0
        %3484 = vmatpush1.bf16.msra.mxu0 0
        %3485 = vmatprep.subr.bf16.mxu0 0
        %3486 = vmatpush1.bf16.msra.mxu0 0
        %3487 = vmatprep.subr.bf16.mxu0 0
        %3488 = vmatpush1.bf16.msra.mxu0 0
        %3489 = vmatprep.subr.bf16.mxu0 0
        %3490 = vmatpush1.bf16.msra.mxu0 0
        %3491 = vmatprep.subr.bf16.mxu0 0
        %3492 = vmatpush1.bf16.msra.mxu0 0
        %3493 = vmatprep.subr.bf16.mxu0 0
        %3494 = vmatpush1.bf16.msra.mxu0 0
        %3495 = vmatprep.subr.bf16.mxu0 0
        %3496 = vmatpush1.bf16.msra.mxu0 0
        %3497 = vmatprep.mubr.bf16.mxu0 0
        %3498 = vmatmul.mubr.bf16.gmra.mrb[0].mxu0 %v3413
        %v3499 = vpop.f32.mrb[0].mxu0
        %v3500 = vadd.f32 %v3403, %v3499
        %v3501 = vpop.f32.mrb[0].mxu0
        %v3502 = vpop.f32.mrb[0].mxu0
        %v3503 = vadd.f32 %v3403, %v3502
        %v3504 = vpop.f32.mrb[0].mxu0
        %3505 = vmatprep.mubr.bf16.mxu0 0
        %3506 = vmatmul.mubr.bf16.gmra.mrb[0].mxu0 %v3414
        %v3507 = vpop.f32.mrb[0].mxu0
        %v3508 = vadd.f32 %v3403, %v3507
        %v3509 = vpop.f32.mrb[0].mxu0
        %v3510 = vpop.f32.mrb[0].mxu0
        %v3511 = vadd.f32 %v3403, %v3510
        %v3512 = vpop.f32.mrb[0].mxu0
        %3513 = vdwg.mxu0
        %v3514 = vpack.c.bf16 %v3503, %v3500
        %v3515 = vpack.c.bf16 %v3511, %v3508
        %v3517 = vsel %vm1911, %v3281, 0
        %v3520 = vsel %vm1911, %v3397, 0
        %v3523 = vsel %vm1911, %v3398, 0
        %3525 = vmatprep.subr.bf16.mxu0 0
        %3526 = vmatpush1.bf16.xpose.msra.mxu0 %v3520
        %3527 = vmatprep.subr.bf16.mxu0 0
        %3528 = vmatpush1.bf16.xpose.msra.mxu0 %v3523
        %3529 = vmatprep.subr.bf16.mxu0 0
        %3530 = vmatpush1.bf16.xpose.msra.mxu0 0
        %3531 = vmatprep.subr.bf16.mxu0 0
        %3532 = vmatpush1.bf16.xpose.msra.mxu0 0
        %3533 = vmatprep.subr.bf16.mxu0 0
        %3534 = vmatpush1.bf16.xpose.msra.mxu0 0
        %3535 = vmatprep.subr.bf16.mxu0 0
        %3536 = vmatpush1.bf16.xpose.msra.mxu0 0
        %3537 = vmatprep.subr.bf16.mxu0 0
        %3538 = vmatpush1.bf16.xpose.msra.mxu0 0
        %3539 = vmatprep.subr.bf16.mxu0 0
        %3540 = vmatpush1.bf16.xpose.msra.mxu0 0
        %3541 = vmatprep.subr.bf16.mxu0 0
        %3542 = vmatpush1.bf16.xpose.msra.mxu0 0
        %3543 = vmatprep.subr.bf16.mxu0 0
        %3544 = vmatpush1.bf16.xpose.msra.mxu0 0
        %3545 = vmatprep.subr.bf16.mxu0 0
        %3546 = vmatpush1.bf16.xpose.msra.mxu0 0
        %3547 = vmatprep.subr.bf16.mxu0 0
        %3548 = vmatpush1.bf16.xpose.msra.mxu0 0
        %3549 = vmatprep.subr.bf16.mxu0 0
        %3550 = vmatpush1.bf16.xpose.msra.mxu0 0
        %3551 = vmatprep.subr.bf16.mxu0 0
        %3552 = vmatpush1.bf16.xpose.msra.mxu0 0
        %3553 = vmatprep.subr.bf16.mxu0 0
        %3554 = vmatpush1.bf16.xpose.msra.mxu0 0
        %3555 = vmatprep.subr.bf16.mxu0 0
        %3556 = vmatpush1.bf16.xpose.msra.mxu0 0
        %3557 = vmatprep.mubr.bf16.mxu0 0
        %3558 = vmatmul.mubr.bf16.gmra.mrb[0].mxu0 %v3517
        %v3559 = vpop.f32.mrb[0].mxu0
        %v3560 = vadd.f32 0.0, %v3559
        %v3561 = vpop.f32.mrb[0].mxu0
        %v3562 = vpop.f32.mrb[0].mxu0
        %v3563 = vadd.f32 0.0, %v3562
        %v3564 = vpop.f32.mrb[0].mxu0
        %3565 = vdwg.mxu0
        %v3566 = vmul.f32 %v3560, 0.25
        %v3567 = vmul.f32 %v3563, 0.25
        %v3568 = vsel %vm2950, %v3566, -inf
        %3569 = vmax.xlane.f32.xlu0 %v3568
        %v3570 = vpop.xlane.xlu0 %3569
        %v3571 = vsel %vm2950, %v3567, -inf
        %3572 = vmax.xlane.f32.xlu0 %v3571
        %v3573 = vpop.xlane.xlu0 %3572
        %v3574 = vsub.f32 %v3566, %v3570
        %v3575 = vsub.f32 %v3567, %v3573
        %v3576 = vmul.f32 %v3574, 1.442695
        %v3577 = vpow.pop %v3576
        %v3578 = vmul.f32 %v3575, 1.442695
        %v3579 = vpow.pop %v3578
        %v3580 = vsel %vm2950, %v3577, 0.0
        %3581 = vadd.xlane.f32.xlu0 %v3580
        %v3582 = vpop.xlane.xlu0 %3581
        %v3583 = vsel %vm2950, %v3579, 0.0
        %3584 = vadd.xlane.f32.xlu0 %v3583
        %v3585 = vpop.xlane.xlu0 %3584
        %v3586 = vrcp.pop %v3582
        %v3587 = vrcp.pop %v3585
        %v3588 = vmul.f32 %v3577, %v3586
        %v3589 = vmul.f32 %v3579, %v3587
        %v3590 = vpack.c.bf16 %v3589, %v3588
        %v3592 = vsel %vm2950, %v3590, 0
        %3594 = vmatprep.subr.bf16.mxu0 0
        %3595 = vmatpush1.bf16.msra.mxu0 %v3514
        %3596 = vmatprep.subr.bf16.mxu0 0
        %3597 = vmatpush1.bf16.msra.mxu0 %v3515
        %3598 = vmatprep.subr.bf16.mxu0 0
        %3599 = vmatpush1.bf16.msra.mxu0 0
        %3600 = vmatprep.subr.bf16.mxu0 0
        %3601 = vmatpush1.bf16.msra.mxu0 0
        %3602 = vmatprep.subr.bf16.mxu0 0
        %3603 = vmatpush1.bf16.msra.mxu0 0
        %3604 = vmatprep.subr.bf16.mxu0 0
        %3605 = vmatpush1.bf16.msra.mxu0 0
        %3606 = vmatprep.subr.bf16.mxu0 0
        %3607 = vmatpush1.bf16.msra.mxu0 0
        %3608 = vmatprep.subr.bf16.mxu0 0
        %3609 = vmatpush1.bf16.msra.mxu0 0
        %3610 = vmatprep.subr.bf16.mxu0 0
        %3611 = vmatpush1.bf16.msra.mxu0 0
        %3612 = vmatprep.subr.bf16.mxu0 0
        %3613 = vmatpush1.bf16.msra.mxu0 0
        %3614 = vmatprep.subr.bf16.mxu0 0
        %3615 = vmatpush1.bf16.msra.mxu0 0
        %3616 = vmatprep.subr.bf16.mxu0 0
        %3617 = vmatpush1.bf16.msra.mxu0 0
        %3618 = vmatprep.subr.bf16.mxu0 0
        %3619 = vmatpush1.bf16.msra.mxu0 0
        %3620 = vmatprep.subr.bf16.mxu0 0
        %3621 = vmatpush1.bf16.msra.mxu0 0
        %3622 = vmatprep.subr.bf16.mxu0 0
        %3623 = vmatpush1.bf16.msra.mxu0 0
        %3624 = vmatprep.subr.bf16.mxu0 0
        %3625 = vmatpush1.bf16.msra.mxu0 0
        %3626 = vmatprep.mubr.bf16.mxu0 0
        %3627 = vmatmul.mubr.bf16.gmra.mrb[0].mxu0 %v3592
        %v3628 = vpop.f32.mrb[0].mxu0
        %v3629 = vadd.f32 0.0, %v3628
        %v3630 = vpop.f32.mrb[0].mxu0
        %v3631 = vpop.f32.mrb[0].mxu0
        %v3632 = vadd.f32 0.0, %v3631
        %v3633 = vpop.f32.mrb[0].mxu0
        %3634 = vdwg.mxu0
        %3636 = vrot.lane.b32.xlu0 %v3281, 112
        %v3637 = vpop.permute.xlu0 %3636
        %3640 = vrot.lane.b32.xlu0 %v3397, 112
        %v3641 = vpop.permute.xlu0 %3640
        %3642 = vrot.lane.b32.xlu0 %v3398, 112
        %v3643 = vpop.permute.xlu0 %3642
        %v3645 = vsel %vm1911, %v3637, 0
        %v3648 = vsel %vm1911, %v3641, 0
        %v3651 = vsel %vm1911, %v3643, 0
        %3653 = vmatprep.subr.bf16.mxu0 0
        %3654 = vmatpush1.bf16.xpose.msra.mxu0 %v3648
        %3655 = vmatprep.subr.bf16.mxu0 0
        %3656 = vmatpush1.bf16.xpose.msra.mxu0 %v3651
        %3657 = vmatprep.subr.bf16.mxu0 0
        %3658 = vmatpush1.bf16.xpose.msra.mxu0 0
        %3659 = vmatprep.subr.bf16.mxu0 0
        %3660 = vmatpush1.bf16.xpose.msra.mxu0 0
        %3661 = vmatprep.subr.bf16.mxu0 0
        %3662 = vmatpush1.bf16.xpose.msra.mxu0 0
        %3663 = vmatprep.subr.bf16.mxu0 0
        %3664 = vmatpush1.bf16.xpose.msra.mxu0 0
        %3665 = vmatprep.subr.bf16.mxu0 0
        %3666 = vmatpush1.bf16.xpose.msra.mxu0 0
        %3667 = vmatprep.subr.bf16.mxu0 0
        %3668 = vmatpush1.bf16.xpose.msra.mxu0 0
        %3669 = vmatprep.subr.bf16.mxu0 0
        %3670 = vmatpush1.bf16.xpose.msra.mxu0 0
        %3671 = vmatprep.subr.bf16.mxu0 0
        %3672 = vmatpush1.bf16.xpose.msra.mxu0 0
        %3673 = vmatprep.subr.bf16.mxu0 0
        %3674 = vmatpush1.bf16.xpose.msra.mxu0 0
        %3675 = vmatprep.subr.bf16.mxu0 0
        %3676 = vmatpush1.bf16.xpose.msra.mxu0 0
        %3677 = vmatprep.subr.bf16.mxu0 0
        %3678 = vmatpush1.bf16.xpose.msra.mxu0 0
        %3679 = vmatprep.subr.bf16.mxu0 0
        %3680 = vmatpush1.bf16.xpose.msra.mxu0 0
        %3681 = vmatprep.subr.bf16.mxu0 0
        %3682 = vmatpush1.bf16.xpose.msra.mxu0 0
        %3683 = vmatprep.subr.bf16.mxu0 0
        %3684 = vmatpush1.bf16.xpose.msra.mxu0 0
        %3685 = vmatprep.mubr.bf16.mxu0 0
        %3686 = vmatmul.mubr.bf16.gmra.mrb[0].mxu0 %v3645
        %v3687 = vpop.f32.mrb[0].mxu0
        %v3688 = vadd.f32 0.0, %v3687
        %v3689 = vpop.f32.mrb[0].mxu0
        %v3690 = vpop.f32.mrb[0].mxu0
        %v3691 = vadd.f32 0.0, %v3690
        %v3692 = vpop.f32.mrb[0].mxu0
        %3693 = vdwg.mxu0
        %v3694 = vmul.f32 %v3688, 0.25
        %v3695 = vmul.f32 %v3691, 0.25
        %v3696 = vsel %vm2950, %v3694, -inf
        %3697 = vmax.xlane.f32.xlu0 %v3696
        %v3698 = vpop.xlane.xlu0 %3697
        %v3699 = vsel %vm2950, %v3695, -inf
        %3700 = vmax.xlane.f32.xlu0 %v3699
        %v3701 = vpop.xlane.xlu0 %3700
        %v3702 = vsub.f32 %v3694, %v3698
        %v3703 = vsub.f32 %v3695, %v3701
        %v3704 = vmul.f32 %v3702, 1.442695
        %v3705 = vpow.pop %v3704
        %v3706 = vmul.f32 %v3703, 1.442695
        %v3707 = vpow.pop %v3706
        %v3708 = vsel %vm2950, %v3705, 0.0
        %3709 = vadd.xlane.f32.xlu0 %v3708
        %v3710 = vpop.xlane.xlu0 %3709
        %v3711 = vsel %vm2950, %v3707, 0.0
        %3712 = vadd.xlane.f32.xlu0 %v3711
        %v3713 = vpop.xlane.xlu0 %3712
        %v3714 = vrcp.pop %v3710
        %v3715 = vrcp.pop %v3713
        %v3716 = vmul.f32 %v3705, %v3714
        %v3717 = vmul.f32 %v3707, %v3715
        %v3718 = vpack.c.bf16 %v3717, %v3716
        %3721 = vrot.lane.b32.xlu0 %v3514, 112
        %v3722 = vpop.permute.xlu0 %3721
        %3723 = vrot.lane.b32.xlu0 %v3515, 112
        %v3724 = vpop.permute.xlu0 %3723
        %v3728 = vsel %vm2950, %v3718, 0
        %3730 = vmatprep.subr.bf16.mxu0 0
        %3731 = vmatpush1.bf16.msra.mxu0 %v3722
        %3732 = vmatprep.subr.bf16.mxu0 0
        %3733 = vmatpush1.bf16.msra.mxu0 %v3724
        %3734 = vmatprep.subr.bf16.mxu0 0
        %3735 = vmatpush1.bf16.msra.mxu0 0
        %3736 = vmatprep.subr.bf16.mxu0 0
        %3737 = vmatpush1.bf16.msra.mxu0 0
        %3738 = vmatprep.subr.bf16.mxu0 0
        %3739 = vmatpush1.bf16.msra.mxu0 0
        %3740 = vmatprep.subr.bf16.mxu0 0
        %3741 = vmatpush1.bf16.msra.mxu0 0
        %3742 = vmatprep.subr.bf16.mxu0 0
        %3743 = vmatpush1.bf16.msra.mxu0 0
        %3744 = vmatprep.subr.bf16.mxu0 0
        %3745 = vmatpush1.bf16.msra.mxu0 0
        %3746 = vmatprep.subr.bf16.mxu0 0
        %3747 = vmatpush1.bf16.msra.mxu0 0
        %3748 = vmatprep.subr.bf16.mxu0 0
        %3749 = vmatpush1.bf16.msra.mxu0 0
        %3750 = vmatprep.subr.bf16.mxu0 0
        %3751 = vmatpush1.bf16.msra.mxu0 0
        %3752 = vmatprep.subr.bf16.mxu0 0
        %3753 = vmatpush1.bf16.msra.mxu0 0
        %3754 = vmatprep.subr.bf16.mxu0 0
        %3755 = vmatpush1.bf16.msra.mxu0 0
        %3756 = vmatprep.subr.bf16.mxu0 0
        %3757 = vmatpush1.bf16.msra.mxu0 0
        %3758 = vmatprep.subr.bf16.mxu0 0
        %3759 = vmatpush1.bf16.msra.mxu0 0
        %3760 = vmatprep.subr.bf16.mxu0 0
        %3761 = vmatpush1.bf16.msra.mxu0 0
        %3762 = vmatprep.mubr.bf16.mxu0 0
        %3763 = vmatmul.mubr.bf16.gmra.mrb[0].mxu0 %v3728
        %v3764 = vpop.f32.mrb[0].mxu0
        %v3765 = vadd.f32 0.0, %v3764
        %v3766 = vpop.f32.mrb[0].mxu0
        %v3767 = vpop.f32.mrb[0].mxu0
        %v3768 = vadd.f32 0.0, %v3767
        %v3769 = vpop.f32.mrb[0].mxu0
        %3770 = vdwg.mxu0
        %3771 = vrot.lane.b32.xlu0 %v3281, 96
        %v3772 = vpop.permute.xlu0 %3771
        %3773 = vrot.lane.b32.xlu0 %v3397, 96
        %v3774 = vpop.permute.xlu0 %3773
        %3775 = vrot.lane.b32.xlu0 %v3398, 96
        %v3776 = vpop.permute.xlu0 %3775
        %v3778 = vsel %vm1911, %v3772, 0
        %v3781 = vsel %vm1911, %v3774, 0
        %v3784 = vsel %vm1911, %v3776, 0
        %3786 = vmatprep.subr.bf16.mxu0 0
        %3787 = vmatpush1.bf16.xpose.msra.mxu0 %v3781
        %3788 = vmatprep.subr.bf16.mxu0 0
        %3789 = vmatpush1.bf16.xpose.msra.mxu0 %v3784
        %3790 = vmatprep.subr.bf16.mxu0 0
        %3791 = vmatpush1.bf16.xpose.msra.mxu0 0
        %3792 = vmatprep.subr.bf16.mxu0 0
        %3793 = vmatpush1.bf16.xpose.msra.mxu0 0
        %3794 = vmatprep.subr.bf16.mxu0 0
        %3795 = vmatpush1.bf16.xpose.msra.mxu0 0
        %3796 = vmatprep.subr.bf16.mxu0 0
        %3797 = vmatpush1.bf16.xpose.msra.mxu0 0
        %3798 = vmatprep.subr.bf16.mxu0 0
        %3799 = vmatpush1.bf16.xpose.msra.mxu0 0
        %3800 = vmatprep.subr.bf16.mxu0 0
        %3801 = vmatpush1.bf16.xpose.msra.mxu0 0
        %3802 = vmatprep.subr.bf16.mxu0 0
        %3803 = vmatpush1.bf16.xpose.msra.mxu0 0
        %3804 = vmatprep.subr.bf16.mxu0 0
        %3805 = vmatpush1.bf16.xpose.msra.mxu0 0
        %3806 = vmatprep.subr.bf16.mxu0 0
        %3807 = vmatpush1.bf16.xpose.msra.mxu0 0
        %3808 = vmatprep.subr.bf16.mxu0 0
        %3809 = vmatpush1.bf16.xpose.msra.mxu0 0
        %3810 = vmatprep.subr.bf16.mxu0 0
        %3811 = vmatpush1.bf16.xpose.msra.mxu0 0
        %3812 = vmatprep.subr.bf16.mxu0 0
        %3813 = vmatpush1.bf16.xpose.msra.mxu0 0
        %3814 = vmatprep.subr.bf16.mxu0 0
        %3815 = vmatpush1.bf16.xpose.msra.mxu0 0
        %3816 = vmatprep.subr.bf16.mxu0 0
        %3817 = vmatpush1.bf16.xpose.msra.mxu0 0
        %3818 = vmatprep.mubr.bf16.mxu0 0
        %3819 = vmatmul.mubr.bf16.gmra.mrb[0].mxu0 %v3778
        %v3820 = vpop.f32.mrb[0].mxu0
        %v3821 = vadd.f32 0.0, %v3820
        %v3822 = vpop.f32.mrb[0].mxu0
        %v3823 = vpop.f32.mrb[0].mxu0
        %v3824 = vadd.f32 0.0, %v3823
        %v3825 = vpop.f32.mrb[0].mxu0
        %3826 = vdwg.mxu0
        %v3827 = vmul.f32 %v3821, 0.25
        %v3828 = vmul.f32 %v3824, 0.25
        %v3829 = vsel %vm2950, %v3827, -inf
        %3830 = vmax.xlane.f32.xlu0 %v3829
        %v3831 = vpop.xlane.xlu0 %3830
        %v3832 = vsel %vm2950, %v3828, -inf
        %3833 = vmax.xlane.f32.xlu0 %v3832
        %v3834 = vpop.xlane.xlu0 %3833
        %v3835 = vsub.f32 %v3827, %v3831
        %v3836 = vsub.f32 %v3828, %v3834
        %v3837 = vmul.f32 %v3835, 1.442695
        %v3838 = vpow.pop %v3837
        %v3839 = vmul.f32 %v3836, 1.442695
        %v3840 = vpow.pop %v3839
        %v3841 = vsel %vm2950, %v3838, 0.0
        %3842 = vadd.xlane.f32.xlu0 %v3841
        %v3843 = vpop.xlane.xlu0 %3842
        %v3844 = vsel %vm2950, %v3840, 0.0
        %3845 = vadd.xlane.f32.xlu0 %v3844
        %v3846 = vpop.xlane.xlu0 %3845
        %v3847 = vrcp.pop %v3843
        %v3848 = vrcp.pop %v3846
        %v3849 = vmul.f32 %v3838, %v3847
        %v3850 = vmul.f32 %v3840, %v3848
        %v3851 = vpack.c.bf16 %v3850, %v3849
        %3852 = vrot.lane.b32.xlu0 %v3514, 96
        %v3853 = vpop.permute.xlu0 %3852
        %3854 = vrot.lane.b32.xlu0 %v3515, 96
        %v3855 = vpop.permute.xlu0 %3854
        %v3859 = vsel %vm2950, %v3851, 0
        %3861 = vmatprep.subr.bf16.mxu0 0
        %3862 = vmatpush1.bf16.msra.mxu0 %v3853
        %3863 = vmatprep.subr.bf16.mxu0 0
        %3864 = vmatpush1.bf16.msra.mxu0 %v3855
        %3865 = vmatprep.subr.bf16.mxu0 0
        %3866 = vmatpush1.bf16.msra.mxu0 0
        %3867 = vmatprep.subr.bf16.mxu0 0
        %3868 = vmatpush1.bf16.msra.mxu0 0
        %3869 = vmatprep.subr.bf16.mxu0 0
        %3870 = vmatpush1.bf16.msra.mxu0 0
        %3871 = vmatprep.subr.bf16.mxu0 0
        %3872 = vmatpush1.bf16.msra.mxu0 0
        %3873 = vmatprep.subr.bf16.mxu0 0
        %3874 = vmatpush1.bf16.msra.mxu0 0
        %3875 = vmatprep.subr.bf16.mxu0 0
        %3876 = vmatpush1.bf16.msra.mxu0 0
        %3877 = vmatprep.subr.bf16.mxu0 0
        %3878 = vmatpush1.bf16.msra.mxu0 0
        %3879 = vmatprep.subr.bf16.mxu0 0
        %3880 = vmatpush1.bf16.msra.mxu0 0
        %3881 = vmatprep.subr.bf16.mxu0 0
        %3882 = vmatpush1.bf16.msra.mxu0 0
        %3883 = vmatprep.subr.bf16.mxu0 0
        %3884 = vmatpush1.bf16.msra.mxu0 0
        %3885 = vmatprep.subr.bf16.mxu0 0
        %3886 = vmatpush1.bf16.msra.mxu0 0
        %3887 = vmatprep.subr.bf16.mxu0 0
        %3888 = vmatpush1.bf16.msra.mxu0 0
        %3889 = vmatprep.subr.bf16.mxu0 0
        %3890 = vmatpush1.bf16.msra.mxu0 0
        %3891 = vmatprep.subr.bf16.mxu0 0
        %3892 = vmatpush1.bf16.msra.mxu0 0
        %3893 = vmatprep.mubr.bf16.mxu0 0
        %3894 = vmatmul.mubr.bf16.gmra.mrb[0].mxu0 %v3859
        %v3895 = vpop.f32.mrb[0].mxu0
        %v3896 = vadd.f32 0.0, %v3895
        %v3897 = vpop.f32.mrb[0].mxu0
        %v3898 = vpop.f32.mrb[0].mxu0
        %v3899 = vadd.f32 0.0, %v3898
        %v3900 = vpop.f32.mrb[0].mxu0
        %3901 = vdwg.mxu0
        %3902 = vrot.lane.b32.xlu0 %v3281, 80
        %v3903 = vpop.permute.xlu0 %3902
        %3904 = vrot.lane.b32.xlu0 %v3397, 80
        %v3905 = vpop.permute.xlu0 %3904
        %3906 = vrot.lane.b32.xlu0 %v3398, 80
        %v3907 = vpop.permute.xlu0 %3906
        %v3909 = vsel %vm1911, %v3903, 0
        %v3912 = vsel %vm1911, %v3905, 0
        %v3915 = vsel %vm1911, %v3907, 0
        %3917 = vmatprep.subr.bf16.mxu0 0
        %3918 = vmatpush1.bf16.xpose.msra.mxu0 %v3912
        %3919 = vmatprep.subr.bf16.mxu0 0
        %3920 = vmatpush1.bf16.xpose.msra.mxu0 %v3915
        %3921 = vmatprep.subr.bf16.mxu0 0
        %3922 = vmatpush1.bf16.xpose.msra.mxu0 0
        %3923 = vmatprep.subr.bf16.mxu0 0
        %3924 = vmatpush1.bf16.xpose.msra.mxu0 0
        %3925 = vmatprep.subr.bf16.mxu0 0
        %3926 = vmatpush1.bf16.xpose.msra.mxu0 0
        %3927 = vmatprep.subr.bf16.mxu0 0
        %3928 = vmatpush1.bf16.xpose.msra.mxu0 0
        %3929 = vmatprep.subr.bf16.mxu0 0
        %3930 = vmatpush1.bf16.xpose.msra.mxu0 0
        %3931 = vmatprep.subr.bf16.mxu0 0
        %3932 = vmatpush1.bf16.xpose.msra.mxu0 0
        %3933 = vmatprep.subr.bf16.mxu0 0
        %3934 = vmatpush1.bf16.xpose.msra.mxu0 0
        %3935 = vmatprep.subr.bf16.mxu0 0
        %3936 = vmatpush1.bf16.xpose.msra.mxu0 0
        %3937 = vmatprep.subr.bf16.mxu0 0
        %3938 = vmatpush1.bf16.xpose.msra.mxu0 0
        %3939 = vmatprep.subr.bf16.mxu0 0
        %3940 = vmatpush1.bf16.xpose.msra.mxu0 0
        %3941 = vmatprep.subr.bf16.mxu0 0
        %3942 = vmatpush1.bf16.xpose.msra.mxu0 0
        %3943 = vmatprep.subr.bf16.mxu0 0
        %3944 = vmatpush1.bf16.xpose.msra.mxu0 0
        %3945 = vmatprep.subr.bf16.mxu0 0
        %3946 = vmatpush1.bf16.xpose.msra.mxu0 0
        %3947 = vmatprep.subr.bf16.mxu0 0
        %3948 = vmatpush1.bf16.xpose.msra.mxu0 0
        %3949 = vmatprep.mubr.bf16.mxu0 0
        %3950 = vmatmul.mubr.bf16.gmra.mrb[0].mxu0 %v3909
        %v3951 = vpop.f32.mrb[0].mxu0
        %v3952 = vadd.f32 0.0, %v3951
        %v3953 = vpop.f32.mrb[0].mxu0
        %v3954 = vpop.f32.mrb[0].mxu0
        %v3955 = vadd.f32 0.0, %v3954
        %v3956 = vpop.f32.mrb[0].mxu0
        %3957 = vdwg.mxu0
        %v3958 = vmul.f32 %v3952, 0.25
        %v3959 = vmul.f32 %v3955, 0.25
        %v3960 = vsel %vm2950, %v3958, -inf
        %3961 = vmax.xlane.f32.xlu0 %v3960
        %v3962 = vpop.xlane.xlu0 %3961
        %v3963 = vsel %vm2950, %v3959, -inf
        %3964 = vmax.xlane.f32.xlu0 %v3963
        %v3965 = vpop.xlane.xlu0 %3964
        %v3966 = vsub.f32 %v3958, %v3962
        %v3967 = vsub.f32 %v3959, %v3965
        %v3968 = vmul.f32 %v3966, 1.442695
        %v3969 = vpow.pop %v3968
        %v3970 = vmul.f32 %v3967, 1.442695
        %v3971 = vpow.pop %v3970
        %v3972 = vsel %vm2950, %v3969, 0.0
        %3973 = vadd.xlane.f32.xlu0 %v3972
        %v3974 = vpop.xlane.xlu0 %3973
        %v3975 = vsel %vm2950, %v3971, 0.0
        %3976 = vadd.xlane.f32.xlu0 %v3975
        %v3977 = vpop.xlane.xlu0 %3976
        %v3978 = vrcp.pop %v3974
        %v3979 = vrcp.pop %v3977
        %v3980 = vmul.f32 %v3969, %v3978
        %v3981 = vmul.f32 %v3971, %v3979
        %v3982 = vpack.c.bf16 %v3981, %v3980
        %3983 = vrot.lane.b32.xlu0 %v3514, 80
        %v3984 = vpop.permute.xlu0 %3983
        %3985 = vrot.lane.b32.xlu0 %v3515, 80
        %v3986 = vpop.permute.xlu0 %3985
        %v3990 = vsel %vm2950, %v3982, 0
        %3992 = vmatprep.subr.bf16.mxu0 0
        %3993 = vmatpush1.bf16.msra.mxu0 %v3984
        %3994 = vmatprep.subr.bf16.mxu0 0
        %3995 = vmatpush1.bf16.msra.mxu0 %v3986
        %3996 = vmatprep.subr.bf16.mxu0 0
        %3997 = vmatpush1.bf16.msra.mxu0 0
        %3998 = vmatprep.subr.bf16.mxu0 0
        %3999 = vmatpush1.bf16.msra.mxu0 0
        %4000 = vmatprep.subr.bf16.mxu0 0
        %4001 = vmatpush1.bf16.msra.mxu0 0
        %4002 = vmatprep.subr.bf16.mxu0 0
        %4003 = vmatpush1.bf16.msra.mxu0 0
        %4004 = vmatprep.subr.bf16.mxu0 0
        %4005 = vmatpush1.bf16.msra.mxu0 0
        %4006 = vmatprep.subr.bf16.mxu0 0
        %4007 = vmatpush1.bf16.msra.mxu0 0
        %4008 = vmatprep.subr.bf16.mxu0 0
        %4009 = vmatpush1.bf16.msra.mxu0 0
        %4010 = vmatprep.subr.bf16.mxu0 0
        %4011 = vmatpush1.bf16.msra.mxu0 0
        %4012 = vmatprep.subr.bf16.mxu0 0
        %4013 = vmatpush1.bf16.msra.mxu0 0
        %4014 = vmatprep.subr.bf16.mxu0 0
        %4015 = vmatpush1.bf16.msra.mxu0 0
        %4016 = vmatprep.subr.bf16.mxu0 0
        %4017 = vmatpush1.bf16.msra.mxu0 0
        %4018 = vmatprep.subr.bf16.mxu0 0
        %4019 = vmatpush1.bf16.msra.mxu0 0
        %4020 = vmatprep.subr.bf16.mxu0 0
        %4021 = vmatpush1.bf16.msra.mxu0 0
        %4022 = vmatprep.subr.bf16.mxu0 0
        %4023 = vmatpush1.bf16.msra.mxu0 0
        %4024 = vmatprep.mubr.bf16.mxu0 0
        %4025 = vmatmul.mubr.bf16.gmra.mrb[0].mxu0 %v3990
        %v4026 = vpop.f32.mrb[0].mxu0
        %v4027 = vadd.f32 0.0, %v4026
        %v4028 = vpop.f32.mrb[0].mxu0
        %v4029 = vpop.f32.mrb[0].mxu0
        %v4030 = vadd.f32 0.0, %v4029
        %v4031 = vpop.f32.mrb[0].mxu0
        %4032 = vdwg.mxu0
        %4033 = vrot.lane.b32.xlu0 %v3281, 64
        %v4034 = vpop.permute.xlu0 %4033
        %4035 = vrot.lane.b32.xlu0 %v3397, 64
        %v4036 = vpop.permute.xlu0 %4035
        %4037 = vrot.lane.b32.xlu0 %v3398, 64
        %v4038 = vpop.permute.xlu0 %4037
        %v4040 = vsel %vm1911, %v4034, 0
        %v4043 = vsel %vm1911, %v4036, 0
        %v4046 = vsel %vm1911, %v4038, 0
        %4048 = vmatprep.subr.bf16.mxu0 0
        %4049 = vmatpush1.bf16.xpose.msra.mxu0 %v4043
        %4050 = vmatprep.subr.bf16.mxu0 0
        %4051 = vmatpush1.bf16.xpose.msra.mxu0 %v4046
        %4052 = vmatprep.subr.bf16.mxu0 0
        %4053 = vmatpush1.bf16.xpose.msra.mxu0 0
        %4054 = vmatprep.subr.bf16.mxu0 0
        %4055 = vmatpush1.bf16.xpose.msra.mxu0 0
        %4056 = vmatprep.subr.bf16.mxu0 0
        %4057 = vmatpush1.bf16.xpose.msra.mxu0 0
        %4058 = vmatprep.subr.bf16.mxu0 0
        %4059 = vmatpush1.bf16.xpose.msra.mxu0 0
        %4060 = vmatprep.subr.bf16.mxu0 0
        %4061 = vmatpush1.bf16.xpose.msra.mxu0 0
        %4062 = vmatprep.subr.bf16.mxu0 0
        %4063 = vmatpush1.bf16.xpose.msra.mxu0 0
        %4064 = vmatprep.subr.bf16.mxu0 0
        %4065 = vmatpush1.bf16.xpose.msra.mxu0 0
        %4066 = vmatprep.subr.bf16.mxu0 0
        %4067 = vmatpush1.bf16.xpose.msra.mxu0 0
        %4068 = vmatprep.subr.bf16.mxu0 0
        %4069 = vmatpush1.bf16.xpose.msra.mxu0 0
        %4070 = vmatprep.subr.bf16.mxu0 0
        %4071 = vmatpush1.bf16.xpose.msra.mxu0 0
        %4072 = vmatprep.subr.bf16.mxu0 0
        %4073 = vmatpush1.bf16.xpose.msra.mxu0 0
        %4074 = vmatprep.subr.bf16.mxu0 0
        %4075 = vmatpush1.bf16.xpose.msra.mxu0 0
        %4076 = vmatprep.subr.bf16.mxu0 0
        %4077 = vmatpush1.bf16.xpose.msra.mxu0 0
        %4078 = vmatprep.subr.bf16.mxu0 0
        %4079 = vmatpush1.bf16.xpose.msra.mxu0 0
        %4080 = vmatprep.mubr.bf16.mxu0 0
        %4081 = vmatmul.mubr.bf16.gmra.mrb[0].mxu0 %v4040
        %v4082 = vpop.f32.mrb[0].mxu0
        %v4083 = vadd.f32 0.0, %v4082
        %v4084 = vpop.f32.mrb[0].mxu0
        %v4085 = vpop.f32.mrb[0].mxu0
        %v4086 = vadd.f32 0.0, %v4085
        %v4087 = vpop.f32.mrb[0].mxu0
        %4088 = vdwg.mxu0
        %v4089 = vmul.f32 %v4083, 0.25
        %v4090 = vmul.f32 %v4086, 0.25
        %v4091 = vsel %vm2950, %v4089, -inf
        %4092 = vmax.xlane.f32.xlu0 %v4091
        %v4093 = vpop.xlane.xlu0 %4092
        %v4094 = vsel %vm2950, %v4090, -inf
        %4095 = vmax.xlane.f32.xlu0 %v4094
        %v4096 = vpop.xlane.xlu0 %4095
        %v4097 = vsub.f32 %v4089, %v4093
        %v4098 = vsub.f32 %v4090, %v4096
        %v4099 = vmul.f32 %v4097, 1.442695
        %v4100 = vpow.pop %v4099
        %v4101 = vmul.f32 %v4098, 1.442695
        %v4102 = vpow.pop %v4101
        %v4103 = vsel %vm2950, %v4100, 0.0
        %4104 = vadd.xlane.f32.xlu0 %v4103
        %v4105 = vpop.xlane.xlu0 %4104
        %v4106 = vsel %vm2950, %v4102, 0.0
        %4107 = vadd.xlane.f32.xlu0 %v4106
        %v4108 = vpop.xlane.xlu0 %4107
        %v4109 = vrcp.pop %v4105
        %v4110 = vrcp.pop %v4108
        %v4111 = vmul.f32 %v4100, %v4109
        %v4112 = vmul.f32 %v4102, %v4110
        %v4113 = vpack.c.bf16 %v4112, %v4111
        %4114 = vrot.lane.b32.xlu0 %v3514, 64
        %v4115 = vpop.permute.xlu0 %4114
        %4116 = vrot.lane.b32.xlu0 %v3515, 64
        %v4117 = vpop.permute.xlu0 %4116
        %v4121 = vsel %vm2950, %v4113, 0
        %4123 = vmatprep.subr.bf16.mxu0 0
        %4124 = vmatpush1.bf16.msra.mxu0 %v4115
        %4125 = vmatprep.subr.bf16.mxu0 0
        %4126 = vmatpush1.bf16.msra.mxu0 %v4117
        %4127 = vmatprep.subr.bf16.mxu0 0
        %4128 = vmatpush1.bf16.msra.mxu0 0
        %4129 = vmatprep.subr.bf16.mxu0 0
        %4130 = vmatpush1.bf16.msra.mxu0 0
        %4131 = vmatprep.subr.bf16.mxu0 0
        %4132 = vmatpush1.bf16.msra.mxu0 0
        %4133 = vmatprep.subr.bf16.mxu0 0
        %4134 = vmatpush1.bf16.msra.mxu0 0
        %4135 = vmatprep.subr.bf16.mxu0 0
        %4136 = vmatpush1.bf16.msra.mxu0 0
        %4137 = vmatprep.subr.bf16.mxu0 0
        %4138 = vmatpush1.bf16.msra.mxu0 0
        %4139 = vmatprep.subr.bf16.mxu0 0
        %4140 = vmatpush1.bf16.msra.mxu0 0
        %4141 = vmatprep.subr.bf16.mxu0 0
        %4142 = vmatpush1.bf16.msra.mxu0 0
        %4143 = vmatprep.subr.bf16.mxu0 0
        %4144 = vmatpush1.bf16.msra.mxu0 0
        %4145 = vmatprep.subr.bf16.mxu0 0
        %4146 = vmatpush1.bf16.msra.mxu0 0
        %4147 = vmatprep.subr.bf16.mxu0 0
        %4148 = vmatpush1.bf16.msra.mxu0 0
        %4149 = vmatprep.subr.bf16.mxu0 0
        %4150 = vmatpush1.bf16.msra.mxu0 0
        %4151 = vmatprep.subr.bf16.mxu0 0
        %4152 = vmatpush1.bf16.msra.mxu0 0
        %4153 = vmatprep.subr.bf16.mxu0 0
        %4154 = vmatpush1.bf16.msra.mxu0 0
        %4155 = vmatprep.mubr.bf16.mxu0 0
        %4156 = vmatmul.mubr.bf16.gmra.mrb[0].mxu0 %v4121
        %v4157 = vpop.f32.mrb[0].mxu0
        %v4158 = vadd.f32 0.0, %v4157
        %v4159 = vpop.f32.mrb[0].mxu0
        %v4160 = vpop.f32.mrb[0].mxu0
        %v4161 = vadd.f32 0.0, %v4160
        %v4162 = vpop.f32.mrb[0].mxu0
        %4163 = vdwg.mxu0
        %4164 = vrot.lane.b32.xlu0 %v3281, 48
        %v4165 = vpop.permute.xlu0 %4164
        %4166 = vrot.lane.b32.xlu0 %v3397, 48
        %v4167 = vpop.permute.xlu0 %4166
        %4168 = vrot.lane.b32.xlu0 %v3398, 48
        %v4169 = vpop.permute.xlu0 %4168
        %v4171 = vsel %vm1911, %v4165, 0
        %v4174 = vsel %vm1911, %v4167, 0
        %v4177 = vsel %vm1911, %v4169, 0
        %4179 = vmatprep.subr.bf16.mxu0 0
        %4180 = vmatpush1.bf16.xpose.msra.mxu0 %v4174
        %4181 = vmatprep.subr.bf16.mxu0 0
        %4182 = vmatpush1.bf16.xpose.msra.mxu0 %v4177
        %4183 = vmatprep.subr.bf16.mxu0 0
        %4184 = vmatpush1.bf16.xpose.msra.mxu0 0
        %4185 = vmatprep.subr.bf16.mxu0 0
        %4186 = vmatpush1.bf16.xpose.msra.mxu0 0
        %4187 = vmatprep.subr.bf16.mxu0 0
        %4188 = vmatpush1.bf16.xpose.msra.mxu0 0
        %4189 = vmatprep.subr.bf16.mxu0 0
        %4190 = vmatpush1.bf16.xpose.msra.mxu0 0
        %4191 = vmatprep.subr.bf16.mxu0 0
        %4192 = vmatpush1.bf16.xpose.msra.mxu0 0
        %4193 = vmatprep.subr.bf16.mxu0 0
        %4194 = vmatpush1.bf16.xpose.msra.mxu0 0
        %4195 = vmatprep.subr.bf16.mxu0 0
        %4196 = vmatpush1.bf16.xpose.msra.mxu0 0
        %4197 = vmatprep.subr.bf16.mxu0 0
        %4198 = vmatpush1.bf16.xpose.msra.mxu0 0
        %4199 = vmatprep.subr.bf16.mxu0 0
        %4200 = vmatpush1.bf16.xpose.msra.mxu0 0
        %4201 = vmatprep.subr.bf16.mxu0 0
        %4202 = vmatpush1.bf16.xpose.msra.mxu0 0
        %4203 = vmatprep.subr.bf16.mxu0 0
        %4204 = vmatpush1.bf16.xpose.msra.mxu0 0
        %4205 = vmatprep.subr.bf16.mxu0 0
        %4206 = vmatpush1.bf16.xpose.msra.mxu0 0
        %4207 = vmatprep.subr.bf16.mxu0 0
        %4208 = vmatpush1.bf16.xpose.msra.mxu0 0
        %4209 = vmatprep.subr.bf16.mxu0 0
        %4210 = vmatpush1.bf16.xpose.msra.mxu0 0
        %4211 = vmatprep.mubr.bf16.mxu0 0
        %4212 = vmatmul.mubr.bf16.gmra.mrb[0].mxu0 %v4171
        %v4213 = vpop.f32.mrb[0].mxu0
        %v4214 = vadd.f32 0.0, %v4213
        %v4215 = vpop.f32.mrb[0].mxu0
        %v4216 = vpop.f32.mrb[0].mxu0
        %v4217 = vadd.f32 0.0, %v4216
        %v4218 = vpop.f32.mrb[0].mxu0
        %4219 = vdwg.mxu0
        %v4220 = vmul.f32 %v4214, 0.25
        %v4221 = vmul.f32 %v4217, 0.25
        %v4222 = vsel %vm2950, %v4220, -inf
        %4223 = vmax.xlane.f32.xlu0 %v4222
        %v4224 = vpop.xlane.xlu0 %4223
        %v4225 = vsel %vm2950, %v4221, -inf
        %4226 = vmax.xlane.f32.xlu0 %v4225
        %v4227 = vpop.xlane.xlu0 %4226
        %v4228 = vsub.f32 %v4220, %v4224
        %v4229 = vsub.f32 %v4221, %v4227
        %v4230 = vmul.f32 %v4228, 1.442695
        %v4231 = vpow.pop %v4230
        %v4232 = vmul.f32 %v4229, 1.442695
        %v4233 = vpow.pop %v4232
        %v4234 = vsel %vm2950, %v4231, 0.0
        %4235 = vadd.xlane.f32.xlu0 %v4234
        %v4236 = vpop.xlane.xlu0 %4235
        %v4237 = vsel %vm2950, %v4233, 0.0
        %4238 = vadd.xlane.f32.xlu0 %v4237
        %v4239 = vpop.xlane.xlu0 %4238
        %v4240 = vrcp.pop %v4236
        %v4241 = vrcp.pop %v4239
        %v4242 = vmul.f32 %v4231, %v4240
        %v4243 = vmul.f32 %v4233, %v4241
        %v4244 = vpack.c.bf16 %v4243, %v4242
        %4245 = vrot.lane.b32.xlu0 %v3514, 48
        %v4246 = vpop.permute.xlu0 %4245
        %4247 = vrot.lane.b32.xlu0 %v3515, 48
        %v4248 = vpop.permute.xlu0 %4247
        %v4252 = vsel %vm2950, %v4244, 0
        %4254 = vmatprep.subr.bf16.mxu0 0
        %4255 = vmatpush1.bf16.msra.mxu0 %v4246
        %4256 = vmatprep.subr.bf16.mxu0 0
        %4257 = vmatpush1.bf16.msra.mxu0 %v4248
        %4258 = vmatprep.subr.bf16.mxu0 0
        %4259 = vmatpush1.bf16.msra.mxu0 0
        %4260 = vmatprep.subr.bf16.mxu0 0
        %4261 = vmatpush1.bf16.msra.mxu0 0
        %4262 = vmatprep.subr.bf16.mxu0 0
        %4263 = vmatpush1.bf16.msra.mxu0 0
        %4264 = vmatprep.subr.bf16.mxu0 0
        %4265 = vmatpush1.bf16.msra.mxu0 0
        %4266 = vmatprep.subr.bf16.mxu0 0
        %4267 = vmatpush1.bf16.msra.mxu0 0
        %4268 = vmatprep.subr.bf16.mxu0 0
        %4269 = vmatpush1.bf16.msra.mxu0 0
        %4270 = vmatprep.subr.bf16.mxu0 0
        %4271 = vmatpush1.bf16.msra.mxu0 0
        %4272 = vmatprep.subr.bf16.mxu0 0
        %4273 = vmatpush1.bf16.msra.mxu0 0
        %4274 = vmatprep.subr.bf16.mxu0 0
        %4275 = vmatpush1.bf16.msra.mxu0 0
        %4276 = vmatprep.subr.bf16.mxu0 0
        %4277 = vmatpush1.bf16.msra.mxu0 0
        %4278 = vmatprep.subr.bf16.mxu0 0
        %4279 = vmatpush1.bf16.msra.mxu0 0
        %4280 = vmatprep.subr.bf16.mxu0 0
        %4281 = vmatpush1.bf16.msra.mxu0 0
        %4282 = vmatprep.subr.bf16.mxu0 0
        %4283 = vmatpush1.bf16.msra.mxu0 0
        %4284 = vmatprep.subr.bf16.mxu0 0
        %4285 = vmatpush1.bf16.msra.mxu0 0
        %4286 = vmatprep.mubr.bf16.mxu0 0
        %4287 = vmatmul.mubr.bf16.gmra.mrb[0].mxu0 %v4252
        %v4288 = vpop.f32.mrb[0].mxu0
        %v4289 = vadd.f32 0.0, %v4288
        %v4290 = vpop.f32.mrb[0].mxu0
        %v4291 = vpop.f32.mrb[0].mxu0
        %v4292 = vadd.f32 0.0, %v4291
        %v4293 = vpop.f32.mrb[0].mxu0
        %4294 = vdwg.mxu0
        %4295 = vrot.lane.b32.xlu0 %v3281, 32
        %v4296 = vpop.permute.xlu0 %4295
        %4297 = vrot.lane.b32.xlu0 %v3397, 32
        %v4298 = vpop.permute.xlu0 %4297
        %4299 = vrot.lane.b32.xlu0 %v3398, 32
        %v4300 = vpop.permute.xlu0 %4299
        %v4302 = vsel %vm1911, %v4296, 0
        %v4305 = vsel %vm1911, %v4298, 0
        %v4308 = vsel %vm1911, %v4300, 0
        %4310 = vmatprep.subr.bf16.mxu0 0
        %4311 = vmatpush1.bf16.xpose.msra.mxu0 %v4305
        %4312 = vmatprep.subr.bf16.mxu0 0
        %4313 = vmatpush1.bf16.xpose.msra.mxu0 %v4308
        %4314 = vmatprep.subr.bf16.mxu0 0
        %4315 = vmatpush1.bf16.xpose.msra.mxu0 0
        %4316 = vmatprep.subr.bf16.mxu0 0
        %4317 = vmatpush1.bf16.xpose.msra.mxu0 0
        %4318 = vmatprep.subr.bf16.mxu0 0
        %4319 = vmatpush1.bf16.xpose.msra.mxu0 0
        %4320 = vmatprep.subr.bf16.mxu0 0
        %4321 = vmatpush1.bf16.xpose.msra.mxu0 0
        %4322 = vmatprep.subr.bf16.mxu0 0
        %4323 = vmatpush1.bf16.xpose.msra.mxu0 0
        %4324 = vmatprep.subr.bf16.mxu0 0
        %4325 = vmatpush1.bf16.xpose.msra.mxu0 0
        %4326 = vmatprep.subr.bf16.mxu0 0
        %4327 = vmatpush1.bf16.xpose.msra.mxu0 0
        %4328 = vmatprep.subr.bf16.mxu0 0
        %4329 = vmatpush1.bf16.xpose.msra.mxu0 0
        %4330 = vmatprep.subr.bf16.mxu0 0
        %4331 = vmatpush1.bf16.xpose.msra.mxu0 0
        %4332 = vmatprep.subr.bf16.mxu0 0
        %4333 = vmatpush1.bf16.xpose.msra.mxu0 0
        %4334 = vmatprep.subr.bf16.mxu0 0
        %4335 = vmatpush1.bf16.xpose.msra.mxu0 0
        %4336 = vmatprep.subr.bf16.mxu0 0
        %4337 = vmatpush1.bf16.xpose.msra.mxu0 0
        %4338 = vmatprep.subr.bf16.mxu0 0
        %4339 = vmatpush1.bf16.xpose.msra.mxu0 0
        %4340 = vmatprep.subr.bf16.mxu0 0
        %4341 = vmatpush1.bf16.xpose.msra.mxu0 0
        %4342 = vmatprep.mubr.bf16.mxu0 0
        %4343 = vmatmul.mubr.bf16.gmra.mrb[0].mxu0 %v4302
        %v4344 = vpop.f32.mrb[0].mxu0
        %v4345 = vadd.f32 0.0, %v4344
        %v4346 = vpop.f32.mrb[0].mxu0
        %v4347 = vpop.f32.mrb[0].mxu0
        %v4348 = vadd.f32 0.0, %v4347
        %v4349 = vpop.f32.mrb[0].mxu0
        %4350 = vdwg.mxu0
        %v4351 = vmul.f32 %v4345, 0.25
        %v4352 = vmul.f32 %v4348, 0.25
        %v4353 = vsel %vm2950, %v4351, -inf
        %4354 = vmax.xlane.f32.xlu0 %v4353
        %v4355 = vpop.xlane.xlu0 %4354
        %v4356 = vsel %vm2950, %v4352, -inf
        %4357 = vmax.xlane.f32.xlu0 %v4356
        %v4358 = vpop.xlane.xlu0 %4357
        %v4359 = vsub.f32 %v4351, %v4355
        %v4360 = vsub.f32 %v4352, %v4358
        %v4361 = vmul.f32 %v4359, 1.442695
        %v4362 = vpow.pop %v4361
        %v4363 = vmul.f32 %v4360, 1.442695
        %v4364 = vpow.pop %v4363
        %v4365 = vsel %vm2950, %v4362, 0.0
        %4366 = vadd.xlane.f32.xlu0 %v4365
        %v4367 = vpop.xlane.xlu0 %4366
        %v4368 = vsel %vm2950, %v4364, 0.0
        %4369 = vadd.xlane.f32.xlu0 %v4368
        %v4370 = vpop.xlane.xlu0 %4369
        %v4371 = vrcp.pop %v4367
        %v4372 = vrcp.pop %v4370
        %v4373 = vmul.f32 %v4362, %v4371
        %v4374 = vmul.f32 %v4364, %v4372
        %v4375 = vpack.c.bf16 %v4374, %v4373
        %4376 = vrot.lane.b32.xlu0 %v3514, 32
        %v4377 = vpop.permute.xlu0 %4376
        %4378 = vrot.lane.b32.xlu0 %v3515, 32
        %v4379 = vpop.permute.xlu0 %4378
        %v4383 = vsel %vm2950, %v4375, 0
        %4385 = vmatprep.subr.bf16.mxu0 0
        %4386 = vmatpush1.bf16.msra.mxu0 %v4377
        %4387 = vmatprep.subr.bf16.mxu0 0
        %4388 = vmatpush1.bf16.msra.mxu0 %v4379
        %4389 = vmatprep.subr.bf16.mxu0 0
        %4390 = vmatpush1.bf16.msra.mxu0 0
        %4391 = vmatprep.subr.bf16.mxu0 0
        %4392 = vmatpush1.bf16.msra.mxu0 0
        %4393 = vmatprep.subr.bf16.mxu0 0
        %4394 = vmatpush1.bf16.msra.mxu0 0
        %4395 = vmatprep.subr.bf16.mxu0 0
        %4396 = vmatpush1.bf16.msra.mxu0 0
        %4397 = vmatprep.subr.bf16.mxu0 0
        %4398 = vmatpush1.bf16.msra.mxu0 0
        %4399 = vmatprep.subr.bf16.mxu0 0
        %4400 = vmatpush1.bf16.msra.mxu0 0
        %4401 = vmatprep.subr.bf16.mxu0 0
        %4402 = vmatpush1.bf16.msra.mxu0 0
        %4403 = vmatprep.subr.bf16.mxu0 0
        %4404 = vmatpush1.bf16.msra.mxu0 0
        %4405 = vmatprep.subr.bf16.mxu0 0
        %4406 = vmatpush1.bf16.msra.mxu0 0
        %4407 = vmatprep.subr.bf16.mxu0 0
        %4408 = vmatpush1.bf16.msra.mxu0 0
        %4409 = vmatprep.subr.bf16.mxu0 0
        %4410 = vmatpush1.bf16.msra.mxu0 0
        %4411 = vmatprep.subr.bf16.mxu0 0
        %4412 = vmatpush1.bf16.msra.mxu0 0
        %4413 = vmatprep.subr.bf16.mxu0 0
        %4414 = vmatpush1.bf16.msra.mxu0 0
        %4415 = vmatprep.subr.bf16.mxu0 0
        %4416 = vmatpush1.bf16.msra.mxu0 0
        %4417 = vmatprep.mubr.bf16.mxu0 0
        %4418 = vmatmul.mubr.bf16.gmra.mrb[0].mxu0 %v4383
        %v4419 = vpop.f32.mrb[0].mxu0
        %v4420 = vadd.f32 0.0, %v4419
        %v4421 = vpop.f32.mrb[0].mxu0
        %v4422 = vpop.f32.mrb[0].mxu0
        %v4423 = vadd.f32 0.0, %v4422
        %v4424 = vpop.f32.mrb[0].mxu0
        %4425 = vdwg.mxu0
        %4426 = vrot.lane.b32.xlu0 %v3281, 16
        %v4427 = vpop.permute.xlu0 %4426
        %4428 = vrot.lane.b32.xlu0 %v3397, 16
        %v4429 = vpop.permute.xlu0 %4428
        %4430 = vrot.lane.b32.xlu0 %v3398, 16
        %v4431 = vpop.permute.xlu0 %4430
        %v4433 = vsel %vm1911, %v4427, 0
        %v4436 = vsel %vm1911, %v4429, 0
        %v4439 = vsel %vm1911, %v4431, 0
        %4441 = vmatprep.subr.bf16.mxu0 0
        %4442 = vmatpush1.bf16.xpose.msra.mxu0 %v4436
        %4443 = vmatprep.subr.bf16.mxu0 0
        %4444 = vmatpush1.bf16.xpose.msra.mxu0 %v4439
        %4445 = vmatprep.subr.bf16.mxu0 0
        %4446 = vmatpush1.bf16.xpose.msra.mxu0 0
        %4447 = vmatprep.subr.bf16.mxu0 0
        %4448 = vmatpush1.bf16.xpose.msra.mxu0 0
        %4449 = vmatprep.subr.bf16.mxu0 0
        %4450 = vmatpush1.bf16.xpose.msra.mxu0 0
        %4451 = vmatprep.subr.bf16.mxu0 0
        %4452 = vmatpush1.bf16.xpose.msra.mxu0 0
        %4453 = vmatprep.subr.bf16.mxu0 0
        %4454 = vmatpush1.bf16.xpose.msra.mxu0 0
        %4455 = vmatprep.subr.bf16.mxu0 0
        %4456 = vmatpush1.bf16.xpose.msra.mxu0 0
        %4457 = vmatprep.subr.bf16.mxu0 0
        %4458 = vmatpush1.bf16.xpose.msra.mxu0 0
        %4459 = vmatprep.subr.bf16.mxu0 0
        %4460 = vmatpush1.bf16.xpose.msra.mxu0 0
        %4461 = vmatprep.subr.bf16.mxu0 0
        %4462 = vmatpush1.bf16.xpose.msra.mxu0 0
        %4463 = vmatprep.subr.bf16.mxu0 0
        %4464 = vmatpush1.bf16.xpose.msra.mxu0 0
        %4465 = vmatprep.subr.bf16.mxu0 0
        %4466 = vmatpush1.bf16.xpose.msra.mxu0 0
        %4467 = vmatprep.subr.bf16.mxu0 0
        %4468 = vmatpush1.bf16.xpose.msra.mxu0 0
        %4469 = vmatprep.subr.bf16.mxu0 0
        %4470 = vmatpush1.bf16.xpose.msra.mxu0 0
        %4471 = vmatprep.subr.bf16.mxu0 0
        %4472 = vmatpush1.bf16.xpose.msra.mxu0 0
        %4473 = vmatprep.mubr.bf16.mxu0 0
        %4474 = vmatmul.mubr.bf16.gmra.mrb[0].mxu0 %v4433
        %v4475 = vpop.f32.mrb[0].mxu0
        %v4476 = vadd.f32 0.0, %v4475
        %v4477 = vpop.f32.mrb[0].mxu0
        %v4478 = vpop.f32.mrb[0].mxu0
        %v4479 = vadd.f32 0.0, %v4478
        %v4480 = vpop.f32.mrb[0].mxu0
        %4481 = vdwg.mxu0
        %v4482 = vmul.f32 %v4476, 0.25
        %v4483 = vmul.f32 %v4479, 0.25
        %v4484 = vsel %vm2950, %v4482, -inf
        %4485 = vmax.xlane.f32.xlu0 %v4484
        %v4486 = vpop.xlane.xlu0 %4485
        %v4487 = vsel %vm2950, %v4483, -inf
        %4488 = vmax.xlane.f32.xlu0 %v4487
        %v4489 = vpop.xlane.xlu0 %4488
        %v4490 = vsub.f32 %v4482, %v4486
        %v4491 = vsub.f32 %v4483, %v4489
        %v4492 = vmul.f32 %v4490, 1.442695
        %v4493 = vpow.pop %v4492
        %v4494 = vmul.f32 %v4491, 1.442695
        %v4495 = vpow.pop %v4494
        %v4496 = vsel %vm2950, %v4493, 0.0
        %4497 = vadd.xlane.f32.xlu0 %v4496
        %v4498 = vpop.xlane.xlu0 %4497
        %v4499 = vsel %vm2950, %v4495, 0.0
        %4500 = vadd.xlane.f32.xlu0 %v4499
        %v4501 = vpop.xlane.xlu0 %4500
        %v4502 = vrcp.pop %v4498
        %v4503 = vrcp.pop %v4501
        %v4504 = vmul.f32 %v4493, %v4502
        %v4505 = vmul.f32 %v4495, %v4503
        %v4506 = vpack.c.bf16 %v4505, %v4504
        %4507 = vrot.lane.b32.xlu0 %v3514, 16
        %v4508 = vpop.permute.xlu0 %4507
        %4509 = vrot.lane.b32.xlu0 %v3515, 16
        %v4510 = vpop.permute.xlu0 %4509
        %v4514 = vsel %vm2950, %v4506, 0
        %4516 = vmatprep.subr.bf16.mxu0 0
        %4517 = vmatpush1.bf16.msra.mxu0 %v4508
        %4518 = vmatprep.subr.bf16.mxu0 0
        %4519 = vmatpush1.bf16.msra.mxu0 %v4510
        %4520 = vmatprep.subr.bf16.mxu0 0
        %4521 = vmatpush1.bf16.msra.mxu0 0
        %4522 = vmatprep.subr.bf16.mxu0 0
        %4523 = vmatpush1.bf16.msra.mxu0 0
        %4524 = vmatprep.subr.bf16.mxu0 0
        %4525 = vmatpush1.bf16.msra.mxu0 0
        %4526 = vmatprep.subr.bf16.mxu0 0
        %4527 = vmatpush1.bf16.msra.mxu0 0
        %4528 = vmatprep.subr.bf16.mxu0 0
        %4529 = vmatpush1.bf16.msra.mxu0 0
        %4530 = vmatprep.subr.bf16.mxu0 0
        %4531 = vmatpush1.bf16.msra.mxu0 0
        %4532 = vmatprep.subr.bf16.mxu0 0
        %4533 = vmatpush1.bf16.msra.mxu0 0
        %4534 = vmatprep.subr.bf16.mxu0 0
        %4535 = vmatpush1.bf16.msra.mxu0 0
        %4536 = vmatprep.subr.bf16.mxu0 0
        %4537 = vmatpush1.bf16.msra.mxu0 0
        %4538 = vmatprep.subr.bf16.mxu0 0
        %4539 = vmatpush1.bf16.msra.mxu0 0
        %4540 = vmatprep.subr.bf16.mxu0 0
        %4541 = vmatpush1.bf16.msra.mxu0 0
        %4542 = vmatprep.subr.bf16.mxu0 0
        %4543 = vmatpush1.bf16.msra.mxu0 0
        %4544 = vmatprep.subr.bf16.mxu0 0
        %4545 = vmatpush1.bf16.msra.mxu0 0
        %4546 = vmatprep.subr.bf16.mxu0 0
        %4547 = vmatpush1.bf16.msra.mxu0 0
        %4548 = vmatprep.mubr.bf16.mxu0 0
        %4549 = vmatmul.mubr.bf16.gmra.mrb[0].mxu0 %v4514
        %v4550 = vpop.f32.mrb[0].mxu0
        %v4551 = vadd.f32 0.0, %v4550
        %v4552 = vpop.f32.mrb[0].mxu0
        %v4553 = vpop.f32.mrb[0].mxu0
        %v4554 = vadd.f32 0.0, %v4553
        %v4555 = vpop.f32.mrb[0].mxu0
        %4556 = vdwg.mxu0
        %4559 = vrot.lane.b32.xlu0 %v3765, 16
        %v4560 = vpop.permute.xlu0 %4559
        %4561 = vrot.lane.b32.xlu0 %v3768, 16
        %v4562 = vpop.permute.xlu0 %4561
        %4567 = vrot.lane.b32.xlu0 %v3896, 32
        %v4568 = vpop.permute.xlu0 %4567
        %4569 = vrot.lane.b32.xlu0 %v3899, 32
        %v4570 = vpop.permute.xlu0 %4569
        %4575 = vrot.lane.b32.xlu0 %v4027, 48
        %v4576 = vpop.permute.xlu0 %4575
        %4577 = vrot.lane.b32.xlu0 %v4030, 48
        %v4578 = vpop.permute.xlu0 %4577
        %4583 = vrot.lane.b32.xlu0 %v4158, 64
        %v4584 = vpop.permute.xlu0 %4583
        %4585 = vrot.lane.b32.xlu0 %v4161, 64
        %v4586 = vpop.permute.xlu0 %4585
        %4591 = vrot.lane.b32.xlu0 %v4289, 80
        %v4592 = vpop.permute.xlu0 %4591
        %4593 = vrot.lane.b32.xlu0 %v4292, 80
        %v4594 = vpop.permute.xlu0 %4593
        %4599 = vrot.lane.b32.xlu0 %v4420, 96
        %v4600 = vpop.permute.xlu0 %4599
        %4601 = vrot.lane.b32.xlu0 %v4423, 96
        %v4602 = vpop.permute.xlu0 %4601
        %4607 = vrot.lane.b32.xlu0 %v4551, 112
        %v4608 = vpop.permute.xlu0 %4607
        %4609 = vrot.lane.b32.xlu0 %v4554, 112
        %v4610 = vpop.permute.xlu0 %4609
        %v4613 = vsel %vm1911, %v3629, %v4560
        %v4614 = vsel %vm1911, %v3632, %v4562
        %v4615 = vsel %vm2950, %v4613, %v4568
        %v4616 = vsel %vm2950, %v4614, %v4570
        %v4617 = vsel %vm2953, %v4615, %v4576
        %v4618 = vsel %vm2953, %v4616, %v4578
        %v4619 = vsel %vm2956, %v4617, %v4584
        %v4620 = vsel %vm2956, %v4618, %v4586
        %v4621 = vsel %vm2959, %v4619, %v4592
        %v4622 = vsel %vm2959, %v4620, %v4594
        %v4623 = vsel %vm2962, %v4621, %v4600
        %v4624 = vsel %vm2962, %v4622, %v4602
        %v4625 = vsel %vm2965, %v4623, %v4608
        %v4626 = vsel %vm2965, %v4624, %v4610
        %v4627 = vpack.c.bf16 %v4626, %v4625
        %v4629 = vlaneseq
        %v4630 = vshrl.u32 %v4629, 7
        %v4631 = vsub.s32 0, %v4630
        %v4632 = vrot.slane %v3185, %v4631
        %v4650 = vunpack.c.l.b16 %v3169
        %v4651 = vunpack.c.l.b16 %v3170
        %v4652 = vunpack.c.l.b16 %v3171
        %v4653 = vunpack.c.l.b16 %v3172
        %v4654 = vunpack.c.l.b16 %v3173
        %v4655 = vunpack.c.l.b16 %v3174
        %v4656 = vunpack.c.l.b16 %v3175
        %v4657 = vunpack.c.l.b16 %v3176
        %v4658 = vunpack.c.l.b16 %v3177
        %v4659 = vunpack.c.l.b16 %v3178
        %v4660 = vunpack.c.l.b16 %v3179
        %v4661 = vunpack.c.l.b16 %v3180
        %v4662 = vunpack.c.l.b16 %v3181
        %v4663 = vunpack.c.l.b16 %v3182
        %v4664 = vunpack.c.l.b16 %v3183
        %v4665 = vunpack.c.l.b16 %v3184
        %v4666 = vpack.c.b16 %v4651, %v4650
        %v4667 = vpack.c.b16 %v4653, %v4652
        %v4668 = vpack.c.b16 %v4655, %v4654
        %v4669 = vpack.c.b16 %v4657, %v4656
        %v4670 = vpack.c.b16 %v4659, %v4658
        %v4671 = vpack.c.b16 %v4661, %v4660
        %v4672 = vpack.c.b16 %v4663, %v4662
        %v4673 = vpack.c.b16 %v4665, %v4664
        %4682 = vmatprep.subr.bf16.mxu0 0
        %4683 = vmatpush1.bf16.msra.mxu0 %v4666
        %4684 = vmatprep.subr.bf16.mxu0 0
        %4685 = vmatpush1.bf16.msra.mxu0 %v4667
        %4686 = vmatprep.subr.bf16.mxu0 0
        %4687 = vmatpush1.bf16.msra.mxu0 %v4668
        %4688 = vmatprep.subr.bf16.mxu0 0
        %4689 = vmatpush1.bf16.msra.mxu0 %v4669
        %4690 = vmatprep.subr.bf16.mxu0 0
        %4691 = vmatpush1.bf16.msra.mxu0 %v4670
        %4692 = vmatprep.subr.bf16.mxu0 0
        %4693 = vmatpush1.bf16.msra.mxu0 %v4671
        %4694 = vmatprep.subr.bf16.mxu0 0
        %4695 = vmatpush1.bf16.msra.mxu0 %v4672
        %4696 = vmatprep.subr.bf16.mxu0 0
        %4697 = vmatpush1.bf16.msra.mxu0 %v4673
        %4698 = vmatprep.subr.bf16.mxu0 0
        %4699 = vmatpush1.bf16.msra.mxu0 0
        %4700 = vmatprep.subr.bf16.mxu0 0
        %4701 = vmatpush1.bf16.msra.mxu0 0
        %4702 = vmatprep.subr.bf16.mxu0 0
        %4703 = vmatpush1.bf16.msra.mxu0 0
        %4704 = vmatprep.subr.bf16.mxu0 0
        %4705 = vmatpush1.bf16.msra.mxu0 0
        %4706 = vmatprep.subr.bf16.mxu0 0
        %4707 = vmatpush1.bf16.msra.mxu0 0
        %4708 = vmatprep.subr.bf16.mxu0 0
        %4709 = vmatpush1.bf16.msra.mxu0 0
        %4710 = vmatprep.subr.bf16.mxu0 0
        %4711 = vmatpush1.bf16.msra.mxu0 0
        %4712 = vmatprep.subr.bf16.mxu0 0
        %4713 = vmatpush1.bf16.msra.mxu0 0
        %4714 = vmatprep.mubr.bf16.mxu0 0
        %4715 = vmatmul.mubr.bf16.gmra.mrb[0].mxu0 %v4627
        %v4716 = vpop.f32.mrb[0].mxu0
        %v4717 = vadd.f32 %v4632, %v4716
        %v4718 = vpop.f32.mrb[0].mxu0
        %v4719 = vpop.f32.mrb[0].mxu0
        %v4720 = vadd.f32 %v4632, %v4719
        %v4721 = vpop.f32.mrb[0].mxu0
        %4722 = vdwg.mxu0
        %v4723 = vadd.f32 %v3105, %v4717
        %v4724 = vadd.f32 %v3106, %v4720
        %v4725 = vld [vmem:[#allocation37] sm:$0x1]
        %v4726 = vld [vmem:[#allocation38] sm:$0x1]
        %4727 = vadd.xlane.f32.xlu0 %v4723
        %v4728 = vpop.xlane.xlu0 %4727
        %4729 = vadd.xlane.f32.xlu0 %v4724
        %v4730 = vpop.xlane.xlu0 %4729
        %v4731 = vmul.f32 %v4728, %v3072
        %v4732 = vmul.f32 %v4730, %v3072
        %v4733 = vsub.f32 %v4723, %v4731
        %v4734 = vsub.f32 %v4724, %v4732
        %v4735 = vmul.f32 %v4733, %v4733
        %v4736 = vmul.f32 %v4734, %v4734
        %4737 = vadd.xlane.f32.xlu0 %v4735
        %v4738 = vpop.xlane.xlu0 %4737
        %4739 = vadd.xlane.f32.xlu0 %v4736
        %v4740 = vpop.xlane.xlu0 %4739
        %v4741 = vmul.f32 %v4738, %v3072
        %v4742 = vmul.f32 %v4740, %v3072
        %v4743 = vadd.f32 %v4741, 1e-05
        %v4744 = vadd.f32 %v4742, 1e-05
        %v4745 = vrsqrt.pop %v4743
        %v4746 = vrsqrt.pop %v4744
        %v4747 = vmul.f32 %v4733, %v4745
        %v4748 = vmul.f32 %v4734, %v4746
        %v4750 = vlaneseq
        %v4751 = vshrl.u32 %v4750, 7
        %v4752 = vsub.s32 0, %v4751
        %v4753 = vrot.slane %v4725, %v4752
        %v4755 = vmul.f32 %v4747, %v4753
        %v4756 = vmul.f32 %v4748, %v4753
        %v4758 = vlaneseq
        %v4759 = vshrl.u32 %v4758, 7
        %v4760 = vsub.s32 0, %v4759
        %v4761 = vrot.slane %v4726, %v4760
        %v4763 = vadd.f32 %v4755, %v4761
        %v4764 = vadd.f32 %v4756, %v4761
        %v4765 = vpack.c.bf16 %v4764, %v4763
        %v4766 = vld [vmem:[#allocation40] sm:$0xff]
        %v4767 = vld [vmem:[#allocation40 + $0x8] sm:$0xff]
        %v4768 = vld [vmem:[#allocation40 + $0x10] sm:$0xff]
        %v4769 = vld [vmem:[#allocation40 + $0x18] sm:$0xff]
        %v4770 = vld [vmem:[#allocation40 + $0x20] sm:$0xff]
        %v4771 = vld [vmem:[#allocation40 + $0x28] sm:$0xff]
        %v4772 = vld [vmem:[#allocation40 + $0x30] sm:$0xff]
        %v4773 = vld [vmem:[#allocation40 + $0x38] sm:$0xff]
        %v4774 = vld [vmem:[#allocation40 + $0x40] sm:$0xff]
        %v4775 = vld [vmem:[#allocation40 + $0x48] sm:$0xff]
        %v4776 = vld [vmem:[#allocation40 + $0x50] sm:$0xff]
        %v4777 = vld [vmem:[#allocation40 + $0x58] sm:$0xff]
        %v4778 = vld [vmem:[#allocation40 + $0x60] sm:$0xff]
        %v4779 = vld [vmem:[#allocation40 + $0x68] sm:$0xff]
        %v4780 = vld [vmem:[#allocation40 + $0x70] sm:$0xff]
        %v4781 = vld [vmem:[#allocation40 + $0x78] sm:$0xff]
        %v4782 = vld [vmem:[#allocation41] sm:$0x3]
        %v4784 = vlaneseq
        %v4785 = vshrl.u32 %v4784, 7
        %v4786 = vsub.s32 0, %v4785
        %v4787 = vrot.slane %v4782, %v4786
        %v4788 = vlaneseq
        %v4789 = vshrl.u32 %v4788, 7
        %v4790 = vsub.s32 1, %v4789
        %v4791 = vrot.slane %v4782, %v4790
        %v4810 = vunpack.c.l.b16 %v4766
        %v4811 = vunpack.c.h.b16 %v4766
        %v4812 = vunpack.c.l.b16 %v4767
        %v4813 = vunpack.c.h.b16 %v4767
        %v4814 = vunpack.c.l.b16 %v4768
        %v4815 = vunpack.c.h.b16 %v4768
        %v4816 = vunpack.c.l.b16 %v4769
        %v4817 = vunpack.c.h.b16 %v4769
        %v4818 = vunpack.c.l.b16 %v4770
        %v4819 = vunpack.c.h.b16 %v4770
        %v4820 = vunpack.c.l.b16 %v4771
        %v4821 = vunpack.c.h.b16 %v4771
        %v4822 = vunpack.c.l.b16 %v4772
        %v4823 = vunpack.c.h.b16 %v4772
        %v4824 = vunpack.c.l.b16 %v4773
        %v4825 = vunpack.c.h.b16 %v4773
        %v4826 = vunpack.c.l.b16 %v4774
        %v4827 = vunpack.c.h.b16 %v4774
        %v4828 = vunpack.c.l.b16 %v4775
        %v4829 = vunpack.c.h.b16 %v4775
        %v4830 = vunpack.c.l.b16 %v4776
        %v4831 = vunpack.c.h.b16 %v4776
        %v4832 = vunpack.c.l.b16 %v4777
        %v4833 = vunpack.c.h.b16 %v4777
        %v4834 = vunpack.c.l.b16 %v4778
        %v4835 = vunpack.c.h.b16 %v4778
        %v4836 = vunpack.c.l.b16 %v4779
        %v4837 = vunpack.c.h.b16 %v4779
        %v4838 = vunpack.c.l.b16 %v4780
        %v4839 = vunpack.c.h.b16 %v4780
        %v4840 = vunpack.c.l.b16 %v4781
        %v4841 = vunpack.c.h.b16 %v4781
        %v4842 = vpack.c.b16 %v4812, %v4810
        %v4843 = vpack.c.b16 %v4813, %v4811
        %v4844 = vpack.c.b16 %v4816, %v4814
        %v4845 = vpack.c.b16 %v4817, %v4815
        %v4846 = vpack.c.b16 %v4820, %v4818
        %v4847 = vpack.c.b16 %v4821, %v4819
        %v4848 = vpack.c.b16 %v4824, %v4822
        %v4849 = vpack.c.b16 %v4825, %v4823
        %v4850 = vpack.c.b16 %v4828, %v4826
        %v4851 = vpack.c.b16 %v4829, %v4827
        %v4852 = vpack.c.b16 %v4832, %v4830
        %v4853 = vpack.c.b16 %v4833, %v4831
        %v4854 = vpack.c.b16 %v4836, %v4834
        %v4855 = vpack.c.b16 %v4837, %v4835
        %v4856 = vpack.c.b16 %v4840, %v4838
        %v4857 = vpack.c.b16 %v4841, %v4839
        %4874 = vmatprep.subr.bf16.mxu0 %v4843
        %4875 = vmatpush1.bf16.msra.mxu0 %v4842
        %4876 = vmatprep.subr.bf16.mxu0 %v4845
        %4877 = vmatpush1.bf16.msra.mxu0 %v4844
        %4878 = vmatprep.subr.bf16.mxu0 %v4847
        %4879 = vmatpush1.bf16.msra.mxu0 %v4846
        %4880 = vmatprep.subr.bf16.mxu0 %v4849
        %4881 = vmatpush1.bf16.msra.mxu0 %v4848
        %4882 = vmatprep.subr.bf16.mxu0 %v4851
        %4883 = vmatpush1.bf16.msra.mxu0 %v4850
        %4884 = vmatprep.subr.bf16.mxu0 %v4853
        %4885 = vmatpush1.bf16.msra.mxu0 %v4852
        %4886 = vmatprep.subr.bf16.mxu0 %v4855
        %4887 = vmatpush1.bf16.msra.mxu0 %v4854
        %4888 = vmatprep.subr.bf16.mxu0 %v4857
        %4889 = vmatpush1.bf16.msra.mxu0 %v4856
        %4890 = vmatprep.subr.bf16.mxu0 0
        %4891 = vmatpush1.bf16.msra.mxu0 0
        %4892 = vmatprep.subr.bf16.mxu0 0
        %4893 = vmatpush1.bf16.msra.mxu0 0
        %4894 = vmatprep.subr.bf16.mxu0 0
        %4895 = vmatpush1.bf16.msra.mxu0 0
        %4896 = vmatprep.subr.bf16.mxu0 0
        %4897 = vmatpush1.bf16.msra.mxu0 0
        %4898 = vmatprep.subr.bf16.mxu0 0
        %4899 = vmatpush1.bf16.msra.mxu0 0
        %4900 = vmatprep.subr.bf16.mxu0 0
        %4901 = vmatpush1.bf16.msra.mxu0 0
        %4902 = vmatprep.subr.bf16.mxu0 0
        %4903 = vmatpush1.bf16.msra.mxu0 0
        %4904 = vmatprep.subr.bf16.mxu0 0
        %4905 = vmatpush1.bf16.msra.mxu0 0
        %4906 = vmatprep.mubr.bf16.mxu0 0
        %4907 = vmatmul.mubr.bf16.gmra.mrb[0].mxu0 %v4765
        %v4908 = vpop.f32.mrb[0].mxu0
        %v4909 = vadd.f32 %v4787, %v4908
        %v4910 = vpop.f32.mrb[0].mxu0
        %v4911 = vadd.f32 %v4791, %v4910
        %v4912 = vpop.f32.mrb[0].mxu0
        %v4913 = vadd.f32 %v4787, %v4912
        %v4914 = vpop.f32.mrb[0].mxu0
        %v4915 = vadd.f32 %v4791, %v4914
        %4916 = vdwg.mxu0
        %v4917 = vmax.f32 %v4909, 0.0
        %v4918 = vmax.f32 %v4911, 0.0
        %v4919 = vmax.f32 %v4913, 0.0
        %v4920 = vmax.f32 %v4915, 0.0
        %v4921 = vpack.c.bf16 %v4919, %v4917
        %v4922 = vpack.c.bf16 %v4920, %v4918
        %v4923 = vld [vmem:[#allocation43] sm:$0xf]
        %v4924 = vld [vmem:[#allocation43 + $0x4] sm:$0xf]
        %v4925 = vld [vmem:[#allocation43 + $0x8] sm:$0xf]
        %v4926 = vld [vmem:[#allocation43 + $0xc] sm:$0xf]
        %v4927 = vld [vmem:[#allocation43 + $0x10] sm:$0xf]
        %v4928 = vld [vmem:[#allocation43 + $0x14] sm:$0xf]
        %v4929 = vld [vmem:[#allocation43 + $0x18] sm:$0xf]
        %v4930 = vld [vmem:[#allocation43 + $0x1c] sm:$0xf]
        %v4931 = vld [vmem:[#allocation43 + $0x20] sm:$0xf]
        %v4932 = vld [vmem:[#allocation43 + $0x24] sm:$0xf]
        %v4933 = vld [vmem:[#allocation43 + $0x28] sm:$0xf]
        %v4934 = vld [vmem:[#allocation43 + $0x2c] sm:$0xf]
        %v4935 = vld [vmem:[#allocation43 + $0x30] sm:$0xf]
        %v4936 = vld [vmem:[#allocation43 + $0x34] sm:$0xf]
        %v4937 = vld [vmem:[#allocation43 + $0x38] sm:$0xf]
        %v4938 = vld [vmem:[#allocation43 + $0x3c] sm:$0xf]
        %v4939 = vld [vmem:[#allocation43 + $0x40] sm:$0xf]
        %v4940 = vld [vmem:[#allocation43 + $0x44] sm:$0xf]
        %v4941 = vld [vmem:[#allocation43 + $0x48] sm:$0xf]
        %v4942 = vld [vmem:[#allocation43 + $0x4c] sm:$0xf]
        %v4943 = vld [vmem:[#allocation43 + $0x50] sm:$0xf]
        %v4944 = vld [vmem:[#allocation43 + $0x54] sm:$0xf]
        %v4945 = vld [vmem:[#allocation43 + $0x58] sm:$0xf]
        %v4946 = vld [vmem:[#allocation43 + $0x5c] sm:$0xf]
        %v4947 = vld [vmem:[#allocation43 + $0x60] sm:$0xf]
        %v4948 = vld [vmem:[#allocation43 + $0x64] sm:$0xf]
        %v4949 = vld [vmem:[#allocation43 + $0x68] sm:$0xf]
        %v4950 = vld [vmem:[#allocation43 + $0x6c] sm:$0xf]
        %v4951 = vld [vmem:[#allocation43 + $0x70] sm:$0xf]
        %v4952 = vld [vmem:[#allocation43 + $0x74] sm:$0xf]
        %v4953 = vld [vmem:[#allocation43 + $0x78] sm:$0xf]
        %v4954 = vld [vmem:[#allocation43 + $0x7c] sm:$0xf]
        %v4987 = vunpack.c.l.b16 %v4923
        %v4988 = vunpack.c.l.b16 %v4924
        %v4989 = vunpack.c.l.b16 %v4925
        %v4990 = vunpack.c.l.b16 %v4926
        %v4991 = vunpack.c.l.b16 %v4927
        %v4992 = vunpack.c.l.b16 %v4928
        %v4993 = vunpack.c.l.b16 %v4929
        %v4994 = vunpack.c.l.b16 %v4930
        %v4995 = vunpack.c.l.b16 %v4931
        %v4996 = vunpack.c.l.b16 %v4932
        %v4997 = vunpack.c.l.b16 %v4933
        %v4998 = vunpack.c.l.b16 %v4934
        %v4999 = vunpack.c.l.b16 %v4935
        %v5000 = vunpack.c.l.b16 %v4936
        %v5001 = vunpack.c.l.b16 %v4937
        %v5002 = vunpack.c.l.b16 %v4938
        %v5003 = vunpack.c.l.b16 %v4939
        %v5004 = vunpack.c.l.b16 %v4940
        %v5005 = vunpack.c.l.b16 %v4941
        %v5006 = vunpack.c.l.b16 %v4942
        %v5007 = vunpack.c.l.b16 %v4943
        %v5008 = vunpack.c.l.b16 %v4944
        %v5009 = vunpack.c.l.b16 %v4945
        %v5010 = vunpack.c.l.b16 %v4946
        %v5011 = vunpack.c.l.b16 %v4947
        %v5012 = vunpack.c.l.b16 %v4948
        %v5013 = vunpack.c.l.b16 %v4949
        %v5014 = vunpack.c.l.b16 %v4950
        %v5015 = vunpack.c.l.b16 %v4951
        %v5016 = vunpack.c.l.b16 %v4952
        %v5017 = vunpack.c.l.b16 %v4953
        %v5018 = vunpack.c.l.b16 %v4954
        %v5019 = vpack.c.b16 %v4988, %v4987
        %v5020 = vpack.c.b16 %v4990, %v4989
        %v5021 = vpack.c.b16 %v4992, %v4991
        %v5022 = vpack.c.b16 %v4994, %v4993
        %v5023 = vpack.c.b16 %v4996, %v4995
        %v5024 = vpack.c.b16 %v4998, %v4997
        %v5025 = vpack.c.b16 %v5000, %v4999
        %v5026 = vpack.c.b16 %v5002, %v5001
        %v5027 = vpack.c.b16 %v5004, %v5003
        %v5028 = vpack.c.b16 %v5006, %v5005
        %v5029 = vpack.c.b16 %v5008, %v5007
        %v5030 = vpack.c.b16 %v5010, %v5009
        %v5031 = vpack.c.b16 %v5012, %v5011
        %v5032 = vpack.c.b16 %v5014, %v5013
        %v5033 = vpack.c.b16 %v5016, %v5015
        %v5034 = vpack.c.b16 %v5018, %v5017
        %5051 = vmatprep.subr.bf16.mxu0 0
        %5052 = vmatpush1.bf16.msra.mxu0 %v5019
        %5053 = vmatprep.subr.bf16.mxu0 0
        %5054 = vmatpush1.bf16.msra.mxu0 %v5020
        %5055 = vmatprep.subr.bf16.mxu0 0
        %5056 = vmatpush1.bf16.msra.mxu0 %v5021
        %5057 = vmatprep.subr.bf16.mxu0 0
        %5058 = vmatpush1.bf16.msra.mxu0 %v5022
        %5059 = vmatprep.subr.bf16.mxu0 0
        %5060 = vmatpush1.bf16.msra.mxu0 %v5023
        %5061 = vmatprep.subr.bf16.mxu0 0
        %5062 = vmatpush1.bf16.msra.mxu0 %v5024
        %5063 = vmatprep.subr.bf16.mxu0 0
        %5064 = vmatpush1.bf16.msra.mxu0 %v5025
        %5065 = vmatprep.subr.bf16.mxu0 0
        %5066 = vmatpush1.bf16.msra.mxu0 %v5026
        %5067 = vmatprep.subr.bf16.mxu0 0
        %5068 = vmatpush1.bf16.msra.mxu0 %v5027
        %5069 = vmatprep.subr.bf16.mxu0 0
        %5070 = vmatpush1.bf16.msra.mxu0 %v5028
        %5071 = vmatprep.subr.bf16.mxu0 0
        %5072 = vmatpush1.bf16.msra.mxu0 %v5029
        %5073 = vmatprep.subr.bf16.mxu0 0
        %5074 = vmatpush1.bf16.msra.mxu0 %v5030
        %5075 = vmatprep.subr.bf16.mxu0 0
        %5076 = vmatpush1.bf16.msra.mxu0 %v5031
        %5077 = vmatprep.subr.bf16.mxu0 0
        %5078 = vmatpush1.bf16.msra.mxu0 %v5032
        %5079 = vmatprep.subr.bf16.mxu0 0
        %5080 = vmatpush1.bf16.msra.mxu0 %v5033
        %5081 = vmatprep.subr.bf16.mxu0 0
        %5082 = vmatpush1.bf16.msra.mxu0 %v5034
        %5083 = vmatprep.mubr.bf16.mxu0 %v4922
        %5084 = vmatmul.mubr.bf16.gmra.mrb[0].mxu0 %v4921
        %v5085 = vpop.f32.mrb[0].mxu0
        %v5086 = vadd.f32 0.0, %v5085
        %v5087 = vpop.f32.mrb[0].mxu0
        %v5088 = vpop.f32.mrb[0].mxu0
        %v5089 = vadd.f32 0.0, %v5088
        %v5090 = vpop.f32.mrb[0].mxu0
        %5091 = vdwg.mxu0
        %v5092 = vadd.f32 %v4763, %v5086
        %v5093 = vadd.f32 %v4764, %v5089
        %v5094 = vld [vmem:[#allocation44] sm:$0x1]
        %v5096 = vlaneseq
        %v5097 = vshrl.u32 %v5096, 7
        %v5098 = vsub.s32 0, %v5097
        %v5099 = vrot.slane %v5094, %v5098
        %v5101 = vadd.f32 %v5092, %v5099
        %v5102 = vadd.f32 %v5093, %v5099
        %v5103 = vld [vmem:[#allocation46] sm:$0x1]
        %v5104 = vld [vmem:[#allocation47] sm:$0x1]
        %5105 = vadd.xlane.f32.xlu0 %v5101
        %v5106 = vpop.xlane.xlu0 %5105
        %5107 = vadd.xlane.f32.xlu0 %v5102
        %v5108 = vpop.xlane.xlu0 %5107
        %v5109 = vmul.f32 %v5106, %v3072
        %v5110 = vmul.f32 %v5108, %v3072
        %v5111 = vsub.f32 %v5101, %v5109
        %v5112 = vsub.f32 %v5102, %v5110
        %v5113 = vmul.f32 %v5111, %v5111
        %v5114 = vmul.f32 %v5112, %v5112
        %5115 = vadd.xlane.f32.xlu0 %v5113
        %v5116 = vpop.xlane.xlu0 %5115
        %5117 = vadd.xlane.f32.xlu0 %v5114
        %v5118 = vpop.xlane.xlu0 %5117
        %v5119 = vmul.f32 %v5116, %v3072
        %v5120 = vmul.f32 %v5118, %v3072
        %v5121 = vadd.f32 %v5119, 1e-05
        %v5122 = vadd.f32 %v5120, 1e-05
        %v5123 = vrsqrt.pop %v5121
        %v5124 = vrsqrt.pop %v5122
        %v5125 = vmul.f32 %v5111, %v5123
        %v5126 = vmul.f32 %v5112, %v5124
        %v5128 = vlaneseq
        %v5129 = vshrl.u32 %v5128, 7
        %v5130 = vsub.s32 0, %v5129
        %v5131 = vrot.slane %v5103, %v5130
        %v5133 = vmul.f32 %v5125, %v5131
        %v5134 = vmul.f32 %v5126, %v5131
        %v5136 = vlaneseq
        %v5137 = vshrl.u32 %v5136, 7
        %v5138 = vsub.s32 0, %v5137
        %v5139 = vrot.slane %v5104, %v5138
        %v5141 = vadd.f32 %v5133, %v5139
        %v5142 = vadd.f32 %v5134, %v5139
        %v5143 = vpack.c.bf16 %v5142, %v5141
        %v5145 = vunpack.c.l.b16 %v5143
        %v5146 = vunpack.c.h.b16 %v5143
        %v5147 = vpack.c.b16 %v5145, %v5145
        %v5148 = vpack.c.b16 %v5146, %v5146
        %5151 = vst [vmem:[%s1523] sm:$0xf] %v5147
        %5152 = vst [vmem:[%s1523 + $0x4] sm:$0xf] %v5148
        %v5153 = vld [vmem:[#allocation49] sm:$0x1]
        %v5154 = vld [vmem:[#allocation50] sm:$0x1]
        %5155 = vadd.xlane.f32.xlu0 %v5141
        %v5156 = vpop.xlane.xlu0 %5155
        %5157 = vadd.xlane.f32.xlu0 %v5142
        %v5158 = vpop.xlane.xlu0 %5157
        %v5159 = vmul.f32 %v5156, %v3072
        %v5160 = vmul.f32 %v5158, %v3072
        %v5161 = vsub.f32 %v5141, %v5159
        %v5162 = vsub.f32 %v5142, %v5160
        %v5163 = vmul.f32 %v5161, %v5161
        %v5164 = vmul.f32 %v5162, %v5162
        %5165 = vadd.xlane.f32.xlu0 %v5163
        %v5166 = vpop.xlane.xlu0 %5165
        %5167 = vadd.xlane.f32.xlu0 %v5164
        %v5168 = vpop.xlane.xlu0 %5167
        %v5169 = vmul.f32 %v5166, %v3072
        %v5170 = vmul.f32 %v5168, %v3072
        %v5171 = vadd.f32 %v5169, 1e-05
        %v5172 = vadd.f32 %v5170, 1e-05
        %v5173 = vrsqrt.pop %v5171
        %v5174 = vrsqrt.pop %v5172
        %v5175 = vmul.f32 %v5161, %v5173
        %v5176 = vmul.f32 %v5162, %v5174
        %v5178 = vlaneseq
        %v5179 = vshrl.u32 %v5178, 7
        %v5180 = vsub.s32 0, %v5179
        %v5181 = vrot.slane %v5153, %v5180
        %v5183 = vmul.f32 %v5175, %v5181
        %v5184 = vmul.f32 %v5176, %v5181
        %v5186 = vlaneseq
        %v5187 = vshrl.u32 %v5186, 7
        %v5188 = vsub.s32 0, %v5187
        %v5189 = vrot.slane %v5154, %v5188
        %v5191 = vadd.f32 %v5183, %v5189
        %v5192 = vadd.f32 %v5184, %v5189
        %5193 = vst [vmem:[%s1530] sm:$0xff] %v5191
        %5194 = vst [vmem:[%s1530 + $0x8] sm:$0xff] %v5192
        %s5195 = sand.u32 %s808, 1
        %s5196 = scalar_lea.sflag [#allocation4], %s5195
        %s5197 = sand.u32 %s808, 1
        %s5198 = smul.addr %s5197, 8
        %s5199 = scalar_lea.vmem [#allocation52], %s5198
        %s5200 = sand.u32 %s834, 1
        %s5201 = scalar_lea.sflag [#allocation54], %s5200
        %s5202 = sand.u32 %s834, 1
        %s5203 = smul.addr %s5202, 16
        %s5204 = scalar_lea.vmem [#allocation53], %s5203
        // Predicated region
        $region277: #{run.2} parent=147 // pred_check
          %p5205 = pneg %p818
        $region278: #{run.2} parent=147 // pred_check_branch
          %5207 = sbr.rel (%p5205) target = $region280
        $region279: #{run.2} parent=147 // pred_region
          %s5208 = smul.u32 2, %s108
          %s5210 = ssub.s32 128, 128
          %5211 = vsyncadd %s5196, %s5210
          %s5212 = smul.addr %s5208, 64
          %s5213 = scalar_lea.hbm %s65, %s5212
          %s5214 = sshll.u32 %s5199, 4
          %s5215 = int_to_ptr.vmem [resolvable:$true] %s5214
          %5220 = dma.vmem_to_hbm [thread:$0]  %s5215, 128, %s5213, %s5196, 64, 64, 4
        $region280: #{run.2} parent=147 // pred_fallthru
          _
        // Predicated region
        $region281: #{run.2} parent=147 // pred_check
          %p5221 = pneg %p844
        $region282: #{run.2} parent=147 // pred_check_branch
          %5223 = sbr.rel (%p5221) target = $region284
        $region283: #{run.2} parent=147 // pred_region
          %s5224 = smul.u32 2, %s108
          %s5226 = ssub.s32 256, 256
          %5227 = vsyncadd %s5201, %s5226
          %s5228 = smul.addr %s5224, 128
          %s5229 = scalar_lea.hbm %s67, %s5228
          %s5230 = sshll.u32 %s5204, 4
          %s5231 = int_to_ptr.vmem [resolvable:$true] %s5230
          %5236 = dma.vmem_to_hbm [thread:$0]  %s5231, 256, %s5229, %s5201, 128, 128, 8
        $region284: #{run.2} parent=147 // pred_fallthru
          _
      $region148: #{run.2} parent=5 // pred_fallthru
        _
      %p5237 = scmp.le.s32.totalorder 2, %s103
      // Predicated region
      $region285: #{run.2} parent=5 // pred_check
        %p5238 = pneg %p5237
      $region286: #{run.2} parent=5 // pred_check_branch
        %5240 = sbr.rel (%p5238) target = $region288
      $region287: #{run.2} parent=5 // pred_region
        %s5241 = ssub.s32 %s103, 2
        // Predicated region
        $region289: #{run.2} parent=287 // pred_check
          %p5242 = pneg %p824
        $region290: #{run.2} parent=287 // pred_check_branch
          %5244 = sbr.rel (%p5242) target = $region292
        $region291: #{run.2} parent=287 // pred_region
          %s5245 = sand.u32 %s809, 1
          %s5246 = scalar_lea.sflag [#allocation4], %s5245
          %s5247 = sand.u32 %s809, 1
          %s5248 = smul.addr %s5247, 8
          %s5249 = scalar_lea.vmem [#allocation52], %s5248
          %5250 = dma.done %s5246, 128
        $region292: #{run.2} parent=287 // pred_fallthru
          _
        // Predicated region
        $region293: #{run.2} parent=287 // pred_check
          %p5251 = pneg %p850
        $region294: #{run.2} parent=287 // pred_check_branch
          %5253 = sbr.rel (%p5251) target = $region296
        $region295: #{run.2} parent=287 // pred_region
          %s5254 = sand.u32 %s835, 1
          %s5255 = scalar_lea.sflag [#allocation54], %s5254
          %s5256 = sand.u32 %s835, 1
          %s5257 = smul.addr %s5256, 16
          %s5258 = scalar_lea.vmem [#allocation53], %s5257
          %5259 = dma.done %s5255, 256
        $region296: #{run.2} parent=287 // pred_fallthru
          _
      $region288: #{run.2} parent=5 // pred_fallthru
        _
    $region6: #{run.2} parent=1 // loop_footer
      %s107 = sadd.s32 1, %s103
    $region7: #{run.2} parent=1 // loop_footer_branch
      %102 = sbr.rel target = $region3
    $region8: #{run.2} parent=1 // loop_exit
      _
    %5260 = vsyncpa [#allocation3], 1
    %s5261 = scalar_lea.sflag [#allocation3], 1
    %5262 = vsyncpa %s5261, 1
    %5263 = vsyncpa [#allocation6], 1
    %s5264 = scalar_lea.sflag [#allocation6], 1
    %5265 = vsyncpa %s5264, 1
    %5266 = vsyncpa [#allocation9], 1
    %s5267 = scalar_lea.sflag [#allocation9], 1
    %5268 = vsyncpa %s5267, 1
    %5269 = vsyncpa [#allocation12], 1
    %5270 = vsyncpa [#allocation15], 1
    %5271 = vsyncpa [#allocation18], 1
    %5272 = vsyncpa [#allocation21], 1
    %5273 = vsyncpa [#allocation24], 1
    %5274 = vsyncpa [#allocation27], 1
    %5275 = vsyncpa [#allocation30], 1
    %5276 = vsyncpa [#allocation33], 1
    %5277 = vsyncpa [#allocation36], 1
    %5278 = vsyncpa [#allocation39], 1
    %5279 = vsyncpa [#allocation42], 1
    %5280 = vsyncpa [#allocation45], 1
    %5281 = vsyncpa [#allocation48], 1
    %5282 = vsyncpa [#allocation51], 1
    %5283 = vsyncpa [#allocation4], 1
    %s5284 = scalar_lea.sflag [#allocation4], 1
    %5285 = vsyncpa %s5284, 1
    %5286 = vsyncpa [#allocation54], 1
    %s5287 = scalar_lea.sflag [#allocation54], 1
    %5288 = vsyncpa %s5287, 1

</llo_original>
